<compile_context>
chip_gen: v7x
topology: tpu7x:2x2x1
jax: 0.10.0
libtpu: 0.0.40
codegen_flags: <defaults>
</compile_context>

<pallas_src>
import functools
import math

import jax
import jax.numpy as jnp
from jax import lax
from jax.experimental import pallas as pl
from jax.experimental.pallas import tpu as pltpu


# Below this many input bytes the fused XLA einsum+add+transpose fallback wins
# (per-call overhead dominates).  The Pallas path no longer has pad/transpose/
# slice wrapper passes, so the crossover is far lower than before; this value
# should be re-measured on hardware.
_PALLAS_MIN_BYTES = 32 * 1024


def _pick_tile_t(t, cin, gin, *, max_tile=1024, budget_bytes=8 * 1024 * 1024):
    """Pick the T tile (rows per grid step).

    - T small enough -> one whole-T block (block dim == array dim is legal).
    - else the largest multiple-of-128 tile within the double-buffered VMEM
      budget, preferring one that divides T (no masked tail); if none divides,
      the grid uses pl.cdiv and the last block is masked by Pallas.
    """
    per_row = 4 * (2 * cin + gin)                       # x + out + g bytes per T row (f32)
    max_rows = max(128, (budget_bytes // (2 * per_row)) // 128 * 128)
    cap = min(max_tile, max_rows)
    if t <= cap:
        return t
    for cand in range(cap, 127, -128):
        if t % cand == 0:
            return cand
    return cap


def _cond_add_transpose_kernel(x_ref, g_ref, wt_ref, eye_ref, b_ref, o_ref, *,
                               use_bf16_matmul):
    # x_ref:  (1, Cin, tt)   g_ref:   (1, Gin, tt)
    # wt_ref: (Gin, Cin)     eye_ref: (Cin, Cin)     b_ref: (1, Cin)
    # o_ref:  (1, tt, Cin)
    g = g_ref[0]                        # (Gin, tt), lane-dense on T
    wt = wt_ref[...]                    # (Gin, Cin), resident across the grid
    if use_bf16_matmul:
        g = g.astype(jnp.bfloat16)
        wt = wt.astype(jnp.bfloat16)
    # MXU #1: cond^T = g^T @ W^T, emitted directly in the (tt, Cin) output
    # layout (LHS fed K-major / contracted on dim 0); f32 accumulation.
    cond_t = lax.dot_general(
        g, wt, dimension_numbers=(((0,), (0,)), ((), ())),
        preferred_element_type=jnp.float32)                         # (tt, Cin)
    # MXU #2: x^T via an identity matmul -- the residual's layout change rides
    # the otherwise-idle MXU (no XLU transpose, no wrapper HBM pass).  Always
    # f32 so the residual stays (near-)exact even in bf16-matmul mode.
    x_t = lax.dot_general(
        x_ref[0].astype(jnp.float32), eye_ref[...],
        dimension_numbers=(((0,), (0,)), ((), ())),
        preferred_element_type=jnp.float32)                         # (tt, Cin)
    o_ref[0] = (x_t + cond_t + b_ref[...]).astype(o_ref.dtype)


def cond_add_transpose(x, g, w, b, *, use_bf16_matmul=False, tile_t=None,
                       core_parallel=False):
    """((x + Conv1d_1x1(g; w, b)).transpose(1, 2)) as one fused Pallas kernel.

    x: (B, Cin, T)  g: (B, Gin, T)  w: (Cin, Gin)  b: (Cin,)  ->  (B, T, Cin)
    Inputs may be f32 or bf16 (bf16 inputs halve DMA bytes); compute is f32 and
    the output dtype follows x.
    """
    B, Cin, T = x.shape
    Gin = g.shape[1]
    assert w.shape == (Cin, Gin) and b.shape == (Cin,)

    tt = tile_t if tile_t is not None else _pick_tile_t(T, Cin, Gin)
    grid_t = pl.cdiv(T, tt)

    # Tiny one-off parameter reshapes (no per-token HBM passes).
    wt = jnp.transpose(w, (1, 0)).astype(jnp.float32)    # (Gin, Cin): K-major RHS
    eye = jnp.eye(Cin, dtype=jnp.float32)                # (Cin, Cin): x^T via MXU
    b2 = b.reshape(1, Cin).astype(jnp.float32)

    if core_parallel:
        # Explicit TensorCore split of the batch axis (v7x: 2 TCs per chip).
        dims = (pltpu.CORE_PARALLEL, pltpu.PARALLEL)
    else:
        dims = ("parallel", "parallel")

    kernel = functools.partial(_cond_add_transpose_kernel,
                               use_bf16_matmul=use_bf16_matmul)

    return pl.pallas_call(
        kernel,
        out_shape=jax.ShapeDtypeStruct((B, T, Cin), x.dtype),
        grid_spec=pltpu.PrefetchScalarGridSpec(
            num_scalar_prefetch=0,
            grid=(B, grid_t),
            in_specs=[
                pl.BlockSpec((1, Cin, tt), lambda bi, ti: (bi, 0, ti)),  # x, native NCT
                pl.BlockSpec((1, Gin, tt), lambda bi, ti: (bi, 0, ti)),  # g, native NCT
                pl.BlockSpec((Gin, Cin), lambda bi, ti: (0, 0)),         # W^T resident
                pl.BlockSpec((Cin, Cin), lambda bi, ti: (0, 0)),         # I resident
                pl.BlockSpec((1, Cin), lambda bi, ti: (0, 0)),           # bias resident
            ],
            out_specs=pl.BlockSpec((1, tt, Cin), lambda bi, ti: (bi, ti, 0)),
        ),
        compiler_params=pltpu.CompilerParams(
            dimension_semantics=dims,
            vmem_limit_bytes=32 * 1024 * 1024,
        ),
    )(x, g, wt, eye, b2)


def _cond_add_transpose_ref(x, g, w, b):
    """Pure-XLA reference (also the tiny-shape fallback path)."""
    cond = jnp.einsum("ck,bkt->bct", w, g,
                      precision=lax.Precision.HIGHEST) + b[None, :, None]
    return jnp.transpose(x + cond, (0, 2, 1))


class DiffusionWrapperPallas:
    """JAX/Pallas port of DiffusionWrapper (the defined part of its forward)."""

    def __init__(self, out_channels, in_channels, gin_channels, key):
        del out_channels  # only used inside GaussianDiffusion (not provided)
        kw, kb = jax.random.split(key)
        # nn.Conv1d(gin_channels, in_channels, 1): weight (in, gin, 1), bias (in,)
        bound = 1.0 / math.sqrt(gin_channels)
        self.w = jax.random.uniform(kw, (in_channels, gin_channels, 1),
                                    jnp.float32, -bound, bound)
        self.b = jax.random.uniform(kb, (in_channels,), jnp.float32, -bound, bound)

    def forward(self, x, y, mask, g):
        w2d = self.w[:, :, 0]
        # cond = self.cond(g.detach());  (x + cond).transpose(1, 2)
        nbytes = (x.size + g.size) * x.dtype.itemsize
        if nbytes >= _PALLAS_MIN_BYTES:
            x_cond_t = cond_add_transpose(x, g, w2d, self.b)        # Pallas kernel
        else:
            x_cond_t = _cond_add_transpose_ref(x, g, w2d, self.b)   # launch overhead dominates
        # y.transpose(1, 2) and ~mask.transpose(1, 2).bool()          [pure glue]
        y_t = jnp.transpose(y, (0, 2, 1))                             # (B, T, Cout)
        nonpad = jnp.logical_not(jnp.transpose(mask, (0, 2, 1)).astype(bool))
        # TODO(synk): GaussianDiffusion (the denoiser/loss producing loss_noise) is not
        # defined in the provided source, so its semantics cannot be reproduced here;
        # we return the exact tensors that would be fed to it instead.
        return x_cond_t, y_t, nonpad


if __name__ == "__main__":
    B, T = 2, 1024
    in_channels, out_channels, gin_channels = 16, 8, 32

    key = jax.random.PRNGKey(0)
    k_param, k_x, k_y, k_g, k_m = jax.random.split(key, 5)

    model = DiffusionWrapperPallas(out_channels, in_channels, gin_channels, k_param)

    x = jax.random.normal(k_x, (B, in_channels, T), jnp.float32)     # (B, Cin, T)
    y = jax.random.normal(k_y, (B, out_channels, T), jnp.float32)    # (B, Cout, T)
    g = jax.random.normal(k_g, (B, gin_channels, T), jnp.float32)    # (B, Gin, T)
    mask = (jax.random.uniform(k_m, (B, 1, T)) > 0.2).astype(jnp.float32)

    x_cond_t, y_t, nonpad = model.forward(x, y, mask, g)
    jax.block_until_ready((x_cond_t, y_t, nonpad))

    w2d = model.w[:, :, 0]
    ref = _cond_add_transpose_ref(x, g, w2d, model.b)
    assert x_cond_t.shape == (B, T, in_channels)
    assert y_t.shape == (B, T, out_channels)
    assert nonpad.shape == (B, T, 1) and nonpad.dtype == jnp.bool_
    # default path: f32 MXU operands -> near-f32 numerics
    assert jnp.allclose(x_cond_t, ref, atol=5e-4, rtol=5e-4)

    # optional bf16-MXU path of the same kernel: loose tolerance on the cond term
    out_bf16 = cond_add_transpose(x, g, w2d, model.b, use_bf16_matmul=True)
    jax.block_until_ready(out_bf16)
    assert jnp.allclose(out_bf16, ref, atol=2e-2, rtol=2e-2)

    # non-divisible T larger than the tile: exercises the pl.cdiv grid with a
    # masked tail block (replaces the old whole-T fallback / VMEM assert).
    T2 = 1400
    k_x2, k_g2 = jax.random.split(jax.random.PRNGKey(1))
    x2 = jax.random.normal(k_x2, (B, in_channels, T2), jnp.float32)
    g2 = jax.random.normal(k_g2, (B, gin_channels, T2), jnp.float32)
    out2 = cond_add_transpose(x2, g2, w2d, model.b)
    jax.block_until_ready(out2)
    ref2 = _cond_add_transpose_ref(x2, g2, w2d, model.b)
    assert out2.shape == (B, T2, in_channels)
    assert jnp.allclose(out2, ref2, atol=5e-4, rtol=5e-4)

    print("KERNEL_OK")
</pallas_src>

<mosaic_0001>
module attributes {stable_mosaic.version = 11 : i64} {
  func.func @_cond_add_transpose_kernel(%arg0: i32, %arg1: i32, %arg2: memref<1x16x1024xf32, #tpu.memory_space<vmem>>, %arg3: memref<1x32x1024xf32, #tpu.memory_space<vmem>>, %arg4: memref<32x16xf32, #tpu.memory_space<vmem>>, %arg5: memref<16x16xf32, #tpu.memory_space<vmem>>, %arg6: memref<1x16xf32, #tpu.memory_space<vmem>>, %arg7: memref<1x1024x16xf32, #tpu.memory_space<vmem>>) attributes {dimension_semantics = [#tpu.dimension_semantics<parallel>, #tpu.dimension_semantics<parallel>], iteration_bounds = array<i64: 2, 1>, scalar_prefetch = 0 : i64, scratch_operands = 0 : i64, tpu.core_type = #tpu.core_type<tc>, window_params = [{transform_indices = @transform_0, window_bounds = array<i64: 1, 16, 1024>}, {transform_indices = @transform_1, window_bounds = array<i64: 1, 32, 1024>}, {pipeline_mode = #tpu.pipeline_mode<synchronous>, transform_indices = @transform_2, window_bounds = array<i64: 32, 16>}, {pipeline_mode = #tpu.pipeline_mode<synchronous>, transform_indices = @transform_3, window_bounds = array<i64: 16, 16>}, {pipeline_mode = #tpu.pipeline_mode<synchronous>, transform_indices = @transform_4, window_bounds = array<i64: 1, 16>}, {transform_indices = @transform_5, window_bounds = array<i64: 1, 1024, 16>}]} {
    %c0 = arith.constant 0 : index
    %c0_0 = arith.constant 0 : index
    %c0_1 = arith.constant 0 : index
    %0 = vector.load %arg3[%c0, %c0_0, %c0_1] : memref<1x32x1024xf32, #tpu.memory_space<vmem>>, vector<1x32x1024xf32>
    %1 = vector.shape_cast %0 : vector<1x32x1024xf32> to vector<32x1024xf32>
    %c0_2 = arith.constant 0 : index
    %c0_3 = arith.constant 0 : index
    %2 = vector.load %arg4[%c0_2, %c0_3] : memref<32x16xf32, #tpu.memory_space<vmem>>, vector<32x16xf32>
    %cst = arith.constant dense<0.000000e+00> : vector<1024x16xf32>
    %3 = tpu.matmul %1, %2, %cst {dimension_numbers = #tpu.dot_dimension_numbers<[0], [0], [1], [1], [0, 1, 1, 1], [], []>} : vector<32x1024xf32>, vector<32x16xf32>, vector<1024x16xf32> -> vector<1024x16xf32>
    %c0_4 = arith.constant 0 : index
    %c0_5 = arith.constant 0 : index
    %c0_6 = arith.constant 0 : index
    %4 = vector.load %arg2[%c0_4, %c0_5, %c0_6] : memref<1x16x1024xf32, #tpu.memory_space<vmem>>, vector<1x16x1024xf32>
    %5 = vector.shape_cast %4 : vector<1x16x1024xf32> to vector<16x1024xf32>
    %c0_7 = arith.constant 0 : index
    %c0_8 = arith.constant 0 : index
    %6 = vector.load %arg5[%c0_7, %c0_8] : memref<16x16xf32, #tpu.memory_space<vmem>>, vector<16x16xf32>
    %cst_9 = arith.constant dense<0.000000e+00> : vector<1024x16xf32>
    %7 = tpu.matmul %5, %6, %cst_9 {dimension_numbers = #tpu.dot_dimension_numbers<[0], [0], [1], [1], [0, 1, 1, 1], [], []>} : vector<16x1024xf32>, vector<16x16xf32>, vector<1024x16xf32> -> vector<1024x16xf32>
    %8 = arith.addf %7, %3 : vector<1024x16xf32>
    %c0_10 = arith.constant 0 : index
    %c0_11 = arith.constant 0 : index
    %9 = vector.load %arg6[%c0_10, %c0_11] : memref<1x16xf32, #tpu.memory_space<vmem>>, vector<1x16xf32>
    %10 = vector.broadcast %9 : vector<1x16xf32> to vector<1024x16xf32>
    %11 = arith.addf %8, %10 : vector<1024x16xf32>
    %c0_12 = arith.constant 0 : index
    %c0_13 = arith.constant 0 : index
    %c0_14 = arith.constant 0 : index
    %12 = vector.load %arg7[%c0_12, %c0_13, %c0_14] : memref<1x1024x16xf32, #tpu.memory_space<vmem>>, vector<1x1024x16xf32>
    %13 = vector.shape_cast %12 : vector<1x1024x16xf32> to vector<1024x16xf32>
    %14 = vector.shape_cast %11 : vector<1024x16xf32> to vector<1x1024x16xf32>
    tpu.vector_store %arg7[%c0_12, %c0_13, %c0_14], %14 {strides = array<i32>} : memref<1x1024x16xf32, #tpu.memory_space<vmem>>, vector<1x1024x16xf32>,
    return
  }
  func.func @transform_0(%arg0: i32, %arg1: i32) -> (i32, i32, i32) {
    %c0_i32 = arith.constant 0 : i32
    %c0_i32_0 = arith.constant 0 : i32
    return %arg0, %c0_i32, %arg1 : i32, i32, i32
  }
  func.func @transform_1(%arg0: i32, %arg1: i32) -> (i32, i32, i32) {
    %c0_i32 = arith.constant 0 : i32
    %c0_i32_0 = arith.constant 0 : i32
    return %arg0, %c0_i32, %arg1 : i32, i32, i32
  }
  func.func @transform_2(%arg0: i32, %arg1: i32) -> (i32, i32) {
    %c0_i32 = arith.constant 0 : i32
    %c0_i32_0 = arith.constant 0 : i32
    %c0_i32_1 = arith.constant 0 : i32
    return %c0_i32, %c0_i32_0 : i32, i32
  }
  func.func @transform_3(%arg0: i32, %arg1: i32) -> (i32, i32) {
    %c0_i32 = arith.constant 0 : i32
    %c0_i32_0 = arith.constant 0 : i32
    %c0_i32_1 = arith.constant 0 : i32
    return %c0_i32, %c0_i32_0 : i32, i32
  }
  func.func @transform_4(%arg0: i32, %arg1: i32) -> (i32, i32) {
    %c0_i32 = arith.constant 0 : i32
    %c0_i32_0 = arith.constant 0 : i32
    %c0_i32_1 = arith.constant 0 : i32
    return %c0_i32, %c0_i32_0 : i32, i32
  }
  func.func @transform_5(%arg0: i32, %arg1: i32) -> (i32, i32, i32) {
    %c0_i32 = arith.constant 0 : i32
    %c0_i32_0 = arith.constant 0 : i32
    return %arg0, %arg1, %c0_i32 : i32, i32, i32
  }
}

</mosaic_0001>

<llo_original>
// kernel: tpu_custom_call.1
$region0: #{tpu_custom_call.1}
  #allocation0 [shape = 'u32[]', space=smem, size = 0x4, offset = 0x4, fixed_abs, tag = 'smem constant byte address 0x4 - core index']
  #allocation1 [shape = 'u32[144,128]{1,0:T(1,128)}', space=vmem, size = 0x12000, scoped, tag = 'internal scratch']
  %s0 = inlined_call_operand.hbm [shape: f32[2,16,1024], index: 0, kind: input, shape index: {}]
  %s1 = inlined_call_operand.hbm [shape: f32[2,32,1024], index: 1, kind: input, shape index: {}]
  %s2 = inlined_call_operand.vmem [shape: f32[32,16], index: 2, kind: input, shape index: {}]
  %s3 = inlined_call_operand.vmem [shape: f32[16,16], index: 3, kind: input, shape index: {}]
  %s4 = inlined_call_operand.vmem [shape: f32[1,16], index: 4, kind: input, shape index: {}]
  %s5 = inlined_call_operand.vmem [shape: f32[2,1024,16], index: 5, kind: output, shape index: {}]
  %s6 = sld [smem:[#allocation0]]
  $region61: #{tpu_custom_call.1} parent=0
    _
  %s8 = ssub.s32 1, %s6
  %s9 = scalar_select 0, %s8, %s6
  $region1: #{tpu_custom_call.1} parent=0
    #allocation2 [shape = 'u8[131072]{0}', space=vmem, size = 0x20000, scoped, tag = 'input window, operand 0']
    #allocation3 [shape = 's32[2]{0}', space=sflag, size = 0x8, scoped, tag = 'scoped memory for tpu_custom_call.1']
    #allocation4 [shape = 'u8[262144]{0}', space=vmem, size = 0x40000, scoped, tag = 'input window, operand 1']
    #allocation5 [shape = 's32[2]{0}', space=sflag, size = 0x8, scoped, tag = 'scoped memory for tpu_custom_call.1']
    %10 = vsyncpa [#allocation3], 0
    %s11 = scalar_lea.sflag [#allocation3], 1
    %12 = vsyncpa %s11, 0
    %13 = vsyncpa [#allocation5], 0
    %s14 = scalar_lea.sflag [#allocation5], 1
    %15 = vsyncpa %s14, 0
    loop: start=0, step=1, limit=4
    $region2: #{tpu_custom_call.1} parent=1 // loop_pre_header
      _
    $region3: #{tpu_custom_call.1} parent=1 // loop_header
      %s17 = sphi 0, %s21
      %p18 = scmp.ge.s32.totalorder %s17, 4
      %s24 = sphi 0, %s36
      %s25 = sphi 0, %s32
      %s26 = sphi 0, %s24
      %s27 = sphi 0, %s25
      %s28 = sphi 0, %s26
      %s29 = sphi 0, %s27
      %s41 = sphi 0, %s43
      %s44 = sphi 0, %s41
      %s45 = sphi 0, %s44
      %s61 = sphi 0, %s45
      %s69 = sphi 0, %s71
      %s72 = sphi 0, %s69
      %s73 = sphi 0, %s72
      %s89 = sphi 0, %s73
      %s93 = sphi 0, %s93
      %s95 = sphi 0, %s93
      %s96 = sphi 0, %s95
      %s110 = sphi 0, %s96
      %s114 = sphi 0, %s114
      %s116 = sphi 0, %s114
      %s117 = sphi 0, %s116
      %s131 = sphi 0, %s117
      %s135 = sphi 0, %s135
      %s137 = sphi 0, %s135
      %s138 = sphi 0, %s137
      %s152 = sphi 0, %s138
      %s160 = sphi 0, %s162
      %s163 = sphi 0, %s160
      %s164 = sphi 0, %s163
      %s180 = sphi 0, %s164
    $region4: #{tpu_custom_call.1} parent=1 // loop_header_branch
      %20 = sbr.rel (%p18) target = $region8
    $region5: #{tpu_custom_call.1} parent=1 // loop_body
      %s22 = ssub.s32 %s17, 1
      %s23 = ssub.s32 %s17, 2
      %s30 = sadd.s32 1, %s25
      %p31 = scmp.ge.s32.totalorder %s30, 1
      %s32 = scalar_select %p31, 0, %s30
      %s33 = sadd.s32 1, %s24
      %s34 = scalar_select %p31, %s33, %s24
      %p35 = scmp.ge.s32.totalorder %s34, 2
      %s36 = scalar_select %p35, 0, %s34
      %s37 = ssub.s32 %s24, %s36
      %s38 = ssub.s32 %s25, %s32
      %s39 = sor.u32 %s37, %s38
      %p40 = scmp.eq.s32.totalorder %s39, 0
      %s42 = sadd.s32 %s41, 1
      %s43 = scalar_select %p40, %s41, %s42
      %p46 = pneg %p40
      %p47 = scmp.eq.s32.totalorder %s17, 1
      %p48 = por %p46, %p47
      %p49 = scmp.ne.s32.totalorder %s41, %s44
      %p50 = scmp.eq.s32.totalorder %s17, 0
      %p51 = por %p49, %p50
      %p52 = scmp.ne.s32.totalorder %s41, %s44
      %p53 = scmp.eq.s32.totalorder %s22, 1
      %p54 = por %p52, %p53
      %p55 = scmp.ne.s32.totalorder %s44, %s45
      %p56 = scmp.eq.s32.totalorder %s22, 0
      %p57 = por %p55, %p56
      %p58 = scmp.ne.s32.totalorder %s44, %s45
      %p59 = scmp.eq.s32.totalorder %s23, 1
      %p60 = por %p58, %p59
      %p62 = scmp.ne.s32.totalorder %s45, %s61
      %p63 = scmp.eq.s32.totalorder %s23, 0
      %p64 = por %p62, %p63
      %s65 = ssub.s32 %s24, %s36
      %s66 = ssub.s32 %s25, %s32
      %s67 = sor.u32 %s65, %s66
      %p68 = scmp.eq.s32.totalorder %s67, 0
      %s70 = sadd.s32 %s69, 1
      %s71 = scalar_select %p68, %s69, %s70
      %p74 = pneg %p68
      %p75 = scmp.eq.s32.totalorder %s17, 1
      %p76 = por %p74, %p75
      %p77 = scmp.ne.s32.totalorder %s69, %s72
      %p78 = scmp.eq.s32.totalorder %s17, 0
      %p79 = por %p77, %p78
      %p80 = scmp.ne.s32.totalorder %s69, %s72
      %p81 = scmp.eq.s32.totalorder %s22, 1
      %p82 = por %p80, %p81
      %p83 = scmp.ne.s32.totalorder %s72, %s73
      %p84 = scmp.eq.s32.totalorder %s22, 0
      %p85 = por %p83, %p84
      %p86 = scmp.ne.s32.totalorder %s72, %s73
      %p87 = scmp.eq.s32.totalorder %s23, 1
      %p88 = por %p86, %p87
      %p90 = scmp.ne.s32.totalorder %s73, %s89
      %p91 = scmp.eq.s32.totalorder %s23, 0
      %p92 = por %p90, %p91
      %s94 = sadd.s32 %s93, 1
      %p97 = scmp.eq.s32.totalorder %s17, 1
      %p98 = scmp.ne.s32.totalorder %s93, %s95
      %p99 = scmp.eq.s32.totalorder %s17, 0
      %p100 = por %p98, %p99
      %p101 = scmp.ne.s32.totalorder %s93, %s95
      %p102 = scmp.eq.s32.totalorder %s22, 1
      %p103 = por %p101, %p102
      %p104 = scmp.ne.s32.totalorder %s95, %s96
      %p105 = scmp.eq.s32.totalorder %s22, 0
      %p106 = por %p104, %p105
      %p107 = scmp.ne.s32.totalorder %s95, %s96
      %p108 = scmp.eq.s32.totalorder %s23, 1
      %p109 = por %p107, %p108
      %p111 = scmp.ne.s32.totalorder %s96, %s110
      %p112 = scmp.eq.s32.totalorder %s23, 0
      %p113 = por %p111, %p112
      %s115 = sadd.s32 %s114, 1
      %p118 = scmp.eq.s32.totalorder %s17, 1
      %p119 = scmp.ne.s32.totalorder %s114, %s116
      %p120 = scmp.eq.s32.totalorder %s17, 0
      %p121 = por %p119, %p120
      %p122 = scmp.ne.s32.totalorder %s114, %s116
      %p123 = scmp.eq.s32.totalorder %s22, 1
      %p124 = por %p122, %p123
      %p125 = scmp.ne.s32.totalorder %s116, %s117
      %p126 = scmp.eq.s32.totalorder %s22, 0
      %p127 = por %p125, %p126
      %p128 = scmp.ne.s32.totalorder %s116, %s117
      %p129 = scmp.eq.s32.totalorder %s23, 1
      %p130 = por %p128, %p129
      %p132 = scmp.ne.s32.totalorder %s117, %s131
      %p133 = scmp.eq.s32.totalorder %s23, 0
      %p134 = por %p132, %p133
      %s136 = sadd.s32 %s135, 1
      %p139 = scmp.eq.s32.totalorder %s17, 1
      %p140 = scmp.ne.s32.totalorder %s135, %s137
      %p141 = scmp.eq.s32.totalorder %s17, 0
      %p142 = por %p140, %p141
      %p143 = scmp.ne.s32.totalorder %s135, %s137
      %p144 = scmp.eq.s32.totalorder %s22, 1
      %p145 = por %p143, %p144
      %p146 = scmp.ne.s32.totalorder %s137, %s138
      %p147 = scmp.eq.s32.totalorder %s22, 0
      %p148 = por %p146, %p147
      %p149 = scmp.ne.s32.totalorder %s137, %s138
      %p150 = scmp.eq.s32.totalorder %s23, 1
      %p151 = por %p149, %p150
      %p153 = scmp.ne.s32.totalorder %s138, %s152
      %p154 = scmp.eq.s32.totalorder %s23, 0
      %p155 = por %p153, %p154
      %s156 = ssub.s32 %s24, %s36
      %s157 = ssub.s32 %s25, %s32
      %s158 = sor.u32 %s156, %s157
      %p159 = scmp.eq.s32.totalorder %s158, 0
      %s161 = sadd.s32 %s160, 1
      %s162 = scalar_select %p159, %s160, %s161
      %p165 = pneg %p159
      %p166 = scmp.eq.s32.totalorder %s17, 1
      %p167 = por %p165, %p166
      %p168 = scmp.ne.s32.totalorder %s160, %s163
      %p169 = scmp.eq.s32.totalorder %s17, 0
      %p170 = por %p168, %p169
      %p171 = scmp.ne.s32.totalorder %s160, %s163
      %p172 = scmp.eq.s32.totalorder %s22, 1
      %p173 = por %p171, %p172
      %p174 = scmp.ne.s32.totalorder %s163, %s164
      %p175 = scmp.eq.s32.totalorder %s22, 0
      %p176 = por %p174, %p175
      %p177 = scmp.ne.s32.totalorder %s163, %s164
      %p178 = scmp.eq.s32.totalorder %s23, 1
      %p179 = por %p177, %p178
      %p181 = scmp.ne.s32.totalorder %s164, %s180
      %p182 = scmp.eq.s32.totalorder %s23, 0
      %p183 = por %p181, %p182
      %p184 = scmp.le.s32.totalorder 1, %s17
      %p185 = scmp.lt.s32.totalorder %s17, 3
      %p186 = pnand %p184, %p185
      %p187 = pneg %p186
      // Predicated region
      $region9: #{tpu_custom_call.1} parent=5 // pred_check
        _
      $region10: #{tpu_custom_call.1} parent=5 // pred_check_branch
        %189 = sbr.rel (%p186) target = $region12
      $region11: #{tpu_custom_call.1} parent=5 // pred_region
        %s190 = ssub.s32 %s17, 1
        // Predicated region
        $region13: #{tpu_custom_call.1} parent=11 // pred_check
          %p191 = pneg %p106
        $region14: #{tpu_custom_call.1} parent=11 // pred_check_branch
          %193 = sbr.rel (%p191) target = $region16
        $region15: #{tpu_custom_call.1} parent=11 // pred_region
          _
        $region16: #{tpu_custom_call.1} parent=11 // pred_fallthru
          _
        // Predicated region
        $region17: #{tpu_custom_call.1} parent=11 // pred_check
          %p194 = pneg %p127
        $region18: #{tpu_custom_call.1} parent=11 // pred_check_branch
          %196 = sbr.rel (%p194) target = $region20
        $region19: #{tpu_custom_call.1} parent=11 // pred_region
          _
        $region20: #{tpu_custom_call.1} parent=11 // pred_fallthru
          _
        // Predicated region
        $region21: #{tpu_custom_call.1} parent=11 // pred_check
          %p197 = pneg %p148
        $region22: #{tpu_custom_call.1} parent=11 // pred_check_branch
          %199 = sbr.rel (%p197) target = $region24
        $region23: #{tpu_custom_call.1} parent=11 // pred_region
          _
        $region24: #{tpu_custom_call.1} parent=11 // pred_fallthru
          _
      $region12: #{tpu_custom_call.1} parent=5 // pred_fallthru
        _
      %p200 = scmp.lt.s32.totalorder %s17, 2
      // Predicated region
      $region25: #{tpu_custom_call.1} parent=5 // pred_check
        %p201 = pneg %p200
      $region26: #{tpu_custom_call.1} parent=5 // pred_check_branch
        %203 = sbr.rel (%p201) target = $region28
      $region27: #{tpu_custom_call.1} parent=5 // pred_region
        // Predicated region
        $region29: #{tpu_custom_call.1} parent=27 // pred_check
          %p204 = pneg %p51
        $region30: #{tpu_custom_call.1} parent=27 // pred_check_branch
          %206 = sbr.rel (%p204) target = $region32
        $region31: #{tpu_custom_call.1} parent=27 // pred_region
          %s207 = sand.u32 %s41, 1
          %s208 = scalar_lea.sflag [#allocation3], %s207
          %s209 = sand.u32 %s41, 1
          %s210 = smul.addr %s209, 128
          %s211 = scalar_lea.vmem [#allocation2], %s210
          %s212 = smul.u32 8, %s25
          %s214 = ssub.s32 2048, 2048
          %215 = vsyncadd %s208, %s214
          %s216 = smul.addr %s24, 16
          %s217 = sadd.s32 %s212, %s216
          %s218 = smul.addr %s217, 128
          %s219 = scalar_lea.hbm %s0, %s218
          %s220 = sshll.u32 %s211, 4
          %s221 = int_to_ptr.vmem [resolvable:$true] %s220
          %226 = dma.hbm_to_vmem [thread:$0]  %s219, 2048, %s221, %s208, 1024, 1024, 64
        $region32: #{tpu_custom_call.1} parent=27 // pred_fallthru
          _
        // Predicated region
        $region33: #{tpu_custom_call.1} parent=27 // pred_check
          %p227 = pneg %p79
        $region34: #{tpu_custom_call.1} parent=27 // pred_check_branch
          %229 = sbr.rel (%p227) target = $region36
        $region35: #{tpu_custom_call.1} parent=27 // pred_region
          %s230 = sand.u32 %s69, 1
          %s231 = scalar_lea.sflag [#allocation5], %s230
          %s232 = sand.u32 %s69, 1
          %s233 = smul.addr %s232, 256
          %s234 = scalar_lea.vmem [#allocation4], %s233
          %s235 = smul.u32 8, %s25
          %s237 = ssub.s32 4096, 4096
          %238 = vsyncadd %s231, %s237
          %s239 = smul.addr %s24, 32
          %s240 = sadd.s32 %s235, %s239
          %s241 = smul.addr %s240, 128
          %s242 = scalar_lea.hbm %s1, %s241
          %s243 = sshll.u32 %s234, 4
          %s244 = int_to_ptr.vmem [resolvable:$true] %s243
          %249 = dma.hbm_to_vmem [thread:$0]  %s242, 4096, %s244, %s231, 1024, 1024, 64
        $region36: #{tpu_custom_call.1} parent=27 // pred_fallthru
          _
      $region28: #{tpu_custom_call.1} parent=5 // pred_fallthru
        _
      %p250 = scmp.le.s32.totalorder 1, %s17
      %p251 = scmp.lt.s32.totalorder %s17, 3
      %p252 = pnand %p250, %p251
      %p253 = pneg %p252
      // Predicated region
      $region37: #{tpu_custom_call.1} parent=5 // pred_check
        _
      $region38: #{tpu_custom_call.1} parent=5 // pred_check_branch
        %255 = sbr.rel (%p252) target = $region40
      $region39: #{tpu_custom_call.1} parent=5 // pred_region
        %s256 = ssub.s32 %s17, 1
        %s257 = sand.u32 %s44, 1
        %s258 = scalar_lea.sflag [#allocation3], %s257
        %s259 = sand.u32 %s44, 1
        %s260 = smul.addr %s259, 128
        %s261 = scalar_lea.vmem [#allocation2], %s260
        // Predicated region
        $region41: #{tpu_custom_call.1} parent=39 // pred_check
          %p262 = pneg %p57
        $region42: #{tpu_custom_call.1} parent=39 // pred_check_branch
          %264 = sbr.rel (%p262) target = $region44
        $region43: #{tpu_custom_call.1} parent=39 // pred_region
          %265 = dma.done %s258, 2048
        $region44: #{tpu_custom_call.1} parent=39 // pred_fallthru
          _
        %s266 = sand.u32 %s72, 1
        %s267 = scalar_lea.sflag [#allocation5], %s266
        %s268 = sand.u32 %s72, 1
        %s269 = smul.addr %s268, 256
        %s270 = scalar_lea.vmem [#allocation4], %s269
        // Predicated region
        $region45: #{tpu_custom_call.1} parent=39 // pred_check
          %p271 = pneg %p85
        $region46: #{tpu_custom_call.1} parent=39 // pred_check_branch
          %273 = sbr.rel (%p271) target = $region48
        $region47: #{tpu_custom_call.1} parent=39 // pred_region
          %274 = dma.done %s267, 4096
        $region48: #{tpu_custom_call.1} parent=39 // pred_fallthru
          _
        %s275 = sand.u32 %s44, 1
        %s276 = scalar_lea.sflag [#allocation3], %s275
        %s277 = sand.u32 %s44, 1
        %s278 = smul.addr %s277, 128
        %s279 = scalar_lea.vmem [#allocation2], %s278
        %p280 = pneg %p57
        %p281 = pneg %p54
        %s282 = sand.u32 %s72, 1
        %s283 = scalar_lea.sflag [#allocation5], %s282
        %s284 = sand.u32 %s72, 1
        %s285 = smul.addr %s284, 256
        %s286 = scalar_lea.vmem [#allocation4], %s285
        %p287 = pneg %p85
        %p288 = pneg %p82
        %p289 = pneg %p106
        %p290 = pneg %p103
        %p291 = pneg %p127
        %p292 = pneg %p124
        %p293 = pneg %p148
        %p294 = pneg %p145
        %p295 = pneg %p176
        %p296 = pneg %p173
        %s297 = smul.u32 128, %s27
        %p298 = scmp.lt.s32.totalorder %s26, 1
        %s299 = scalar_select %p298, %s26, 1
        %p300 = scmp.lt.s32.totalorder %s297, 127
        %s301 = scalar_select %p300, %s297, 127
        %s302 = smul.addr %s299, 128
        %s303 = sadd.s32 %s301, %s302
        %s304 = smul.addr %s303, 8
        %s305 = scalar_lea.vmem %s5, %s304
        %s306 = smul.u32 8, %s27
        %s307 = smul.u32 8, %s27
        %s308 = smul.u32 128, %s27
        %p309 = scmp.lt.s32.totalorder %s26, 1
        %s310 = scalar_select %p309, %s26, 1
        %p311 = scmp.lt.s32.totalorder %s308, 127
        %s312 = scalar_select %p311, %s308, 127
        %s313 = smul.addr %s310, 128
        %s314 = sadd.s32 %s312, %s313
        %s315 = smul.addr %s314, 8
        %s316 = scalar_lea.vmem %s5, %s315
        %s317 = smul.u32 128, %s27
        %v318 = vld [vmem:[%s270] sm:$0xff]
        %v319 = vld [vmem:[%s270 + $0x8] sm:$0xff]
        %v320 = vld [vmem:[%s270 + $0x10] sm:$0xff]
        %v321 = vld [vmem:[%s270 + $0x18] sm:$0xff]
        %v322 = vld [vmem:[%s270 + $0x20] sm:$0xff]
        %v323 = vld [vmem:[%s270 + $0x28] sm:$0xff]
        %v324 = vld [vmem:[%s270 + $0x30] sm:$0xff]
        %v325 = vld [vmem:[%s270 + $0x38] sm:$0xff]
        %v326 = vld [vmem:[%s270 + $0x40] sm:$0xff]
        %v327 = vld [vmem:[%s270 + $0x48] sm:$0xff]
        %v328 = vld [vmem:[%s270 + $0x50] sm:$0xff]
        %v329 = vld [vmem:[%s270 + $0x58] sm:$0xff]
        %v330 = vld [vmem:[%s270 + $0x60] sm:$0xff]
        %v331 = vld [vmem:[%s270 + $0x68] sm:$0xff]
        %v332 = vld [vmem:[%s270 + $0x70] sm:$0xff]
        %v333 = vld [vmem:[%s270 + $0x78] sm:$0xff]
        %v334 = vld [vmem:[%s270 + $0x80] sm:$0xff]
        %v335 = vld [vmem:[%s270 + $0x88] sm:$0xff]
        %v336 = vld [vmem:[%s270 + $0x90] sm:$0xff]
        %v337 = vld [vmem:[%s270 + $0x98] sm:$0xff]
        %v338 = vld [vmem:[%s270 + $0xa0] sm:$0xff]
        %v339 = vld [vmem:[%s270 + $0xa8] sm:$0xff]
        %v340 = vld [vmem:[%s270 + $0xb0] sm:$0xff]
        %v341 = vld [vmem:[%s270 + $0xb8] sm:$0xff]
        %v342 = vld [vmem:[%s270 + $0xc0] sm:$0xff]
        %v343 = vld [vmem:[%s270 + $0xc8] sm:$0xff]
        %v344 = vld [vmem:[%s270 + $0xd0] sm:$0xff]
        %v345 = vld [vmem:[%s270 + $0xd8] sm:$0xff]
        %v346 = vld [vmem:[%s270 + $0xe0] sm:$0xff]
        %v347 = vld [vmem:[%s270 + $0xe8] sm:$0xff]
        %v348 = vld [vmem:[%s270 + $0xf0] sm:$0xff]
        %v349 = vld [vmem:[%s270 + $0xf8] sm:$0xff]
        %v350 = vld [vmem:[%s2] sm:$0xff]
        %v351 = vld [vmem:[%s2 + $0x8] sm:$0xff]
        %v352 = vld [vmem:[%s2 + $0x10] sm:$0xff]
        %v353 = vld [vmem:[%s2 + $0x18] sm:$0xff]
        %354 = vxpose.xlu0.b32.start [1/16] %v318, 128
        %355 = vxpose.xlu0.b32.cont [2/16] %v326, 128
        %356 = vxpose.xlu0.b32.cont [3/16] %v334, 128
        %357 = vxpose.xlu0.b32.cont [4/16] %v342, 128
        %358 = vxpose.xlu0.b32.cont [5/16] 0.0, 128
        %359 = vxpose.xlu0.b32.cont [6/16] 0.0, 128
        %360 = vxpose.xlu0.b32.cont [7/16] 0.0, 128
        %361 = vxpose.xlu0.b32.cont [8/16] 0.0, 128
        %362 = vxpose.xlu0.b32.cont [9/16] 0.0, 128
        %363 = vxpose.xlu0.b32.cont [10/16] 0.0, 128
        %364 = vxpose.xlu0.b32.cont [11/16] 0.0, 128
        %365 = vxpose.xlu0.b32.cont [12/16] 0.0, 128
        %366 = vxpose.xlu0.b32.cont [13/16] 0.0, 128
        %367 = vxpose.xlu0.b32.cont [14/16] 0.0, 128
        %368 = vxpose.xlu0.b32.cont [15/16] 0.0, 128
        %369 = vxpose.xlu0.b32.end [16/16] 0.0, 128
        %v370 = vpop.trf.xlu0
        %v371 = vpop.trf.xlu0
        %v372 = vpop.trf.xlu0
        %v373 = vpop.trf.xlu0
        %v374 = vpop.trf.xlu0
        %v375 = vpop.trf.xlu0
        %v376 = vpop.trf.xlu0
        %v377 = vpop.trf.xlu0
        %v378 = vpop.trf.xlu0
        %v379 = vpop.trf.xlu0
        %v380 = vpop.trf.xlu0
        %v381 = vpop.trf.xlu0
        %v382 = vpop.trf.xlu0
        %v383 = vpop.trf.xlu0
        %v384 = vpop.trf.xlu0
        %v385 = vpop.trf.xlu0
        %386 = vxpose.xlu0.b32.start [1/16] %v319, 128
        %387 = vxpose.xlu0.b32.cont [2/16] %v327, 128
        %388 = vxpose.xlu0.b32.cont [3/16] %v335, 128
        %389 = vxpose.xlu0.b32.cont [4/16] %v343, 128
        %390 = vxpose.xlu0.b32.cont [5/16] 0.0, 128
        %391 = vxpose.xlu0.b32.cont [6/16] 0.0, 128
        %392 = vxpose.xlu0.b32.cont [7/16] 0.0, 128
        %393 = vxpose.xlu0.b32.cont [8/16] 0.0, 128
        %394 = vxpose.xlu0.b32.cont [9/16] 0.0, 128
        %395 = vxpose.xlu0.b32.cont [10/16] 0.0, 128
        %396 = vxpose.xlu0.b32.cont [11/16] 0.0, 128
        %397 = vxpose.xlu0.b32.cont [12/16] 0.0, 128
        %398 = vxpose.xlu0.b32.cont [13/16] 0.0, 128
        %399 = vxpose.xlu0.b32.cont [14/16] 0.0, 128
        %400 = vxpose.xlu0.b32.cont [15/16] 0.0, 128
        %401 = vxpose.xlu0.b32.end [16/16] 0.0, 128
        %v402 = vpop.trf.xlu0
        %v403 = vpop.trf.xlu0
        %v404 = vpop.trf.xlu0
        %v405 = vpop.trf.xlu0
        %v406 = vpop.trf.xlu0
        %v407 = vpop.trf.xlu0
        %v408 = vpop.trf.xlu0
        %v409 = vpop.trf.xlu0
        %v410 = vpop.trf.xlu0
        %v411 = vpop.trf.xlu0
        %v412 = vpop.trf.xlu0
        %v413 = vpop.trf.xlu0
        %v414 = vpop.trf.xlu0
        %v415 = vpop.trf.xlu0
        %v416 = vpop.trf.xlu0
        %v417 = vpop.trf.xlu0
        %418 = vxpose.xlu0.b32.start [1/16] %v320, 128
        %419 = vxpose.xlu0.b32.cont [2/16] %v328, 128
        %420 = vxpose.xlu0.b32.cont [3/16] %v336, 128
        %421 = vxpose.xlu0.b32.cont [4/16] %v344, 128
        %422 = vxpose.xlu0.b32.cont [5/16] 0.0, 128
        %423 = vxpose.xlu0.b32.cont [6/16] 0.0, 128
        %424 = vxpose.xlu0.b32.cont [7/16] 0.0, 128
        %425 = vxpose.xlu0.b32.cont [8/16] 0.0, 128
        %426 = vxpose.xlu0.b32.cont [9/16] 0.0, 128
        %427 = vxpose.xlu0.b32.cont [10/16] 0.0, 128
        %428 = vxpose.xlu0.b32.cont [11/16] 0.0, 128
        %429 = vxpose.xlu0.b32.cont [12/16] 0.0, 128
        %430 = vxpose.xlu0.b32.cont [13/16] 0.0, 128
        %431 = vxpose.xlu0.b32.cont [14/16] 0.0, 128
        %432 = vxpose.xlu0.b32.cont [15/16] 0.0, 128
        %433 = vxpose.xlu0.b32.end [16/16] 0.0, 128
        %v434 = vpop.trf.xlu0
        %v435 = vpop.trf.xlu0
        %v436 = vpop.trf.xlu0
        %v437 = vpop.trf.xlu0
        %v438 = vpop.trf.xlu0
        %v439 = vpop.trf.xlu0
        %v440 = vpop.trf.xlu0
        %v441 = vpop.trf.xlu0
        %v442 = vpop.trf.xlu0
        %v443 = vpop.trf.xlu0
        %v444 = vpop.trf.xlu0
        %v445 = vpop.trf.xlu0
        %v446 = vpop.trf.xlu0
        %v447 = vpop.trf.xlu0
        %v448 = vpop.trf.xlu0
        %v449 = vpop.trf.xlu0
        %450 = vxpose.xlu0.b32.start [1/16] %v321, 128
        %451 = vxpose.xlu0.b32.cont [2/16] %v329, 128
        %452 = vxpose.xlu0.b32.cont [3/16] %v337, 128
        %453 = vxpose.xlu0.b32.cont [4/16] %v345, 128
        %454 = vxpose.xlu0.b32.cont [5/16] 0.0, 128
        %455 = vxpose.xlu0.b32.cont [6/16] 0.0, 128
        %456 = vxpose.xlu0.b32.cont [7/16] 0.0, 128
        %457 = vxpose.xlu0.b32.cont [8/16] 0.0, 128
        %458 = vxpose.xlu0.b32.cont [9/16] 0.0, 128
        %459 = vxpose.xlu0.b32.cont [10/16] 0.0, 128
        %460 = vxpose.xlu0.b32.cont [11/16] 0.0, 128
        %461 = vxpose.xlu0.b32.cont [12/16] 0.0, 128
        %462 = vxpose.xlu0.b32.cont [13/16] 0.0, 128
        %463 = vxpose.xlu0.b32.cont [14/16] 0.0, 128
        %464 = vxpose.xlu0.b32.cont [15/16] 0.0, 128
        %465 = vxpose.xlu0.b32.end [16/16] 0.0, 128
        %v466 = vpop.trf.xlu0
        %v467 = vpop.trf.xlu0
        %v468 = vpop.trf.xlu0
        %v469 = vpop.trf.xlu0
        %v470 = vpop.trf.xlu0
        %v471 = vpop.trf.xlu0
        %v472 = vpop.trf.xlu0
        %v473 = vpop.trf.xlu0
        %v474 = vpop.trf.xlu0
        %v475 = vpop.trf.xlu0
        %v476 = vpop.trf.xlu0
        %v477 = vpop.trf.xlu0
        %v478 = vpop.trf.xlu0
        %v479 = vpop.trf.xlu0
        %v480 = vpop.trf.xlu0
        %v481 = vpop.trf.xlu0
        %482 = vxpose.xlu0.b32.start [1/16] %v322, 128
        %483 = vxpose.xlu0.b32.cont [2/16] %v330, 128
        %484 = vxpose.xlu0.b32.cont [3/16] %v338, 128
        %485 = vxpose.xlu0.b32.cont [4/16] %v346, 128
        %486 = vxpose.xlu0.b32.cont [5/16] 0.0, 128
        %487 = vxpose.xlu0.b32.cont [6/16] 0.0, 128
        %488 = vxpose.xlu0.b32.cont [7/16] 0.0, 128
        %489 = vxpose.xlu0.b32.cont [8/16] 0.0, 128
        %490 = vxpose.xlu0.b32.cont [9/16] 0.0, 128
        %491 = vxpose.xlu0.b32.cont [10/16] 0.0, 128
        %492 = vxpose.xlu0.b32.cont [11/16] 0.0, 128
        %493 = vxpose.xlu0.b32.cont [12/16] 0.0, 128
        %494 = vxpose.xlu0.b32.cont [13/16] 0.0, 128
        %495 = vxpose.xlu0.b32.cont [14/16] 0.0, 128
        %496 = vxpose.xlu0.b32.cont [15/16] 0.0, 128
        %497 = vxpose.xlu0.b32.end [16/16] 0.0, 128
        %v498 = vpop.trf.xlu0
        %v499 = vpop.trf.xlu0
        %v500 = vpop.trf.xlu0
        %v501 = vpop.trf.xlu0
        %v502 = vpop.trf.xlu0
        %v503 = vpop.trf.xlu0
        %v504 = vpop.trf.xlu0
        %v505 = vpop.trf.xlu0
        %v506 = vpop.trf.xlu0
        %v507 = vpop.trf.xlu0
        %v508 = vpop.trf.xlu0
        %v509 = vpop.trf.xlu0
        %v510 = vpop.trf.xlu0
        %v511 = vpop.trf.xlu0
        %v512 = vpop.trf.xlu0
        %v513 = vpop.trf.xlu0
        %514 = vxpose.xlu0.b32.start [1/16] %v323, 128
        %515 = vxpose.xlu0.b32.cont [2/16] %v331, 128
        %516 = vxpose.xlu0.b32.cont [3/16] %v339, 128
        %517 = vxpose.xlu0.b32.cont [4/16] %v347, 128
        %518 = vxpose.xlu0.b32.cont [5/16] 0.0, 128
        %519 = vxpose.xlu0.b32.cont [6/16] 0.0, 128
        %520 = vxpose.xlu0.b32.cont [7/16] 0.0, 128
        %521 = vxpose.xlu0.b32.cont [8/16] 0.0, 128
        %522 = vxpose.xlu0.b32.cont [9/16] 0.0, 128
        %523 = vxpose.xlu0.b32.cont [10/16] 0.0, 128
        %524 = vxpose.xlu0.b32.cont [11/16] 0.0, 128
        %525 = vxpose.xlu0.b32.cont [12/16] 0.0, 128
        %526 = vxpose.xlu0.b32.cont [13/16] 0.0, 128
        %527 = vxpose.xlu0.b32.cont [14/16] 0.0, 128
        %528 = vxpose.xlu0.b32.cont [15/16] 0.0, 128
        %529 = vxpose.xlu0.b32.end [16/16] 0.0, 128
        %v530 = vpop.trf.xlu0
        %v531 = vpop.trf.xlu0
        %v532 = vpop.trf.xlu0
        %v533 = vpop.trf.xlu0
        %v534 = vpop.trf.xlu0
        %v535 = vpop.trf.xlu0
        %v536 = vpop.trf.xlu0
        %v537 = vpop.trf.xlu0
        %v538 = vpop.trf.xlu0
        %v539 = vpop.trf.xlu0
        %v540 = vpop.trf.xlu0
        %v541 = vpop.trf.xlu0
        %v542 = vpop.trf.xlu0
        %v543 = vpop.trf.xlu0
        %v544 = vpop.trf.xlu0
        %v545 = vpop.trf.xlu0
        %546 = vxpose.xlu0.b32.start [1/16] %v324, 128
        %547 = vxpose.xlu0.b32.cont [2/16] %v332, 128
        %548 = vxpose.xlu0.b32.cont [3/16] %v340, 128
        %549 = vxpose.xlu0.b32.cont [4/16] %v348, 128
        %550 = vxpose.xlu0.b32.cont [5/16] 0.0, 128
        %551 = vxpose.xlu0.b32.cont [6/16] 0.0, 128
        %552 = vxpose.xlu0.b32.cont [7/16] 0.0, 128
        %553 = vxpose.xlu0.b32.cont [8/16] 0.0, 128
        %554 = vxpose.xlu0.b32.cont [9/16] 0.0, 128
        %555 = vxpose.xlu0.b32.cont [10/16] 0.0, 128
        %556 = vxpose.xlu0.b32.cont [11/16] 0.0, 128
        %557 = vxpose.xlu0.b32.cont [12/16] 0.0, 128
        %558 = vxpose.xlu0.b32.cont [13/16] 0.0, 128
        %559 = vxpose.xlu0.b32.cont [14/16] 0.0, 128
        %560 = vxpose.xlu0.b32.cont [15/16] 0.0, 128
        %561 = vxpose.xlu0.b32.end [16/16] 0.0, 128
        %v562 = vpop.trf.xlu0
        %v563 = vpop.trf.xlu0
        %v564 = vpop.trf.xlu0
        %v565 = vpop.trf.xlu0
        %v566 = vpop.trf.xlu0
        %v567 = vpop.trf.xlu0
        %v568 = vpop.trf.xlu0
        %v569 = vpop.trf.xlu0
        %v570 = vpop.trf.xlu0
        %v571 = vpop.trf.xlu0
        %v572 = vpop.trf.xlu0
        %v573 = vpop.trf.xlu0
        %v574 = vpop.trf.xlu0
        %v575 = vpop.trf.xlu0
        %v576 = vpop.trf.xlu0
        %v577 = vpop.trf.xlu0
        %578 = vxpose.xlu0.b32.start [1/16] %v325, 128
        %579 = vxpose.xlu0.b32.cont [2/16] %v333, 128
        %580 = vxpose.xlu0.b32.cont [3/16] %v341, 128
        %581 = vxpose.xlu0.b32.cont [4/16] %v349, 128
        %582 = vxpose.xlu0.b32.cont [5/16] 0.0, 128
        %583 = vxpose.xlu0.b32.cont [6/16] 0.0, 128
        %584 = vxpose.xlu0.b32.cont [7/16] 0.0, 128
        %585 = vxpose.xlu0.b32.cont [8/16] 0.0, 128
        %586 = vxpose.xlu0.b32.cont [9/16] 0.0, 128
        %587 = vxpose.xlu0.b32.cont [10/16] 0.0, 128
        %588 = vxpose.xlu0.b32.cont [11/16] 0.0, 128
        %589 = vxpose.xlu0.b32.cont [12/16] 0.0, 128
        %590 = vxpose.xlu0.b32.cont [13/16] 0.0, 128
        %591 = vxpose.xlu0.b32.cont [14/16] 0.0, 128
        %592 = vxpose.xlu0.b32.cont [15/16] 0.0, 128
        %593 = vxpose.xlu0.b32.end [16/16] 0.0, 128
        %v594 = vpop.trf.xlu0
        %v595 = vpop.trf.xlu0
        %v596 = vpop.trf.xlu0
        %v597 = vpop.trf.xlu0
        %v598 = vpop.trf.xlu0
        %v599 = vpop.trf.xlu0
        %v600 = vpop.trf.xlu0
        %v601 = vpop.trf.xlu0
        %v602 = vpop.trf.xlu0
        %v603 = vpop.trf.xlu0
        %v604 = vpop.trf.xlu0
        %v605 = vpop.trf.xlu0
        %v606 = vpop.trf.xlu0
        %v607 = vpop.trf.xlu0
        %v608 = vpop.trf.xlu0
        %v609 = vpop.trf.xlu0
        %vm610 = vcmask 261120
        %v612 = vsel %vm610, %v370, 0
        %v615 = vsel %vm610, %v371, 0
        %v618 = vsel %vm610, %v372, 0
        %v621 = vsel %vm610, %v373, 0
        %v624 = vsel %vm610, %v374, 0
        %v627 = vsel %vm610, %v375, 0
        %v630 = vsel %vm610, %v376, 0
        %v633 = vsel %vm610, %v377, 0
        %v636 = vsel %vm610, %v378, 0
        %v639 = vsel %vm610, %v379, 0
        %v642 = vsel %vm610, %v380, 0
        %v645 = vsel %vm610, %v381, 0
        %v648 = vsel %vm610, %v382, 0
        %v651 = vsel %vm610, %v383, 0
        %v654 = vsel %vm610, %v384, 0
        %v657 = vsel %vm610, %v385, 0
        %v660 = vsel %vm610, %v402, 0
        %v663 = vsel %vm610, %v403, 0
        %v666 = vsel %vm610, %v404, 0
        %v669 = vsel %vm610, %v405, 0
        %v672 = vsel %vm610, %v406, 0
        %v675 = vsel %vm610, %v407, 0
        %v678 = vsel %vm610, %v408, 0
        %v681 = vsel %vm610, %v409, 0
        %v684 = vsel %vm610, %v410, 0
        %v687 = vsel %vm610, %v411, 0
        %v690 = vsel %vm610, %v412, 0
        %v693 = vsel %vm610, %v413, 0
        %v696 = vsel %vm610, %v414, 0
        %v699 = vsel %vm610, %v415, 0
        %v702 = vsel %vm610, %v416, 0
        %v705 = vsel %vm610, %v417, 0
        %v708 = vsel %vm610, %v434, 0
        %v711 = vsel %vm610, %v435, 0
        %v714 = vsel %vm610, %v436, 0
        %v717 = vsel %vm610, %v437, 0
        %v720 = vsel %vm610, %v438, 0
        %v723 = vsel %vm610, %v439, 0
        %v726 = vsel %vm610, %v440, 0
        %v729 = vsel %vm610, %v441, 0
        %v732 = vsel %vm610, %v442, 0
        %v735 = vsel %vm610, %v443, 0
        %v738 = vsel %vm610, %v444, 0
        %v741 = vsel %vm610, %v445, 0
        %v744 = vsel %vm610, %v446, 0
        %v747 = vsel %vm610, %v447, 0
        %v750 = vsel %vm610, %v448, 0
        %v753 = vsel %vm610, %v449, 0
        %v756 = vsel %vm610, %v466, 0
        %v759 = vsel %vm610, %v467, 0
        %v762 = vsel %vm610, %v468, 0
        %v765 = vsel %vm610, %v469, 0
        %v768 = vsel %vm610, %v470, 0
        %v771 = vsel %vm610, %v471, 0
        %v774 = vsel %vm610, %v472, 0
        %v777 = vsel %vm610, %v473, 0
        %v780 = vsel %vm610, %v474, 0
        %v783 = vsel %vm610, %v475, 0
        %v786 = vsel %vm610, %v476, 0
        %v789 = vsel %vm610, %v477, 0
        %v792 = vsel %vm610, %v478, 0
        %v795 = vsel %vm610, %v479, 0
        %v798 = vsel %vm610, %v480, 0
        %v801 = vsel %vm610, %v481, 0
        %v804 = vsel %vm610, %v498, 0
        %v807 = vsel %vm610, %v499, 0
        %v810 = vsel %vm610, %v500, 0
        %v813 = vsel %vm610, %v501, 0
        %v816 = vsel %vm610, %v502, 0
        %v819 = vsel %vm610, %v503, 0
        %v822 = vsel %vm610, %v504, 0
        %v825 = vsel %vm610, %v505, 0
        %v828 = vsel %vm610, %v506, 0
        %v831 = vsel %vm610, %v507, 0
        %v834 = vsel %vm610, %v508, 0
        %v837 = vsel %vm610, %v509, 0
        %v840 = vsel %vm610, %v510, 0
        %v843 = vsel %vm610, %v511, 0
        %v846 = vsel %vm610, %v512, 0
        %v849 = vsel %vm610, %v513, 0
        %v852 = vsel %vm610, %v530, 0
        %v855 = vsel %vm610, %v531, 0
        %v858 = vsel %vm610, %v532, 0
        %v861 = vsel %vm610, %v533, 0
        %v864 = vsel %vm610, %v534, 0
        %v867 = vsel %vm610, %v535, 0
        %v870 = vsel %vm610, %v536, 0
        %v873 = vsel %vm610, %v537, 0
        %v876 = vsel %vm610, %v538, 0
        %v879 = vsel %vm610, %v539, 0
        %v882 = vsel %vm610, %v540, 0
        %v885 = vsel %vm610, %v541, 0
        %v888 = vsel %vm610, %v542, 0
        %v891 = vsel %vm610, %v543, 0
        %v894 = vsel %vm610, %v544, 0
        %v897 = vsel %vm610, %v545, 0
        %v900 = vsel %vm610, %v562, 0
        %v903 = vsel %vm610, %v563, 0
        %v906 = vsel %vm610, %v564, 0
        %v909 = vsel %vm610, %v565, 0
        %v912 = vsel %vm610, %v566, 0
        %v915 = vsel %vm610, %v567, 0
        %v918 = vsel %vm610, %v568, 0
        %v921 = vsel %vm610, %v569, 0
        %v924 = vsel %vm610, %v570, 0
        %v927 = vsel %vm610, %v571, 0
        %v930 = vsel %vm610, %v572, 0
        %v933 = vsel %vm610, %v573, 0
        %v936 = vsel %vm610, %v574, 0
        %v939 = vsel %vm610, %v575, 0
        %v942 = vsel %vm610, %v576, 0
        %v945 = vsel %vm610, %v577, 0
        %v948 = vsel %vm610, %v594, 0
        %v951 = vsel %vm610, %v595, 0
        %v954 = vsel %vm610, %v596, 0
        %v957 = vsel %vm610, %v597, 0
        %v960 = vsel %vm610, %v598, 0
        %v963 = vsel %vm610, %v599, 0
        %v966 = vsel %vm610, %v600, 0
        %v969 = vsel %vm610, %v601, 0
        %v972 = vsel %vm610, %v602, 0
        %v975 = vsel %vm610, %v603, 0
        %v978 = vsel %vm610, %v604, 0
        %v981 = vsel %vm610, %v605, 0
        %v984 = vsel %vm610, %v606, 0
        %v987 = vsel %vm610, %v607, 0
        %v990 = vsel %vm610, %v608, 0
        %v993 = vsel %vm610, %v609, 0
        %995 = vmatprep.subr.mxu0 0.0
        %996 = vmatpush1.msra.mxu0 %v350
        %997 = vmatprep.subr.mxu0 0.0
        %998 = vmatpush1.msra.mxu0 %v351
        %999 = vmatprep.subr.mxu0 0.0
        %1000 = vmatpush1.msra.mxu0 %v352
        %1001 = vmatprep.subr.mxu0 0.0
        %1002 = vmatpush1.msra.mxu0 %v353
        %1003 = vmatprep.subr.mxu0 0.0
        %1004 = vmatpush1.msra.mxu0 0.0
        %1005 = vmatprep.subr.mxu0 0.0
        %1006 = vmatpush1.msra.mxu0 0.0
        %1007 = vmatprep.subr.mxu0 0.0
        %1008 = vmatpush1.msra.mxu0 0.0
        %1009 = vmatprep.subr.mxu0 0.0
        %1010 = vmatpush1.msra.mxu0 0.0
        %1011 = vmatprep.subr.mxu0 0.0
        %1012 = vmatpush1.msra.mxu0 0.0
        %1013 = vmatprep.subr.mxu0 0.0
        %1014 = vmatpush1.msra.mxu0 0.0
        %1015 = vmatprep.subr.mxu0 0.0
        %1016 = vmatpush1.msra.mxu0 0.0
        %1017 = vmatprep.subr.mxu0 0.0
        %1018 = vmatpush1.msra.mxu0 0.0
        %1019 = vmatprep.subr.mxu0 0.0
        %1020 = vmatpush1.msra.mxu0 0.0
        %1021 = vmatprep.subr.mxu0 0.0
        %1022 = vmatpush1.msra.mxu0 0.0
        %1023 = vmatprep.subr.mxu0 0.0
        %1024 = vmatpush1.msra.mxu0 0.0
        %1025 = vmatprep.subr.mxu0 0.0
        %1026 = vmatpush1.msra.mxu0 0.0
        %1027 = vmatprep.subr.mxu0 0.0
        %1028 = vmatpush1.msra.mxu0 0.0
        %1029 = vmatprep.subr.mxu0 0.0
        %1030 = vmatpush1.msra.mxu0 0.0
        %1031 = vmatprep.subr.mxu0 0.0
        %1032 = vmatpush1.msra.mxu0 0.0
        %1033 = vmatprep.subr.mxu0 0.0
        %1034 = vmatpush1.msra.mxu0 0.0
        %1035 = vmatprep.subr.mxu0 0.0
        %1036 = vmatpush1.msra.mxu0 0.0
        %1037 = vmatprep.subr.mxu0 0.0
        %1038 = vmatpush1.msra.mxu0 0.0
        %1039 = vmatprep.subr.mxu0 0.0
        %1040 = vmatpush1.msra.mxu0 0.0
        %1041 = vmatprep.subr.mxu0 0.0
        %1042 = vmatpush1.msra.mxu0 0.0
        %1043 = vmatprep.subr.mxu0 0.0
        %1044 = vmatpush1.msra.mxu0 0.0
        %1045 = vmatprep.subr.mxu0 0.0
        %1046 = vmatpush1.msra.mxu0 0.0
        %1047 = vmatprep.subr.mxu0 0.0
        %1048 = vmatpush1.msra.mxu0 0.0
        %1049 = vmatprep.subr.mxu0 0.0
        %1050 = vmatpush1.msra.mxu0 0.0
        %1051 = vmatprep.subr.mxu0 0.0
        %1052 = vmatpush1.msra.mxu0 0.0
        %1053 = vmatprep.subr.mxu0 0.0
        %1054 = vmatpush1.msra.mxu0 0.0
        %1055 = vmatprep.subr.mxu0 0.0
        %1056 = vmatpush1.msra.mxu0 0.0
        %1057 = vmatprep.subr.mxu0 0.0
        %1058 = vmatpush1.msra.mxu0 0.0
        %1059 = vmatprep.mubr.f32.mxu0 0.0
        %1060 = vmatmul.mubr.f32.gmra.mrb[0].mxu0 %v612
        %v1061 = vpop.f32.mrb[0].mxu0
        %v1062 = vadd.f32 0.0, %v1061
        %v1063 = vpop.f32.mrb[0].mxu0
        %1064 = vmatprep.mubr.f32.mxu0 0.0
        %1065 = vmatmul.mubr.f32.gmra.mrb[0].mxu0 %v615
        %v1066 = vpop.f32.mrb[0].mxu0
        %v1067 = vadd.f32 0.0, %v1066
        %v1068 = vpop.f32.mrb[0].mxu0
        %1069 = vmatprep.mubr.f32.mxu0 0.0
        %1070 = vmatmul.mubr.f32.gmra.mrb[0].mxu0 %v618
        %v1071 = vpop.f32.mrb[0].mxu0
        %v1072 = vadd.f32 0.0, %v1071
        %v1073 = vpop.f32.mrb[0].mxu0
        %1074 = vmatprep.mubr.f32.mxu0 0.0
        %1075 = vmatmul.mubr.f32.gmra.mrb[0].mxu0 %v621
        %v1076 = vpop.f32.mrb[0].mxu0
        %v1077 = vadd.f32 0.0, %v1076
        %v1078 = vpop.f32.mrb[0].mxu0
        %1079 = vmatprep.mubr.f32.mxu0 0.0
        %1080 = vmatmul.mubr.f32.gmra.mrb[0].mxu0 %v624
        %v1081 = vpop.f32.mrb[0].mxu0
        %v1082 = vadd.f32 0.0, %v1081
        %v1083 = vpop.f32.mrb[0].mxu0
        %1084 = vmatprep.mubr.f32.mxu0 0.0
        %1085 = vmatmul.mubr.f32.gmra.mrb[0].mxu0 %v627
        %v1086 = vpop.f32.mrb[0].mxu0
        %v1087 = vadd.f32 0.0, %v1086
        %v1088 = vpop.f32.mrb[0].mxu0
        %1089 = vmatprep.mubr.f32.mxu0 0.0
        %1090 = vmatmul.mubr.f32.gmra.mrb[0].mxu0 %v630
        %v1091 = vpop.f32.mrb[0].mxu0
        %v1092 = vadd.f32 0.0, %v1091
        %v1093 = vpop.f32.mrb[0].mxu0
        %1094 = vmatprep.mubr.f32.mxu0 0.0
        %1095 = vmatmul.mubr.f32.gmra.mrb[0].mxu0 %v633
        %v1096 = vpop.f32.mrb[0].mxu0
        %v1097 = vadd.f32 0.0, %v1096
        %v1098 = vpop.f32.mrb[0].mxu0
        %1099 = vmatprep.mubr.f32.mxu0 0.0
        %1100 = vmatmul.mubr.f32.gmra.mrb[0].mxu0 %v636
        %v1101 = vpop.f32.mrb[0].mxu0
        %v1102 = vadd.f32 0.0, %v1101
        %v1103 = vpop.f32.mrb[0].mxu0
        %1104 = vmatprep.mubr.f32.mxu0 0.0
        %1105 = vmatmul.mubr.f32.gmra.mrb[0].mxu0 %v639
        %v1106 = vpop.f32.mrb[0].mxu0
        %v1107 = vadd.f32 0.0, %v1106
        %v1108 = vpop.f32.mrb[0].mxu0
        %1109 = vmatprep.mubr.f32.mxu0 0.0
        %1110 = vmatmul.mubr.f32.gmra.mrb[0].mxu0 %v642
        %v1111 = vpop.f32.mrb[0].mxu0
        %v1112 = vadd.f32 0.0, %v1111
        %v1113 = vpop.f32.mrb[0].mxu0
        %1114 = vmatprep.mubr.f32.mxu0 0.0
        %1115 = vmatmul.mubr.f32.gmra.mrb[0].mxu0 %v645
        %v1116 = vpop.f32.mrb[0].mxu0
        %v1117 = vadd.f32 0.0, %v1116
        %v1118 = vpop.f32.mrb[0].mxu0
        %1119 = vmatprep.mubr.f32.mxu0 0.0
        %1120 = vmatmul.mubr.f32.gmra.mrb[0].mxu0 %v648
        %v1121 = vpop.f32.mrb[0].mxu0
        %v1122 = vadd.f32 0.0, %v1121
        %v1123 = vpop.f32.mrb[0].mxu0
        %1124 = vmatprep.mubr.f32.mxu0 0.0
        %1125 = vmatmul.mubr.f32.gmra.mrb[0].mxu0 %v651
        %v1126 = vpop.f32.mrb[0].mxu0
        %v1127 = vadd.f32 0.0, %v1126
        %v1128 = vpop.f32.mrb[0].mxu0
        %1129 = vmatprep.mubr.f32.mxu0 0.0
        %1130 = vmatmul.mubr.f32.gmra.mrb[0].mxu0 %v654
        %v1131 = vpop.f32.mrb[0].mxu0
        %v1132 = vadd.f32 0.0, %v1131
        %v1133 = vpop.f32.mrb[0].mxu0
        %1134 = vmatprep.mubr.f32.mxu0 0.0
        %1135 = vmatmul.mubr.f32.gmra.mrb[0].mxu0 %v657
        %v1136 = vpop.f32.mrb[0].mxu0
        %v1137 = vadd.f32 0.0, %v1136
        %v1138 = vpop.f32.mrb[0].mxu0
        %1139 = vmatprep.mubr.f32.mxu0 0.0
        %1140 = vmatmul.mubr.f32.gmra.mrb[0].mxu0 %v660
        %v1141 = vpop.f32.mrb[0].mxu0
        %v1142 = vadd.f32 0.0, %v1141
        %v1143 = vpop.f32.mrb[0].mxu0
        %1144 = vmatprep.mubr.f32.mxu0 0.0
        %1145 = vmatmul.mubr.f32.gmra.mrb[0].mxu0 %v663
        %v1146 = vpop.f32.mrb[0].mxu0
        %v1147 = vadd.f32 0.0, %v1146
        %v1148 = vpop.f32.mrb[0].mxu0
        %1149 = vmatprep.mubr.f32.mxu0 0.0
        %1150 = vmatmul.mubr.f32.gmra.mrb[0].mxu0 %v666
        %v1151 = vpop.f32.mrb[0].mxu0
        %v1152 = vadd.f32 0.0, %v1151
        %v1153 = vpop.f32.mrb[0].mxu0
        %1154 = vmatprep.mubr.f32.mxu0 0.0
        %1155 = vmatmul.mubr.f32.gmra.mrb[0].mxu0 %v669
        %v1156 = vpop.f32.mrb[0].mxu0
        %v1157 = vadd.f32 0.0, %v1156
        %v1158 = vpop.f32.mrb[0].mxu0
        %1159 = vmatprep.mubr.f32.mxu0 0.0
        %1160 = vmatmul.mubr.f32.gmra.mrb[0].mxu0 %v672
        %v1161 = vpop.f32.mrb[0].mxu0
        %v1162 = vadd.f32 0.0, %v1161
        %v1163 = vpop.f32.mrb[0].mxu0
        %1164 = vmatprep.mubr.f32.mxu0 0.0
        %1165 = vmatmul.mubr.f32.gmra.mrb[0].mxu0 %v675
        %v1166 = vpop.f32.mrb[0].mxu0
        %v1167 = vadd.f32 0.0, %v1166
        %v1168 = vpop.f32.mrb[0].mxu0
        %1169 = vmatprep.mubr.f32.mxu0 0.0
        %1170 = vmatmul.mubr.f32.gmra.mrb[0].mxu0 %v678
        %v1171 = vpop.f32.mrb[0].mxu0
        %v1172 = vadd.f32 0.0, %v1171
        %v1173 = vpop.f32.mrb[0].mxu0
        %1174 = vmatprep.mubr.f32.mxu0 0.0
        %1175 = vmatmul.mubr.f32.gmra.mrb[0].mxu0 %v681
        %v1176 = vpop.f32.mrb[0].mxu0
        %v1177 = vadd.f32 0.0, %v1176
        %v1178 = vpop.f32.mrb[0].mxu0
        %1179 = vmatprep.mubr.f32.mxu0 0.0
        %1180 = vmatmul.mubr.f32.gmra.mrb[0].mxu0 %v684
        %v1181 = vpop.f32.mrb[0].mxu0
        %v1182 = vadd.f32 0.0, %v1181
        %v1183 = vpop.f32.mrb[0].mxu0
        %1184 = vmatprep.mubr.f32.mxu0 0.0
        %1185 = vmatmul.mubr.f32.gmra.mrb[0].mxu0 %v687
        %v1186 = vpop.f32.mrb[0].mxu0
        %v1187 = vadd.f32 0.0, %v1186
        %v1188 = vpop.f32.mrb[0].mxu0
        %1189 = vmatprep.mubr.f32.mxu0 0.0
        %1190 = vmatmul.mubr.f32.gmra.mrb[0].mxu0 %v690
        %v1191 = vpop.f32.mrb[0].mxu0
        %v1192 = vadd.f32 0.0, %v1191
        %v1193 = vpop.f32.mrb[0].mxu0
        %1194 = vmatprep.mubr.f32.mxu0 0.0
        %1195 = vmatmul.mubr.f32.gmra.mrb[0].mxu0 %v693
        %v1196 = vpop.f32.mrb[0].mxu0
        %v1197 = vadd.f32 0.0, %v1196
        %v1198 = vpop.f32.mrb[0].mxu0
        %1199 = vmatprep.mubr.f32.mxu0 0.0
        %1200 = vmatmul.mubr.f32.gmra.mrb[0].mxu0 %v696
        %v1201 = vpop.f32.mrb[0].mxu0
        %v1202 = vadd.f32 0.0, %v1201
        %v1203 = vpop.f32.mrb[0].mxu0
        %1204 = vmatprep.mubr.f32.mxu0 0.0
        %1205 = vmatmul.mubr.f32.gmra.mrb[0].mxu0 %v699
        %v1206 = vpop.f32.mrb[0].mxu0
        %v1207 = vadd.f32 0.0, %v1206
        %v1208 = vpop.f32.mrb[0].mxu0
        %1209 = vmatprep.mubr.f32.mxu0 0.0
        %1210 = vmatmul.mubr.f32.gmra.mrb[0].mxu0 %v702
        %v1211 = vpop.f32.mrb[0].mxu0
        %v1212 = vadd.f32 0.0, %v1211
        %v1213 = vpop.f32.mrb[0].mxu0
        %1214 = vmatprep.mubr.f32.mxu0 0.0
        %1215 = vmatmul.mubr.f32.gmra.mrb[0].mxu0 %v705
        %v1216 = vpop.f32.mrb[0].mxu0
        %v1217 = vadd.f32 0.0, %v1216
        %v1218 = vpop.f32.mrb[0].mxu0
        %1219 = vmatprep.mubr.f32.mxu0 0.0
        %1220 = vmatmul.mubr.f32.gmra.mrb[0].mxu0 %v708
        %v1221 = vpop.f32.mrb[0].mxu0
        %v1222 = vadd.f32 0.0, %v1221
        %v1223 = vpop.f32.mrb[0].mxu0
        %1224 = vmatprep.mubr.f32.mxu0 0.0
        %1225 = vmatmul.mubr.f32.gmra.mrb[0].mxu0 %v711
        %v1226 = vpop.f32.mrb[0].mxu0
        %v1227 = vadd.f32 0.0, %v1226
        %v1228 = vpop.f32.mrb[0].mxu0
        %1229 = vmatprep.mubr.f32.mxu0 0.0
        %1230 = vmatmul.mubr.f32.gmra.mrb[0].mxu0 %v714
        %v1231 = vpop.f32.mrb[0].mxu0
        %v1232 = vadd.f32 0.0, %v1231
        %v1233 = vpop.f32.mrb[0].mxu0
        %1234 = vmatprep.mubr.f32.mxu0 0.0
        %1235 = vmatmul.mubr.f32.gmra.mrb[0].mxu0 %v717
        %v1236 = vpop.f32.mrb[0].mxu0
        %v1237 = vadd.f32 0.0, %v1236
        %v1238 = vpop.f32.mrb[0].mxu0
        %1239 = vmatprep.mubr.f32.mxu0 0.0
        %1240 = vmatmul.mubr.f32.gmra.mrb[0].mxu0 %v720
        %v1241 = vpop.f32.mrb[0].mxu0
        %v1242 = vadd.f32 0.0, %v1241
        %v1243 = vpop.f32.mrb[0].mxu0
        %1244 = vmatprep.mubr.f32.mxu0 0.0
        %1245 = vmatmul.mubr.f32.gmra.mrb[0].mxu0 %v723
        %v1246 = vpop.f32.mrb[0].mxu0
        %v1247 = vadd.f32 0.0, %v1246
        %v1248 = vpop.f32.mrb[0].mxu0
        %1249 = vmatprep.mubr.f32.mxu0 0.0
        %1250 = vmatmul.mubr.f32.gmra.mrb[0].mxu0 %v726
        %v1251 = vpop.f32.mrb[0].mxu0
        %v1252 = vadd.f32 0.0, %v1251
        %v1253 = vpop.f32.mrb[0].mxu0
        %1254 = vmatprep.mubr.f32.mxu0 0.0
        %1255 = vmatmul.mubr.f32.gmra.mrb[0].mxu0 %v729
        %v1256 = vpop.f32.mrb[0].mxu0
        %v1257 = vadd.f32 0.0, %v1256
        %v1258 = vpop.f32.mrb[0].mxu0
        %1259 = vmatprep.mubr.f32.mxu0 0.0
        %1260 = vmatmul.mubr.f32.gmra.mrb[0].mxu0 %v732
        %v1261 = vpop.f32.mrb[0].mxu0
        %v1262 = vadd.f32 0.0, %v1261
        %v1263 = vpop.f32.mrb[0].mxu0
        %1264 = vmatprep.mubr.f32.mxu0 0.0
        %1265 = vmatmul.mubr.f32.gmra.mrb[0].mxu0 %v735
        %v1266 = vpop.f32.mrb[0].mxu0
        %v1267 = vadd.f32 0.0, %v1266
        %v1268 = vpop.f32.mrb[0].mxu0
        %1269 = vmatprep.mubr.f32.mxu0 0.0
        %1270 = vmatmul.mubr.f32.gmra.mrb[0].mxu0 %v738
        %v1271 = vpop.f32.mrb[0].mxu0
        %v1272 = vadd.f32 0.0, %v1271
        %v1273 = vpop.f32.mrb[0].mxu0
        %1274 = vmatprep.mubr.f32.mxu0 0.0
        %1275 = vmatmul.mubr.f32.gmra.mrb[0].mxu0 %v741
        %v1276 = vpop.f32.mrb[0].mxu0
        %v1277 = vadd.f32 0.0, %v1276
        %v1278 = vpop.f32.mrb[0].mxu0
        %1279 = vmatprep.mubr.f32.mxu0 0.0
        %1280 = vmatmul.mubr.f32.gmra.mrb[0].mxu0 %v744
        %v1281 = vpop.f32.mrb[0].mxu0
        %v1282 = vadd.f32 0.0, %v1281
        %v1283 = vpop.f32.mrb[0].mxu0
        %1284 = vmatprep.mubr.f32.mxu0 0.0
        %1285 = vmatmul.mubr.f32.gmra.mrb[0].mxu0 %v747
        %v1286 = vpop.f32.mrb[0].mxu0
        %v1287 = vadd.f32 0.0, %v1286
        %v1288 = vpop.f32.mrb[0].mxu0
        %1289 = vmatprep.mubr.f32.mxu0 0.0
        %1290 = vmatmul.mubr.f32.gmra.mrb[0].mxu0 %v750
        %v1291 = vpop.f32.mrb[0].mxu0
        %v1292 = vadd.f32 0.0, %v1291
        %v1293 = vpop.f32.mrb[0].mxu0
        %1294 = vmatprep.mubr.f32.mxu0 0.0
        %1295 = vmatmul.mubr.f32.gmra.mrb[0].mxu0 %v753
        %v1296 = vpop.f32.mrb[0].mxu0
        %v1297 = vadd.f32 0.0, %v1296
        %v1298 = vpop.f32.mrb[0].mxu0
        %1299 = vmatprep.mubr.f32.mxu0 0.0
        %1300 = vmatmul.mubr.f32.gmra.mrb[0].mxu0 %v756
        %v1301 = vpop.f32.mrb[0].mxu0
        %v1302 = vadd.f32 0.0, %v1301
        %v1303 = vpop.f32.mrb[0].mxu0
        %1304 = vmatprep.mubr.f32.mxu0 0.0
        %1305 = vmatmul.mubr.f32.gmra.mrb[0].mxu0 %v759
        %v1306 = vpop.f32.mrb[0].mxu0
        %v1307 = vadd.f32 0.0, %v1306
        %v1308 = vpop.f32.mrb[0].mxu0
        %1309 = vmatprep.mubr.f32.mxu0 0.0
        %1310 = vmatmul.mubr.f32.gmra.mrb[0].mxu0 %v762
        %v1311 = vpop.f32.mrb[0].mxu0
        %v1312 = vadd.f32 0.0, %v1311
        %v1313 = vpop.f32.mrb[0].mxu0
        %1314 = vmatprep.mubr.f32.mxu0 0.0
        %1315 = vmatmul.mubr.f32.gmra.mrb[0].mxu0 %v765
        %v1316 = vpop.f32.mrb[0].mxu0
        %v1317 = vadd.f32 0.0, %v1316
        %v1318 = vpop.f32.mrb[0].mxu0
        %1319 = vmatprep.mubr.f32.mxu0 0.0
        %1320 = vmatmul.mubr.f32.gmra.mrb[0].mxu0 %v768
        %v1321 = vpop.f32.mrb[0].mxu0
        %v1322 = vadd.f32 0.0, %v1321
        %v1323 = vpop.f32.mrb[0].mxu0
        %1324 = vmatprep.mubr.f32.mxu0 0.0
        %1325 = vmatmul.mubr.f32.gmra.mrb[0].mxu0 %v771
        %v1326 = vpop.f32.mrb[0].mxu0
        %v1327 = vadd.f32 0.0, %v1326
        %v1328 = vpop.f32.mrb[0].mxu0
        %1329 = vmatprep.mubr.f32.mxu0 0.0
        %1330 = vmatmul.mubr.f32.gmra.mrb[0].mxu0 %v774
        %v1331 = vpop.f32.mrb[0].mxu0
        %v1332 = vadd.f32 0.0, %v1331
        %v1333 = vpop.f32.mrb[0].mxu0
        %1334 = vmatprep.mubr.f32.mxu0 0.0
        %1335 = vmatmul.mubr.f32.gmra.mrb[0].mxu0 %v777
        %v1336 = vpop.f32.mrb[0].mxu0
        %v1337 = vadd.f32 0.0, %v1336
        %v1338 = vpop.f32.mrb[0].mxu0
        %1339 = vmatprep.mubr.f32.mxu0 0.0
        %1340 = vmatmul.mubr.f32.gmra.mrb[0].mxu0 %v780
        %v1341 = vpop.f32.mrb[0].mxu0
        %v1342 = vadd.f32 0.0, %v1341
        %v1343 = vpop.f32.mrb[0].mxu0
        %1344 = vmatprep.mubr.f32.mxu0 0.0
        %1345 = vmatmul.mubr.f32.gmra.mrb[0].mxu0 %v783
        %v1346 = vpop.f32.mrb[0].mxu0
        %v1347 = vadd.f32 0.0, %v1346
        %v1348 = vpop.f32.mrb[0].mxu0
        %1349 = vmatprep.mubr.f32.mxu0 0.0
        %1350 = vmatmul.mubr.f32.gmra.mrb[0].mxu0 %v786
        %v1351 = vpop.f32.mrb[0].mxu0
        %v1352 = vadd.f32 0.0, %v1351
        %v1353 = vpop.f32.mrb[0].mxu0
        %1354 = vmatprep.mubr.f32.mxu0 0.0
        %1355 = vmatmul.mubr.f32.gmra.mrb[0].mxu0 %v789
        %v1356 = vpop.f32.mrb[0].mxu0
        %v1357 = vadd.f32 0.0, %v1356
        %v1358 = vpop.f32.mrb[0].mxu0
        %1359 = vmatprep.mubr.f32.mxu0 0.0
        %1360 = vmatmul.mubr.f32.gmra.mrb[0].mxu0 %v792
        %v1361 = vpop.f32.mrb[0].mxu0
        %v1362 = vadd.f32 0.0, %v1361
        %v1363 = vpop.f32.mrb[0].mxu0
        %1364 = vmatprep.mubr.f32.mxu0 0.0
        %1365 = vmatmul.mubr.f32.gmra.mrb[0].mxu0 %v795
        %v1366 = vpop.f32.mrb[0].mxu0
        %v1367 = vadd.f32 0.0, %v1366
        %v1368 = vpop.f32.mrb[0].mxu0
        %1369 = vmatprep.mubr.f32.mxu0 0.0
        %1370 = vmatmul.mubr.f32.gmra.mrb[0].mxu0 %v798
        %v1371 = vpop.f32.mrb[0].mxu0
        %v1372 = vadd.f32 0.0, %v1371
        %v1373 = vpop.f32.mrb[0].mxu0
        %1374 = vmatprep.mubr.f32.mxu0 0.0
        %1375 = vmatmul.mubr.f32.gmra.mrb[0].mxu0 %v801
        %v1376 = vpop.f32.mrb[0].mxu0
        %v1377 = vadd.f32 0.0, %v1376
        %v1378 = vpop.f32.mrb[0].mxu0
        %1379 = vmatprep.mubr.f32.mxu0 0.0
        %1380 = vmatmul.mubr.f32.gmra.mrb[0].mxu0 %v804
        %v1381 = vpop.f32.mrb[0].mxu0
        %v1382 = vadd.f32 0.0, %v1381
        %v1383 = vpop.f32.mrb[0].mxu0
        %1384 = vmatprep.mubr.f32.mxu0 0.0
        %1385 = vmatmul.mubr.f32.gmra.mrb[0].mxu0 %v807
        %v1386 = vpop.f32.mrb[0].mxu0
        %v1387 = vadd.f32 0.0, %v1386
        %v1388 = vpop.f32.mrb[0].mxu0
        %1389 = vmatprep.mubr.f32.mxu0 0.0
        %1390 = vmatmul.mubr.f32.gmra.mrb[0].mxu0 %v810
        %v1391 = vpop.f32.mrb[0].mxu0
        %v1392 = vadd.f32 0.0, %v1391
        %v1393 = vpop.f32.mrb[0].mxu0
        %1394 = vmatprep.mubr.f32.mxu0 0.0
        %1395 = vmatmul.mubr.f32.gmra.mrb[0].mxu0 %v813
        %v1396 = vpop.f32.mrb[0].mxu0
        %v1397 = vadd.f32 0.0, %v1396
        %v1398 = vpop.f32.mrb[0].mxu0
        %1399 = vmatprep.mubr.f32.mxu0 0.0
        %1400 = vmatmul.mubr.f32.gmra.mrb[0].mxu0 %v816
        %v1401 = vpop.f32.mrb[0].mxu0
        %v1402 = vadd.f32 0.0, %v1401
        %v1403 = vpop.f32.mrb[0].mxu0
        %1404 = vmatprep.mubr.f32.mxu0 0.0
        %1405 = vmatmul.mubr.f32.gmra.mrb[0].mxu0 %v819
        %v1406 = vpop.f32.mrb[0].mxu0
        %v1407 = vadd.f32 0.0, %v1406
        %v1408 = vpop.f32.mrb[0].mxu0
        %1409 = vmatprep.mubr.f32.mxu0 0.0
        %1410 = vmatmul.mubr.f32.gmra.mrb[0].mxu0 %v822
        %v1411 = vpop.f32.mrb[0].mxu0
        %v1412 = vadd.f32 0.0, %v1411
        %v1413 = vpop.f32.mrb[0].mxu0
        %1414 = vmatprep.mubr.f32.mxu0 0.0
        %1415 = vmatmul.mubr.f32.gmra.mrb[0].mxu0 %v825
        %v1416 = vpop.f32.mrb[0].mxu0
        %v1417 = vadd.f32 0.0, %v1416
        %v1418 = vpop.f32.mrb[0].mxu0
        %1419 = vmatprep.mubr.f32.mxu0 0.0
        %1420 = vmatmul.mubr.f32.gmra.mrb[0].mxu0 %v828
        %v1421 = vpop.f32.mrb[0].mxu0
        %v1422 = vadd.f32 0.0, %v1421
        %v1423 = vpop.f32.mrb[0].mxu0
        %1424 = vmatprep.mubr.f32.mxu0 0.0
        %1425 = vmatmul.mubr.f32.gmra.mrb[0].mxu0 %v831
        %v1426 = vpop.f32.mrb[0].mxu0
        %v1427 = vadd.f32 0.0, %v1426
        %v1428 = vpop.f32.mrb[0].mxu0
        %1429 = vmatprep.mubr.f32.mxu0 0.0
        %1430 = vmatmul.mubr.f32.gmra.mrb[0].mxu0 %v834
        %v1431 = vpop.f32.mrb[0].mxu0
        %v1432 = vadd.f32 0.0, %v1431
        %v1433 = vpop.f32.mrb[0].mxu0
        %1434 = vmatprep.mubr.f32.mxu0 0.0
        %1435 = vmatmul.mubr.f32.gmra.mrb[0].mxu0 %v837
        %v1436 = vpop.f32.mrb[0].mxu0
        %v1437 = vadd.f32 0.0, %v1436
        %v1438 = vpop.f32.mrb[0].mxu0
        %1439 = vmatprep.mubr.f32.mxu0 0.0
        %1440 = vmatmul.mubr.f32.gmra.mrb[0].mxu0 %v840
        %v1441 = vpop.f32.mrb[0].mxu0
        %v1442 = vadd.f32 0.0, %v1441
        %v1443 = vpop.f32.mrb[0].mxu0
        %1444 = vmatprep.mubr.f32.mxu0 0.0
        %1445 = vmatmul.mubr.f32.gmra.mrb[0].mxu0 %v843
        %v1446 = vpop.f32.mrb[0].mxu0
        %v1447 = vadd.f32 0.0, %v1446
        %v1448 = vpop.f32.mrb[0].mxu0
        %1449 = vmatprep.mubr.f32.mxu0 0.0
        %1450 = vmatmul.mubr.f32.gmra.mrb[0].mxu0 %v846
        %v1451 = vpop.f32.mrb[0].mxu0
        %v1452 = vadd.f32 0.0, %v1451
        %v1453 = vpop.f32.mrb[0].mxu0
        %1454 = vmatprep.mubr.f32.mxu0 0.0
        %1455 = vmatmul.mubr.f32.gmra.mrb[0].mxu0 %v849
        %v1456 = vpop.f32.mrb[0].mxu0
        %v1457 = vadd.f32 0.0, %v1456
        %v1458 = vpop.f32.mrb[0].mxu0
        %1459 = vmatprep.mubr.f32.mxu0 0.0
        %1460 = vmatmul.mubr.f32.gmra.mrb[0].mxu0 %v852
        %v1461 = vpop.f32.mrb[0].mxu0
        %v1462 = vadd.f32 0.0, %v1461
        %v1463 = vpop.f32.mrb[0].mxu0
        %1464 = vmatprep.mubr.f32.mxu0 0.0
        %1465 = vmatmul.mubr.f32.gmra.mrb[0].mxu0 %v855
        %v1466 = vpop.f32.mrb[0].mxu0
        %v1467 = vadd.f32 0.0, %v1466
        %v1468 = vpop.f32.mrb[0].mxu0
        %1469 = vmatprep.mubr.f32.mxu0 0.0
        %1470 = vmatmul.mubr.f32.gmra.mrb[0].mxu0 %v858
        %v1471 = vpop.f32.mrb[0].mxu0
        %v1472 = vadd.f32 0.0, %v1471
        %v1473 = vpop.f32.mrb[0].mxu0
        %1474 = vmatprep.mubr.f32.mxu0 0.0
        %1475 = vmatmul.mubr.f32.gmra.mrb[0].mxu0 %v861
        %v1476 = vpop.f32.mrb[0].mxu0
        %v1477 = vadd.f32 0.0, %v1476
        %v1478 = vpop.f32.mrb[0].mxu0
        %1479 = vmatprep.mubr.f32.mxu0 0.0
        %1480 = vmatmul.mubr.f32.gmra.mrb[0].mxu0 %v864
        %v1481 = vpop.f32.mrb[0].mxu0
        %v1482 = vadd.f32 0.0, %v1481
        %v1483 = vpop.f32.mrb[0].mxu0
        %1484 = vmatprep.mubr.f32.mxu0 0.0
        %1485 = vmatmul.mubr.f32.gmra.mrb[0].mxu0 %v867
        %v1486 = vpop.f32.mrb[0].mxu0
        %v1487 = vadd.f32 0.0, %v1486
        %v1488 = vpop.f32.mrb[0].mxu0
        %1489 = vmatprep.mubr.f32.mxu0 0.0
        %1490 = vmatmul.mubr.f32.gmra.mrb[0].mxu0 %v870
        %v1491 = vpop.f32.mrb[0].mxu0
        %v1492 = vadd.f32 0.0, %v1491
        %v1493 = vpop.f32.mrb[0].mxu0
        %1494 = vmatprep.mubr.f32.mxu0 0.0
        %1495 = vmatmul.mubr.f32.gmra.mrb[0].mxu0 %v873
        %v1496 = vpop.f32.mrb[0].mxu0
        %v1497 = vadd.f32 0.0, %v1496
        %v1498 = vpop.f32.mrb[0].mxu0
        %1499 = vmatprep.mubr.f32.mxu0 0.0
        %1500 = vmatmul.mubr.f32.gmra.mrb[0].mxu0 %v876
        %v1501 = vpop.f32.mrb[0].mxu0
        %v1502 = vadd.f32 0.0, %v1501
        %v1503 = vpop.f32.mrb[0].mxu0
        %1504 = vmatprep.mubr.f32.mxu0 0.0
        %1505 = vmatmul.mubr.f32.gmra.mrb[0].mxu0 %v879
        %v1506 = vpop.f32.mrb[0].mxu0
        %v1507 = vadd.f32 0.0, %v1506
        %v1508 = vpop.f32.mrb[0].mxu0
        %1509 = vmatprep.mubr.f32.mxu0 0.0
        %1510 = vmatmul.mubr.f32.gmra.mrb[0].mxu0 %v882
        %v1511 = vpop.f32.mrb[0].mxu0
        %v1512 = vadd.f32 0.0, %v1511
        %v1513 = vpop.f32.mrb[0].mxu0
        %1514 = vmatprep.mubr.f32.mxu0 0.0
        %1515 = vmatmul.mubr.f32.gmra.mrb[0].mxu0 %v885
        %v1516 = vpop.f32.mrb[0].mxu0
        %v1517 = vadd.f32 0.0, %v1516
        %v1518 = vpop.f32.mrb[0].mxu0
        %1519 = vmatprep.mubr.f32.mxu0 0.0
        %1520 = vmatmul.mubr.f32.gmra.mrb[0].mxu0 %v888
        %v1521 = vpop.f32.mrb[0].mxu0
        %v1522 = vadd.f32 0.0, %v1521
        %v1523 = vpop.f32.mrb[0].mxu0
        %1524 = vmatprep.mubr.f32.mxu0 0.0
        %1525 = vmatmul.mubr.f32.gmra.mrb[0].mxu0 %v891
        %v1526 = vpop.f32.mrb[0].mxu0
        %v1527 = vadd.f32 0.0, %v1526
        %v1528 = vpop.f32.mrb[0].mxu0
        %1529 = vmatprep.mubr.f32.mxu0 0.0
        %1530 = vmatmul.mubr.f32.gmra.mrb[0].mxu0 %v894
        %v1531 = vpop.f32.mrb[0].mxu0
        %v1532 = vadd.f32 0.0, %v1531
        %v1533 = vpop.f32.mrb[0].mxu0
        %1534 = vmatprep.mubr.f32.mxu0 0.0
        %1535 = vmatmul.mubr.f32.gmra.mrb[0].mxu0 %v897
        %v1536 = vpop.f32.mrb[0].mxu0
        %v1537 = vadd.f32 0.0, %v1536
        %v1538 = vpop.f32.mrb[0].mxu0
        %1539 = vmatprep.mubr.f32.mxu0 0.0
        %1540 = vmatmul.mubr.f32.gmra.mrb[0].mxu0 %v900
        %v1541 = vpop.f32.mrb[0].mxu0
        %v1542 = vadd.f32 0.0, %v1541
        %v1543 = vpop.f32.mrb[0].mxu0
        %1544 = vmatprep.mubr.f32.mxu0 0.0
        %1545 = vmatmul.mubr.f32.gmra.mrb[0].mxu0 %v903
        %v1546 = vpop.f32.mrb[0].mxu0
        %v1547 = vadd.f32 0.0, %v1546
        %v1548 = vpop.f32.mrb[0].mxu0
        %1549 = vmatprep.mubr.f32.mxu0 0.0
        %1550 = vmatmul.mubr.f32.gmra.mrb[0].mxu0 %v906
        %v1551 = vpop.f32.mrb[0].mxu0
        %v1552 = vadd.f32 0.0, %v1551
        %v1553 = vpop.f32.mrb[0].mxu0
        %1554 = vmatprep.mubr.f32.mxu0 0.0
        %1555 = vmatmul.mubr.f32.gmra.mrb[0].mxu0 %v909
        %v1556 = vpop.f32.mrb[0].mxu0
        %v1557 = vadd.f32 0.0, %v1556
        %v1558 = vpop.f32.mrb[0].mxu0
        %1559 = vmatprep.mubr.f32.mxu0 0.0
        %1560 = vmatmul.mubr.f32.gmra.mrb[0].mxu0 %v912
        %v1561 = vpop.f32.mrb[0].mxu0
        %v1562 = vadd.f32 0.0, %v1561
        %v1563 = vpop.f32.mrb[0].mxu0
        %1564 = vmatprep.mubr.f32.mxu0 0.0
        %1565 = vmatmul.mubr.f32.gmra.mrb[0].mxu0 %v915
        %v1566 = vpop.f32.mrb[0].mxu0
        %v1567 = vadd.f32 0.0, %v1566
        %v1568 = vpop.f32.mrb[0].mxu0
        %1569 = vmatprep.mubr.f32.mxu0 0.0
        %1570 = vmatmul.mubr.f32.gmra.mrb[0].mxu0 %v918
        %v1571 = vpop.f32.mrb[0].mxu0
        %v1572 = vadd.f32 0.0, %v1571
        %v1573 = vpop.f32.mrb[0].mxu0
        %1574 = vmatprep.mubr.f32.mxu0 0.0
        %1575 = vmatmul.mubr.f32.gmra.mrb[0].mxu0 %v921
        %v1576 = vpop.f32.mrb[0].mxu0
        %v1577 = vadd.f32 0.0, %v1576
        %v1578 = vpop.f32.mrb[0].mxu0
        %1579 = vmatprep.mubr.f32.mxu0 0.0
        %1580 = vmatmul.mubr.f32.gmra.mrb[0].mxu0 %v924
        %v1581 = vpop.f32.mrb[0].mxu0
        %v1582 = vadd.f32 0.0, %v1581
        %v1583 = vpop.f32.mrb[0].mxu0
        %1584 = vmatprep.mubr.f32.mxu0 0.0
        %1585 = vmatmul.mubr.f32.gmra.mrb[0].mxu0 %v927
        %v1586 = vpop.f32.mrb[0].mxu0
        %v1587 = vadd.f32 0.0, %v1586
        %v1588 = vpop.f32.mrb[0].mxu0
        %1589 = vmatprep.mubr.f32.mxu0 0.0
        %1590 = vmatmul.mubr.f32.gmra.mrb[0].mxu0 %v930
        %v1591 = vpop.f32.mrb[0].mxu0
        %v1592 = vadd.f32 0.0, %v1591
        %v1593 = vpop.f32.mrb[0].mxu0
        %1594 = vmatprep.mubr.f32.mxu0 0.0
        %1595 = vmatmul.mubr.f32.gmra.mrb[0].mxu0 %v933
        %v1596 = vpop.f32.mrb[0].mxu0
        %v1597 = vadd.f32 0.0, %v1596
        %v1598 = vpop.f32.mrb[0].mxu0
        %1599 = vmatprep.mubr.f32.mxu0 0.0
        %1600 = vmatmul.mubr.f32.gmra.mrb[0].mxu0 %v936
        %v1601 = vpop.f32.mrb[0].mxu0
        %v1602 = vadd.f32 0.0, %v1601
        %v1603 = vpop.f32.mrb[0].mxu0
        %1604 = vmatprep.mubr.f32.mxu0 0.0
        %1605 = vmatmul.mubr.f32.gmra.mrb[0].mxu0 %v939
        %v1606 = vpop.f32.mrb[0].mxu0
        %v1607 = vadd.f32 0.0, %v1606
        %v1608 = vpop.f32.mrb[0].mxu0
        %1609 = vmatprep.mubr.f32.mxu0 0.0
        %1610 = vmatmul.mubr.f32.gmra.mrb[0].mxu0 %v942
        %v1611 = vpop.f32.mrb[0].mxu0
        %v1612 = vadd.f32 0.0, %v1611
        %v1613 = vpop.f32.mrb[0].mxu0
        %1614 = vmatprep.mubr.f32.mxu0 0.0
        %1615 = vmatmul.mubr.f32.gmra.mrb[0].mxu0 %v945
        %v1616 = vpop.f32.mrb[0].mxu0
        %v1617 = vadd.f32 0.0, %v1616
        %v1618 = vpop.f32.mrb[0].mxu0
        %1619 = vmatprep.mubr.f32.mxu0 0.0
        %1620 = vmatmul.mubr.f32.gmra.mrb[0].mxu0 %v948
        %v1621 = vpop.f32.mrb[0].mxu0
        %v1622 = vadd.f32 0.0, %v1621
        %v1623 = vpop.f32.mrb[0].mxu0
        %1624 = vmatprep.mubr.f32.mxu0 0.0
        %1625 = vmatmul.mubr.f32.gmra.mrb[0].mxu0 %v951
        %v1626 = vpop.f32.mrb[0].mxu0
        %v1627 = vadd.f32 0.0, %v1626
        %v1628 = vpop.f32.mrb[0].mxu0
        %1629 = vmatprep.mubr.f32.mxu0 0.0
        %1630 = vmatmul.mubr.f32.gmra.mrb[0].mxu0 %v954
        %v1631 = vpop.f32.mrb[0].mxu0
        %v1632 = vadd.f32 0.0, %v1631
        %v1633 = vpop.f32.mrb[0].mxu0
        %1634 = vmatprep.mubr.f32.mxu0 0.0
        %1635 = vmatmul.mubr.f32.gmra.mrb[0].mxu0 %v957
        %v1636 = vpop.f32.mrb[0].mxu0
        %v1637 = vadd.f32 0.0, %v1636
        %v1638 = vpop.f32.mrb[0].mxu0
        %1639 = vmatprep.mubr.f32.mxu0 0.0
        %1640 = vmatmul.mubr.f32.gmra.mrb[0].mxu0 %v960
        %v1641 = vpop.f32.mrb[0].mxu0
        %v1642 = vadd.f32 0.0, %v1641
        %v1643 = vpop.f32.mrb[0].mxu0
        %1644 = vmatprep.mubr.f32.mxu0 0.0
        %1645 = vmatmul.mubr.f32.gmra.mrb[0].mxu0 %v963
        %v1646 = vpop.f32.mrb[0].mxu0
        %v1647 = vadd.f32 0.0, %v1646
        %v1648 = vpop.f32.mrb[0].mxu0
        %1649 = vmatprep.mubr.f32.mxu0 0.0
        %1650 = vmatmul.mubr.f32.gmra.mrb[0].mxu0 %v966
        %v1651 = vpop.f32.mrb[0].mxu0
        %v1652 = vadd.f32 0.0, %v1651
        %v1653 = vpop.f32.mrb[0].mxu0
        %1654 = vmatprep.mubr.f32.mxu0 0.0
        %1655 = vmatmul.mubr.f32.gmra.mrb[0].mxu0 %v969
        %v1656 = vpop.f32.mrb[0].mxu0
        %v1657 = vadd.f32 0.0, %v1656
        %v1658 = vpop.f32.mrb[0].mxu0
        %1659 = vmatprep.mubr.f32.mxu0 0.0
        %1660 = vmatmul.mubr.f32.gmra.mrb[0].mxu0 %v972
        %v1661 = vpop.f32.mrb[0].mxu0
        %v1662 = vadd.f32 0.0, %v1661
        %v1663 = vpop.f32.mrb[0].mxu0
        %1664 = vmatprep.mubr.f32.mxu0 0.0
        %1665 = vmatmul.mubr.f32.gmra.mrb[0].mxu0 %v975
        %v1666 = vpop.f32.mrb[0].mxu0
        %v1667 = vadd.f32 0.0, %v1666
        %v1668 = vpop.f32.mrb[0].mxu0
        %1669 = vmatprep.mubr.f32.mxu0 0.0
        %1670 = vmatmul.mubr.f32.gmra.mrb[0].mxu0 %v978
        %v1671 = vpop.f32.mrb[0].mxu0
        %v1672 = vadd.f32 0.0, %v1671
        %v1673 = vpop.f32.mrb[0].mxu0
        %1674 = vmatprep.mubr.f32.mxu0 0.0
        %1675 = vmatmul.mubr.f32.gmra.mrb[0].mxu0 %v981
        %v1676 = vpop.f32.mrb[0].mxu0
        %v1677 = vadd.f32 0.0, %v1676
        %v1678 = vpop.f32.mrb[0].mxu0
        %1679 = vmatprep.mubr.f32.mxu0 0.0
        %1680 = vmatmul.mubr.f32.gmra.mrb[0].mxu0 %v984
        %v1681 = vpop.f32.mrb[0].mxu0
        %v1682 = vadd.f32 0.0, %v1681
        %v1683 = vpop.f32.mrb[0].mxu0
        %1684 = vmatprep.mubr.f32.mxu0 0.0
        %1685 = vmatmul.mubr.f32.gmra.mrb[0].mxu0 %v987
        %v1686 = vpop.f32.mrb[0].mxu0
        %v1687 = vadd.f32 0.0, %v1686
        %v1688 = vpop.f32.mrb[0].mxu0
        %1689 = vmatprep.mubr.f32.mxu0 0.0
        %1690 = vmatmul.mubr.f32.gmra.mrb[0].mxu0 %v990
        %v1691 = vpop.f32.mrb[0].mxu0
        %v1692 = vadd.f32 0.0, %v1691
        %v1693 = vpop.f32.mrb[0].mxu0
        %1694 = vmatprep.mubr.f32.mxu0 0.0
        %1695 = vmatmul.mubr.f32.gmra.mrb[0].mxu0 %v993
        %v1696 = vpop.f32.mrb[0].mxu0
        %v1697 = vadd.f32 0.0, %v1696
        %v1698 = vpop.f32.mrb[0].mxu0
        %1699 = vdwg.mxu0
        %v1700 = vld [vmem:[%s261] sm:$0xff]
        %v1701 = vld [vmem:[%s261 + $0x8] sm:$0xff]
        %v1702 = vld [vmem:[%s261 + $0x10] sm:$0xff]
        %v1703 = vld [vmem:[%s261 + $0x18] sm:$0xff]
        %v1704 = vld [vmem:[%s261 + $0x20] sm:$0xff]
        %v1705 = vld [vmem:[%s261 + $0x28] sm:$0xff]
        %v1706 = vld [vmem:[%s261 + $0x30] sm:$0xff]
        %v1707 = vld [vmem:[%s261 + $0x38] sm:$0xff]
        %v1708 = vld [vmem:[%s261 + $0x40] sm:$0xff]
        %v1709 = vld [vmem:[%s261 + $0x48] sm:$0xff]
        %v1710 = vld [vmem:[%s261 + $0x50] sm:$0xff]
        %v1711 = vld [vmem:[%s261 + $0x58] sm:$0xff]
        %v1712 = vld [vmem:[%s261 + $0x60] sm:$0xff]
        %v1713 = vld [vmem:[%s261 + $0x68] sm:$0xff]
        %v1714 = vld [vmem:[%s261 + $0x70] sm:$0xff]
        %v1715 = vld [vmem:[%s261 + $0x78] sm:$0xff]
        %v1716 = vld [vmem:[%s3] sm:$0xff]
        %v1717 = vld [vmem:[%s3 + $0x8] sm:$0xff]
        %1718 = vxpose.xlu0.b32.start [1/16] %v1700, 128
        %1719 = vxpose.xlu0.b32.cont [2/16] %v1708, 128
        %1720 = vxpose.xlu0.b32.cont [3/16] 0.0, 128
        %1721 = vxpose.xlu0.b32.cont [4/16] 0.0, 128
        %1722 = vxpose.xlu0.b32.cont [5/16] 0.0, 128
        %1723 = vxpose.xlu0.b32.cont [6/16] 0.0, 128
        %1724 = vxpose.xlu0.b32.cont [7/16] 0.0, 128
        %1725 = vxpose.xlu0.b32.cont [8/16] 0.0, 128
        %1726 = vxpose.xlu0.b32.cont [9/16] 0.0, 128
        %1727 = vxpose.xlu0.b32.cont [10/16] 0.0, 128
        %1728 = vxpose.xlu0.b32.cont [11/16] 0.0, 128
        %1729 = vxpose.xlu0.b32.cont [12/16] 0.0, 128
        %1730 = vxpose.xlu0.b32.cont [13/16] 0.0, 128
        %1731 = vxpose.xlu0.b32.cont [14/16] 0.0, 128
        %1732 = vxpose.xlu0.b32.cont [15/16] 0.0, 128
        %1733 = vxpose.xlu0.b32.end [16/16] 0.0, 128
        %v1734 = vpop.trf.xlu0
        %v1735 = vpop.trf.xlu0
        %v1736 = vpop.trf.xlu0
        %v1737 = vpop.trf.xlu0
        %v1738 = vpop.trf.xlu0
        %v1739 = vpop.trf.xlu0
        %v1740 = vpop.trf.xlu0
        %v1741 = vpop.trf.xlu0
        %v1742 = vpop.trf.xlu0
        %v1743 = vpop.trf.xlu0
        %v1744 = vpop.trf.xlu0
        %v1745 = vpop.trf.xlu0
        %v1746 = vpop.trf.xlu0
        %v1747 = vpop.trf.xlu0
        %v1748 = vpop.trf.xlu0
        %v1749 = vpop.trf.xlu0
        %1750 = vxpose.xlu0.b32.start [1/16] %v1701, 128
        %1751 = vxpose.xlu0.b32.cont [2/16] %v1709, 128
        %1752 = vxpose.xlu0.b32.cont [3/16] 0.0, 128
        %1753 = vxpose.xlu0.b32.cont [4/16] 0.0, 128
        %1754 = vxpose.xlu0.b32.cont [5/16] 0.0, 128
        %1755 = vxpose.xlu0.b32.cont [6/16] 0.0, 128
        %1756 = vxpose.xlu0.b32.cont [7/16] 0.0, 128
        %1757 = vxpose.xlu0.b32.cont [8/16] 0.0, 128
        %1758 = vxpose.xlu0.b32.cont [9/16] 0.0, 128
        %1759 = vxpose.xlu0.b32.cont [10/16] 0.0, 128
        %1760 = vxpose.xlu0.b32.cont [11/16] 0.0, 128
        %1761 = vxpose.xlu0.b32.cont [12/16] 0.0, 128
        %1762 = vxpose.xlu0.b32.cont [13/16] 0.0, 128
        %1763 = vxpose.xlu0.b32.cont [14/16] 0.0, 128
        %1764 = vxpose.xlu0.b32.cont [15/16] 0.0, 128
        %1765 = vxpose.xlu0.b32.end [16/16] 0.0, 128
        %v1766 = vpop.trf.xlu0
        %v1767 = vpop.trf.xlu0
        %v1768 = vpop.trf.xlu0
        %v1769 = vpop.trf.xlu0
        %v1770 = vpop.trf.xlu0
        %v1771 = vpop.trf.xlu0
        %v1772 = vpop.trf.xlu0
        %v1773 = vpop.trf.xlu0
        %v1774 = vpop.trf.xlu0
        %v1775 = vpop.trf.xlu0
        %v1776 = vpop.trf.xlu0
        %v1777 = vpop.trf.xlu0
        %v1778 = vpop.trf.xlu0
        %v1779 = vpop.trf.xlu0
        %v1780 = vpop.trf.xlu0
        %v1781 = vpop.trf.xlu0
        %1782 = vxpose.xlu0.b32.start [1/16] %v1702, 128
        %1783 = vxpose.xlu0.b32.cont [2/16] %v1710, 128
        %1784 = vxpose.xlu0.b32.cont [3/16] 0.0, 128
        %1785 = vxpose.xlu0.b32.cont [4/16] 0.0, 128
        %1786 = vxpose.xlu0.b32.cont [5/16] 0.0, 128
        %1787 = vxpose.xlu0.b32.cont [6/16] 0.0, 128
        %1788 = vxpose.xlu0.b32.cont [7/16] 0.0, 128
        %1789 = vxpose.xlu0.b32.cont [8/16] 0.0, 128
        %1790 = vxpose.xlu0.b32.cont [9/16] 0.0, 128
        %1791 = vxpose.xlu0.b32.cont [10/16] 0.0, 128
        %1792 = vxpose.xlu0.b32.cont [11/16] 0.0, 128
        %1793 = vxpose.xlu0.b32.cont [12/16] 0.0, 128
        %1794 = vxpose.xlu0.b32.cont [13/16] 0.0, 128
        %1795 = vxpose.xlu0.b32.cont [14/16] 0.0, 128
        %1796 = vxpose.xlu0.b32.cont [15/16] 0.0, 128
        %1797 = vxpose.xlu0.b32.end [16/16] 0.0, 128
        %v1798 = vpop.trf.xlu0
        %v1799 = vpop.trf.xlu0
        %v1800 = vpop.trf.xlu0
        %v1801 = vpop.trf.xlu0
        %v1802 = vpop.trf.xlu0
        %v1803 = vpop.trf.xlu0
        %v1804 = vpop.trf.xlu0
        %v1805 = vpop.trf.xlu0
        %v1806 = vpop.trf.xlu0
        %v1807 = vpop.trf.xlu0
        %v1808 = vpop.trf.xlu0
        %v1809 = vpop.trf.xlu0
        %v1810 = vpop.trf.xlu0
        %v1811 = vpop.trf.xlu0
        %v1812 = vpop.trf.xlu0
        %v1813 = vpop.trf.xlu0
        %1814 = vxpose.xlu0.b32.start [1/16] %v1703, 128
        %1815 = vxpose.xlu0.b32.cont [2/16] %v1711, 128
        %1816 = vxpose.xlu0.b32.cont [3/16] 0.0, 128
        %1817 = vxpose.xlu0.b32.cont [4/16] 0.0, 128
        %1818 = vxpose.xlu0.b32.cont [5/16] 0.0, 128
        %1819 = vxpose.xlu0.b32.cont [6/16] 0.0, 128
        %1820 = vxpose.xlu0.b32.cont [7/16] 0.0, 128
        %1821 = vxpose.xlu0.b32.cont [8/16] 0.0, 128
        %1822 = vxpose.xlu0.b32.cont [9/16] 0.0, 128
        %1823 = vxpose.xlu0.b32.cont [10/16] 0.0, 128
        %1824 = vxpose.xlu0.b32.cont [11/16] 0.0, 128
        %1825 = vxpose.xlu0.b32.cont [12/16] 0.0, 128
        %1826 = vxpose.xlu0.b32.cont [13/16] 0.0, 128
        %1827 = vxpose.xlu0.b32.cont [14/16] 0.0, 128
        %1828 = vxpose.xlu0.b32.cont [15/16] 0.0, 128
        %1829 = vxpose.xlu0.b32.end [16/16] 0.0, 128
        %v1830 = vpop.trf.xlu0
        %v1831 = vpop.trf.xlu0
        %v1832 = vpop.trf.xlu0
        %v1833 = vpop.trf.xlu0
        %v1834 = vpop.trf.xlu0
        %v1835 = vpop.trf.xlu0
        %v1836 = vpop.trf.xlu0
        %v1837 = vpop.trf.xlu0
        %v1838 = vpop.trf.xlu0
        %v1839 = vpop.trf.xlu0
        %v1840 = vpop.trf.xlu0
        %v1841 = vpop.trf.xlu0
        %v1842 = vpop.trf.xlu0
        %v1843 = vpop.trf.xlu0
        %v1844 = vpop.trf.xlu0
        %v1845 = vpop.trf.xlu0
        %1846 = vxpose.xlu0.b32.start [1/16] %v1704, 128
        %1847 = vxpose.xlu0.b32.cont [2/16] %v1712, 128
        %1848 = vxpose.xlu0.b32.cont [3/16] 0.0, 128
        %1849 = vxpose.xlu0.b32.cont [4/16] 0.0, 128
        %1850 = vxpose.xlu0.b32.cont [5/16] 0.0, 128
        %1851 = vxpose.xlu0.b32.cont [6/16] 0.0, 128
        %1852 = vxpose.xlu0.b32.cont [7/16] 0.0, 128
        %1853 = vxpose.xlu0.b32.cont [8/16] 0.0, 128
        %1854 = vxpose.xlu0.b32.cont [9/16] 0.0, 128
        %1855 = vxpose.xlu0.b32.cont [10/16] 0.0, 128
        %1856 = vxpose.xlu0.b32.cont [11/16] 0.0, 128
        %1857 = vxpose.xlu0.b32.cont [12/16] 0.0, 128
        %1858 = vxpose.xlu0.b32.cont [13/16] 0.0, 128
        %1859 = vxpose.xlu0.b32.cont [14/16] 0.0, 128
        %1860 = vxpose.xlu0.b32.cont [15/16] 0.0, 128
        %1861 = vxpose.xlu0.b32.end [16/16] 0.0, 128
        %v1862 = vpop.trf.xlu0
        %v1863 = vpop.trf.xlu0
        %v1864 = vpop.trf.xlu0
        %v1865 = vpop.trf.xlu0
        %v1866 = vpop.trf.xlu0
        %v1867 = vpop.trf.xlu0
        %v1868 = vpop.trf.xlu0
        %v1869 = vpop.trf.xlu0
        %v1870 = vpop.trf.xlu0
        %v1871 = vpop.trf.xlu0
        %v1872 = vpop.trf.xlu0
        %v1873 = vpop.trf.xlu0
        %v1874 = vpop.trf.xlu0
        %v1875 = vpop.trf.xlu0
        %v1876 = vpop.trf.xlu0
        %v1877 = vpop.trf.xlu0
        %1878 = vxpose.xlu0.b32.start [1/16] %v1705, 128
        %1879 = vxpose.xlu0.b32.cont [2/16] %v1713, 128
        %1880 = vxpose.xlu0.b32.cont [3/16] 0.0, 128
        %1881 = vxpose.xlu0.b32.cont [4/16] 0.0, 128
        %1882 = vxpose.xlu0.b32.cont [5/16] 0.0, 128
        %1883 = vxpose.xlu0.b32.cont [6/16] 0.0, 128
        %1884 = vxpose.xlu0.b32.cont [7/16] 0.0, 128
        %1885 = vxpose.xlu0.b32.cont [8/16] 0.0, 128
        %1886 = vxpose.xlu0.b32.cont [9/16] 0.0, 128
        %1887 = vxpose.xlu0.b32.cont [10/16] 0.0, 128
        %1888 = vxpose.xlu0.b32.cont [11/16] 0.0, 128
        %1889 = vxpose.xlu0.b32.cont [12/16] 0.0, 128
        %1890 = vxpose.xlu0.b32.cont [13/16] 0.0, 128
        %1891 = vxpose.xlu0.b32.cont [14/16] 0.0, 128
        %1892 = vxpose.xlu0.b32.cont [15/16] 0.0, 128
        %1893 = vxpose.xlu0.b32.end [16/16] 0.0, 128
        %v1894 = vpop.trf.xlu0
        %v1895 = vpop.trf.xlu0
        %v1896 = vpop.trf.xlu0
        %v1897 = vpop.trf.xlu0
        %v1898 = vpop.trf.xlu0
        %v1899 = vpop.trf.xlu0
        %v1900 = vpop.trf.xlu0
        %v1901 = vpop.trf.xlu0
        %v1902 = vpop.trf.xlu0
        %v1903 = vpop.trf.xlu0
        %v1904 = vpop.trf.xlu0
        %v1905 = vpop.trf.xlu0
        %v1906 = vpop.trf.xlu0
        %v1907 = vpop.trf.xlu0
        %v1908 = vpop.trf.xlu0
        %v1909 = vpop.trf.xlu0
        %1910 = vxpose.xlu0.b32.start [1/16] %v1706, 128
        %1911 = vxpose.xlu0.b32.cont [2/16] %v1714, 128
        %1912 = vxpose.xlu0.b32.cont [3/16] 0.0, 128
        %1913 = vxpose.xlu0.b32.cont [4/16] 0.0, 128
        %1914 = vxpose.xlu0.b32.cont [5/16] 0.0, 128
        %1915 = vxpose.xlu0.b32.cont [6/16] 0.0, 128
        %1916 = vxpose.xlu0.b32.cont [7/16] 0.0, 128
        %1917 = vxpose.xlu0.b32.cont [8/16] 0.0, 128
        %1918 = vxpose.xlu0.b32.cont [9/16] 0.0, 128
        %1919 = vxpose.xlu0.b32.cont [10/16] 0.0, 128
        %1920 = vxpose.xlu0.b32.cont [11/16] 0.0, 128
        %1921 = vxpose.xlu0.b32.cont [12/16] 0.0, 128
        %1922 = vxpose.xlu0.b32.cont [13/16] 0.0, 128
        %1923 = vxpose.xlu0.b32.cont [14/16] 0.0, 128
        %1924 = vxpose.xlu0.b32.cont [15/16] 0.0, 128
        %1925 = vxpose.xlu0.b32.end [16/16] 0.0, 128
        %v1926 = vpop.trf.xlu0
        %v1927 = vpop.trf.xlu0
        %v1928 = vpop.trf.xlu0
        %v1929 = vpop.trf.xlu0
        %v1930 = vpop.trf.xlu0
        %v1931 = vpop.trf.xlu0
        %v1932 = vpop.trf.xlu0
        %v1933 = vpop.trf.xlu0
        %v1934 = vpop.trf.xlu0
        %v1935 = vpop.trf.xlu0
        %v1936 = vpop.trf.xlu0
        %v1937 = vpop.trf.xlu0
        %v1938 = vpop.trf.xlu0
        %v1939 = vpop.trf.xlu0
        %v1940 = vpop.trf.xlu0
        %v1941 = vpop.trf.xlu0
        %1942 = vxpose.xlu0.b32.start [1/16] %v1707, 128
        %1943 = vxpose.xlu0.b32.cont [2/16] %v1715, 128
        %1944 = vxpose.xlu0.b32.cont [3/16] 0.0, 128
        %1945 = vxpose.xlu0.b32.cont [4/16] 0.0, 128
        %1946 = vxpose.xlu0.b32.cont [5/16] 0.0, 128
        %1947 = vxpose.xlu0.b32.cont [6/16] 0.0, 128
        %1948 = vxpose.xlu0.b32.cont [7/16] 0.0, 128
        %1949 = vxpose.xlu0.b32.cont [8/16] 0.0, 128
        %1950 = vxpose.xlu0.b32.cont [9/16] 0.0, 128
        %1951 = vxpose.xlu0.b32.cont [10/16] 0.0, 128
        %1952 = vxpose.xlu0.b32.cont [11/16] 0.0, 128
        %1953 = vxpose.xlu0.b32.cont [12/16] 0.0, 128
        %1954 = vxpose.xlu0.b32.cont [13/16] 0.0, 128
        %1955 = vxpose.xlu0.b32.cont [14/16] 0.0, 128
        %1956 = vxpose.xlu0.b32.cont [15/16] 0.0, 128
        %1957 = vxpose.xlu0.b32.end [16/16] 0.0, 128
        %v1958 = vpop.trf.xlu0
        %v1959 = vpop.trf.xlu0
        %v1960 = vpop.trf.xlu0
        %v1961 = vpop.trf.xlu0
        %v1962 = vpop.trf.xlu0
        %v1963 = vpop.trf.xlu0
        %v1964 = vpop.trf.xlu0
        %v1965 = vpop.trf.xlu0
        %v1966 = vpop.trf.xlu0
        %v1967 = vpop.trf.xlu0
        %v1968 = vpop.trf.xlu0
        %v1969 = vpop.trf.xlu0
        %v1970 = vpop.trf.xlu0
        %v1971 = vpop.trf.xlu0
        %v1972 = vpop.trf.xlu0
        %v1973 = vpop.trf.xlu0
        %vm1974 = vcmask 130048
        %v1976 = vsel %vm1974, %v1734, 0
        %v1979 = vsel %vm1974, %v1735, 0
        %v1982 = vsel %vm1974, %v1736, 0
        %v1985 = vsel %vm1974, %v1737, 0
        %v1988 = vsel %vm1974, %v1738, 0
        %v1991 = vsel %vm1974, %v1739, 0
        %v1994 = vsel %vm1974, %v1740, 0
        %v1997 = vsel %vm1974, %v1741, 0
        %v2000 = vsel %vm1974, %v1742, 0
        %v2003 = vsel %vm1974, %v1743, 0
        %v2006 = vsel %vm1974, %v1744, 0
        %v2009 = vsel %vm1974, %v1745, 0
        %v2012 = vsel %vm1974, %v1746, 0
        %v2015 = vsel %vm1974, %v1747, 0
        %v2018 = vsel %vm1974, %v1748, 0
        %v2021 = vsel %vm1974, %v1749, 0
        %v2024 = vsel %vm1974, %v1766, 0
        %v2027 = vsel %vm1974, %v1767, 0
        %v2030 = vsel %vm1974, %v1768, 0
        %v2033 = vsel %vm1974, %v1769, 0
        %v2036 = vsel %vm1974, %v1770, 0
        %v2039 = vsel %vm1974, %v1771, 0
        %v2042 = vsel %vm1974, %v1772, 0
        %v2045 = vsel %vm1974, %v1773, 0
        %v2048 = vsel %vm1974, %v1774, 0
        %v2051 = vsel %vm1974, %v1775, 0
        %v2054 = vsel %vm1974, %v1776, 0
        %v2057 = vsel %vm1974, %v1777, 0
        %v2060 = vsel %vm1974, %v1778, 0
        %v2063 = vsel %vm1974, %v1779, 0
        %v2066 = vsel %vm1974, %v1780, 0
        %v2069 = vsel %vm1974, %v1781, 0
        %v2072 = vsel %vm1974, %v1798, 0
        %v2075 = vsel %vm1974, %v1799, 0
        %v2078 = vsel %vm1974, %v1800, 0
        %v2081 = vsel %vm1974, %v1801, 0
        %v2084 = vsel %vm1974, %v1802, 0
        %v2087 = vsel %vm1974, %v1803, 0
        %v2090 = vsel %vm1974, %v1804, 0
        %v2093 = vsel %vm1974, %v1805, 0
        %v2096 = vsel %vm1974, %v1806, 0
        %v2099 = vsel %vm1974, %v1807, 0
        %v2102 = vsel %vm1974, %v1808, 0
        %v2105 = vsel %vm1974, %v1809, 0
        %v2108 = vsel %vm1974, %v1810, 0
        %v2111 = vsel %vm1974, %v1811, 0
        %v2114 = vsel %vm1974, %v1812, 0
        %v2117 = vsel %vm1974, %v1813, 0
        %v2120 = vsel %vm1974, %v1830, 0
        %v2123 = vsel %vm1974, %v1831, 0
        %v2126 = vsel %vm1974, %v1832, 0
        %v2129 = vsel %vm1974, %v1833, 0
        %v2132 = vsel %vm1974, %v1834, 0
        %v2135 = vsel %vm1974, %v1835, 0
        %v2138 = vsel %vm1974, %v1836, 0
        %v2141 = vsel %vm1974, %v1837, 0
        %v2144 = vsel %vm1974, %v1838, 0
        %v2147 = vsel %vm1974, %v1839, 0
        %v2150 = vsel %vm1974, %v1840, 0
        %v2153 = vsel %vm1974, %v1841, 0
        %v2156 = vsel %vm1974, %v1842, 0
        %v2159 = vsel %vm1974, %v1843, 0
        %v2162 = vsel %vm1974, %v1844, 0
        %v2165 = vsel %vm1974, %v1845, 0
        %v2168 = vsel %vm1974, %v1862, 0
        %v2171 = vsel %vm1974, %v1863, 0
        %v2174 = vsel %vm1974, %v1864, 0
        %v2177 = vsel %vm1974, %v1865, 0
        %v2180 = vsel %vm1974, %v1866, 0
        %v2183 = vsel %vm1974, %v1867, 0
        %v2186 = vsel %vm1974, %v1868, 0
        %v2189 = vsel %vm1974, %v1869, 0
        %v2192 = vsel %vm1974, %v1870, 0
        %v2195 = vsel %vm1974, %v1871, 0
        %v2198 = vsel %vm1974, %v1872, 0
        %v2201 = vsel %vm1974, %v1873, 0
        %v2204 = vsel %vm1974, %v1874, 0
        %v2207 = vsel %vm1974, %v1875, 0
        %v2210 = vsel %vm1974, %v1876, 0
        %v2213 = vsel %vm1974, %v1877, 0
        %v2216 = vsel %vm1974, %v1894, 0
        %v2219 = vsel %vm1974, %v1895, 0
        %v2222 = vsel %vm1974, %v1896, 0
        %v2225 = vsel %vm1974, %v1897, 0
        %v2228 = vsel %vm1974, %v1898, 0
        %v2231 = vsel %vm1974, %v1899, 0
        %v2234 = vsel %vm1974, %v1900, 0
        %v2237 = vsel %vm1974, %v1901, 0
        %v2240 = vsel %vm1974, %v1902, 0
        %v2243 = vsel %vm1974, %v1903, 0
        %v2246 = vsel %vm1974, %v1904, 0
        %v2249 = vsel %vm1974, %v1905, 0
        %v2252 = vsel %vm1974, %v1906, 0
        %v2255 = vsel %vm1974, %v1907, 0
        %v2258 = vsel %vm1974, %v1908, 0
        %v2261 = vsel %vm1974, %v1909, 0
        %v2264 = vsel %vm1974, %v1926, 0
        %v2267 = vsel %vm1974, %v1927, 0
        %v2270 = vsel %vm1974, %v1928, 0
        %v2273 = vsel %vm1974, %v1929, 0
        %v2276 = vsel %vm1974, %v1930, 0
        %v2279 = vsel %vm1974, %v1931, 0
        %v2282 = vsel %vm1974, %v1932, 0
        %v2285 = vsel %vm1974, %v1933, 0
        %v2288 = vsel %vm1974, %v1934, 0
        %v2291 = vsel %vm1974, %v1935, 0
        %v2294 = vsel %vm1974, %v1936, 0
        %v2297 = vsel %vm1974, %v1937, 0
        %v2300 = vsel %vm1974, %v1938, 0
        %v2303 = vsel %vm1974, %v1939, 0
        %v2306 = vsel %vm1974, %v1940, 0
        %v2309 = vsel %vm1974, %v1941, 0
        %v2312 = vsel %vm1974, %v1958, 0
        %v2315 = vsel %vm1974, %v1959, 0
        %v2318 = vsel %vm1974, %v1960, 0
        %v2321 = vsel %vm1974, %v1961, 0
        %v2324 = vsel %vm1974, %v1962, 0
        %v2327 = vsel %vm1974, %v1963, 0
        %v2330 = vsel %vm1974, %v1964, 0
        %v2333 = vsel %vm1974, %v1965, 0
        %v2336 = vsel %vm1974, %v1966, 0
        %v2339 = vsel %vm1974, %v1967, 0
        %v2342 = vsel %vm1974, %v1968, 0
        %v2345 = vsel %vm1974, %v1969, 0
        %v2348 = vsel %vm1974, %v1970, 0
        %v2351 = vsel %vm1974, %v1971, 0
        %v2354 = vsel %vm1974, %v1972, 0
        %v2357 = vsel %vm1974, %v1973, 0
        %2359 = vmatprep.subr.mxu0 0.0
        %2360 = vmatpush1.msra.mxu0 %v1716
        %2361 = vmatprep.subr.mxu0 0.0
        %2362 = vmatpush1.msra.mxu0 %v1717
        %2363 = vmatprep.subr.mxu0 0.0
        %2364 = vmatpush1.msra.mxu0 0.0
        %2365 = vmatprep.subr.mxu0 0.0
        %2366 = vmatpush1.msra.mxu0 0.0
        %2367 = vmatprep.subr.mxu0 0.0
        %2368 = vmatpush1.msra.mxu0 0.0
        %2369 = vmatprep.subr.mxu0 0.0
        %2370 = vmatpush1.msra.mxu0 0.0
        %2371 = vmatprep.subr.mxu0 0.0
        %2372 = vmatpush1.msra.mxu0 0.0
        %2373 = vmatprep.subr.mxu0 0.0
        %2374 = vmatpush1.msra.mxu0 0.0
        %2375 = vmatprep.subr.mxu0 0.0
        %2376 = vmatpush1.msra.mxu0 0.0
        %2377 = vmatprep.subr.mxu0 0.0
        %2378 = vmatpush1.msra.mxu0 0.0
        %2379 = vmatprep.subr.mxu0 0.0
        %2380 = vmatpush1.msra.mxu0 0.0
        %2381 = vmatprep.subr.mxu0 0.0
        %2382 = vmatpush1.msra.mxu0 0.0
        %2383 = vmatprep.subr.mxu0 0.0
        %2384 = vmatpush1.msra.mxu0 0.0
        %2385 = vmatprep.subr.mxu0 0.0
        %2386 = vmatpush1.msra.mxu0 0.0
        %2387 = vmatprep.subr.mxu0 0.0
        %2388 = vmatpush1.msra.mxu0 0.0
        %2389 = vmatprep.subr.mxu0 0.0
        %2390 = vmatpush1.msra.mxu0 0.0
        %2391 = vmatprep.subr.mxu0 0.0
        %2392 = vmatpush1.msra.mxu0 0.0
        %2393 = vmatprep.subr.mxu0 0.0
        %2394 = vmatpush1.msra.mxu0 0.0
        %2395 = vmatprep.subr.mxu0 0.0
        %2396 = vmatpush1.msra.mxu0 0.0
        %2397 = vmatprep.subr.mxu0 0.0
        %2398 = vmatpush1.msra.mxu0 0.0
        %2399 = vmatprep.subr.mxu0 0.0
        %2400 = vmatpush1.msra.mxu0 0.0
        %2401 = vmatprep.subr.mxu0 0.0
        %2402 = vmatpush1.msra.mxu0 0.0
        %2403 = vmatprep.subr.mxu0 0.0
        %2404 = vmatpush1.msra.mxu0 0.0
        %2405 = vmatprep.subr.mxu0 0.0
        %2406 = vmatpush1.msra.mxu0 0.0
        %2407 = vmatprep.subr.mxu0 0.0
        %2408 = vmatpush1.msra.mxu0 0.0
        %2409 = vmatprep.subr.mxu0 0.0
        %2410 = vmatpush1.msra.mxu0 0.0
        %2411 = vmatprep.subr.mxu0 0.0
        %2412 = vmatpush1.msra.mxu0 0.0
        %2413 = vmatprep.subr.mxu0 0.0
        %2414 = vmatpush1.msra.mxu0 0.0
        %2415 = vmatprep.subr.mxu0 0.0
        %2416 = vmatpush1.msra.mxu0 0.0
        %2417 = vmatprep.subr.mxu0 0.0
        %2418 = vmatpush1.msra.mxu0 0.0
        %2419 = vmatprep.subr.mxu0 0.0
        %2420 = vmatpush1.msra.mxu0 0.0
        %2421 = vmatprep.subr.mxu0 0.0
        %2422 = vmatpush1.msra.mxu0 0.0
        %2423 = vmatprep.mubr.f32.mxu0 0.0
        %2424 = vmatmul.mubr.f32.gmra.mrb[0].mxu0 %v1976
        %v2425 = vpop.f32.mrb[0].mxu0
        %v2426 = vadd.f32 %v1062, %v2425
        %v2427 = vpop.f32.mrb[0].mxu0
        %2428 = vmatprep.mubr.f32.mxu0 0.0
        %2429 = vmatmul.mubr.f32.gmra.mrb[0].mxu0 %v1979
        %v2430 = vpop.f32.mrb[0].mxu0
        %v2431 = vadd.f32 %v1067, %v2430
        %v2432 = vpop.f32.mrb[0].mxu0
        %2433 = vmatprep.mubr.f32.mxu0 0.0
        %2434 = vmatmul.mubr.f32.gmra.mrb[0].mxu0 %v1982
        %v2435 = vpop.f32.mrb[0].mxu0
        %v2436 = vadd.f32 %v1072, %v2435
        %v2437 = vpop.f32.mrb[0].mxu0
        %2438 = vmatprep.mubr.f32.mxu0 0.0
        %2439 = vmatmul.mubr.f32.gmra.mrb[0].mxu0 %v1985
        %v2440 = vpop.f32.mrb[0].mxu0
        %v2441 = vadd.f32 %v1077, %v2440
        %v2442 = vpop.f32.mrb[0].mxu0
        %2443 = vmatprep.mubr.f32.mxu0 0.0
        %2444 = vmatmul.mubr.f32.gmra.mrb[0].mxu0 %v1988
        %v2445 = vpop.f32.mrb[0].mxu0
        %v2446 = vadd.f32 %v1082, %v2445
        %v2447 = vpop.f32.mrb[0].mxu0
        %2448 = vmatprep.mubr.f32.mxu0 0.0
        %2449 = vmatmul.mubr.f32.gmra.mrb[0].mxu0 %v1991
        %v2450 = vpop.f32.mrb[0].mxu0
        %v2451 = vadd.f32 %v1087, %v2450
        %v2452 = vpop.f32.mrb[0].mxu0
        %2453 = vmatprep.mubr.f32.mxu0 0.0
        %2454 = vmatmul.mubr.f32.gmra.mrb[0].mxu0 %v1994
        %v2455 = vpop.f32.mrb[0].mxu0
        %v2456 = vadd.f32 %v1092, %v2455
        %v2457 = vpop.f32.mrb[0].mxu0
        %2458 = vmatprep.mubr.f32.mxu0 0.0
        %2459 = vmatmul.mubr.f32.gmra.mrb[0].mxu0 %v1997
        %v2460 = vpop.f32.mrb[0].mxu0
        %v2461 = vadd.f32 %v1097, %v2460
        %v2462 = vpop.f32.mrb[0].mxu0
        %2463 = vmatprep.mubr.f32.mxu0 0.0
        %2464 = vmatmul.mubr.f32.gmra.mrb[0].mxu0 %v2000
        %v2465 = vpop.f32.mrb[0].mxu0
        %v2466 = vadd.f32 %v1102, %v2465
        %v2467 = vpop.f32.mrb[0].mxu0
        %2468 = vmatprep.mubr.f32.mxu0 0.0
        %2469 = vmatmul.mubr.f32.gmra.mrb[0].mxu0 %v2003
        %v2470 = vpop.f32.mrb[0].mxu0
        %v2471 = vadd.f32 %v1107, %v2470
        %v2472 = vpop.f32.mrb[0].mxu0
        %2473 = vmatprep.mubr.f32.mxu0 0.0
        %2474 = vmatmul.mubr.f32.gmra.mrb[0].mxu0 %v2006
        %v2475 = vpop.f32.mrb[0].mxu0
        %v2476 = vadd.f32 %v1112, %v2475
        %v2477 = vpop.f32.mrb[0].mxu0
        %2478 = vmatprep.mubr.f32.mxu0 0.0
        %2479 = vmatmul.mubr.f32.gmra.mrb[0].mxu0 %v2009
        %v2480 = vpop.f32.mrb[0].mxu0
        %v2481 = vadd.f32 %v1117, %v2480
        %v2482 = vpop.f32.mrb[0].mxu0
        %2483 = vmatprep.mubr.f32.mxu0 0.0
        %2484 = vmatmul.mubr.f32.gmra.mrb[0].mxu0 %v2012
        %v2485 = vpop.f32.mrb[0].mxu0
        %v2486 = vadd.f32 %v1122, %v2485
        %v2487 = vpop.f32.mrb[0].mxu0
        %2488 = vmatprep.mubr.f32.mxu0 0.0
        %2489 = vmatmul.mubr.f32.gmra.mrb[0].mxu0 %v2015
        %v2490 = vpop.f32.mrb[0].mxu0
        %v2491 = vadd.f32 %v1127, %v2490
        %v2492 = vpop.f32.mrb[0].mxu0
        %2493 = vmatprep.mubr.f32.mxu0 0.0
        %2494 = vmatmul.mubr.f32.gmra.mrb[0].mxu0 %v2018
        %v2495 = vpop.f32.mrb[0].mxu0
        %v2496 = vadd.f32 %v1132, %v2495
        %v2497 = vpop.f32.mrb[0].mxu0
        %2498 = vmatprep.mubr.f32.mxu0 0.0
        %2499 = vmatmul.mubr.f32.gmra.mrb[0].mxu0 %v2021
        %v2500 = vpop.f32.mrb[0].mxu0
        %v2501 = vadd.f32 %v1137, %v2500
        %v2502 = vpop.f32.mrb[0].mxu0
        %2503 = vmatprep.mubr.f32.mxu0 0.0
        %2504 = vmatmul.mubr.f32.gmra.mrb[0].mxu0 %v2024
        %v2505 = vpop.f32.mrb[0].mxu0
        %v2506 = vadd.f32 %v1142, %v2505
        %v2507 = vpop.f32.mrb[0].mxu0
        %2508 = vmatprep.mubr.f32.mxu0 0.0
        %2509 = vmatmul.mubr.f32.gmra.mrb[0].mxu0 %v2027
        %v2510 = vpop.f32.mrb[0].mxu0
        %v2511 = vadd.f32 %v1147, %v2510
        %v2512 = vpop.f32.mrb[0].mxu0
        %2513 = vmatprep.mubr.f32.mxu0 0.0
        %2514 = vmatmul.mubr.f32.gmra.mrb[0].mxu0 %v2030
        %v2515 = vpop.f32.mrb[0].mxu0
        %v2516 = vadd.f32 %v1152, %v2515
        %v2517 = vpop.f32.mrb[0].mxu0
        %2518 = vmatprep.mubr.f32.mxu0 0.0
        %2519 = vmatmul.mubr.f32.gmra.mrb[0].mxu0 %v2033
        %v2520 = vpop.f32.mrb[0].mxu0
        %v2521 = vadd.f32 %v1157, %v2520
        %v2522 = vpop.f32.mrb[0].mxu0
        %2523 = vmatprep.mubr.f32.mxu0 0.0
        %2524 = vmatmul.mubr.f32.gmra.mrb[0].mxu0 %v2036
        %v2525 = vpop.f32.mrb[0].mxu0
        %v2526 = vadd.f32 %v1162, %v2525
        %v2527 = vpop.f32.mrb[0].mxu0
        %2528 = vmatprep.mubr.f32.mxu0 0.0
        %2529 = vmatmul.mubr.f32.gmra.mrb[0].mxu0 %v2039
        %v2530 = vpop.f32.mrb[0].mxu0
        %v2531 = vadd.f32 %v1167, %v2530
        %v2532 = vpop.f32.mrb[0].mxu0
        %2533 = vmatprep.mubr.f32.mxu0 0.0
        %2534 = vmatmul.mubr.f32.gmra.mrb[0].mxu0 %v2042
        %v2535 = vpop.f32.mrb[0].mxu0
        %v2536 = vadd.f32 %v1172, %v2535
        %v2537 = vpop.f32.mrb[0].mxu0
        %2538 = vmatprep.mubr.f32.mxu0 0.0
        %2539 = vmatmul.mubr.f32.gmra.mrb[0].mxu0 %v2045
        %v2540 = vpop.f32.mrb[0].mxu0
        %v2541 = vadd.f32 %v1177, %v2540
        %v2542 = vpop.f32.mrb[0].mxu0
        %2543 = vmatprep.mubr.f32.mxu0 0.0
        %2544 = vmatmul.mubr.f32.gmra.mrb[0].mxu0 %v2048
        %v2545 = vpop.f32.mrb[0].mxu0
        %v2546 = vadd.f32 %v1182, %v2545
        %v2547 = vpop.f32.mrb[0].mxu0
        %2548 = vmatprep.mubr.f32.mxu0 0.0
        %2549 = vmatmul.mubr.f32.gmra.mrb[0].mxu0 %v2051
        %v2550 = vpop.f32.mrb[0].mxu0
        %v2551 = vadd.f32 %v1187, %v2550
        %v2552 = vpop.f32.mrb[0].mxu0
        %2553 = vmatprep.mubr.f32.mxu0 0.0
        %2554 = vmatmul.mubr.f32.gmra.mrb[0].mxu0 %v2054
        %v2555 = vpop.f32.mrb[0].mxu0
        %v2556 = vadd.f32 %v1192, %v2555
        %v2557 = vpop.f32.mrb[0].mxu0
        %2558 = vmatprep.mubr.f32.mxu0 0.0
        %2559 = vmatmul.mubr.f32.gmra.mrb[0].mxu0 %v2057
        %v2560 = vpop.f32.mrb[0].mxu0
        %v2561 = vadd.f32 %v1197, %v2560
        %v2562 = vpop.f32.mrb[0].mxu0
        %2563 = vmatprep.mubr.f32.mxu0 0.0
        %2564 = vmatmul.mubr.f32.gmra.mrb[0].mxu0 %v2060
        %v2565 = vpop.f32.mrb[0].mxu0
        %v2566 = vadd.f32 %v1202, %v2565
        %v2567 = vpop.f32.mrb[0].mxu0
        %2568 = vmatprep.mubr.f32.mxu0 0.0
        %2569 = vmatmul.mubr.f32.gmra.mrb[0].mxu0 %v2063
        %v2570 = vpop.f32.mrb[0].mxu0
        %v2571 = vadd.f32 %v1207, %v2570
        %v2572 = vpop.f32.mrb[0].mxu0
        %2573 = vmatprep.mubr.f32.mxu0 0.0
        %2574 = vmatmul.mubr.f32.gmra.mrb[0].mxu0 %v2066
        %v2575 = vpop.f32.mrb[0].mxu0
        %v2576 = vadd.f32 %v1212, %v2575
        %v2577 = vpop.f32.mrb[0].mxu0
        %2578 = vmatprep.mubr.f32.mxu0 0.0
        %2579 = vmatmul.mubr.f32.gmra.mrb[0].mxu0 %v2069
        %v2580 = vpop.f32.mrb[0].mxu0
        %v2581 = vadd.f32 %v1217, %v2580
        %v2582 = vpop.f32.mrb[0].mxu0
        %2583 = vmatprep.mubr.f32.mxu0 0.0
        %2584 = vmatmul.mubr.f32.gmra.mrb[0].mxu0 %v2072
        %v2585 = vpop.f32.mrb[0].mxu0
        %v2586 = vadd.f32 %v1222, %v2585
        %v2587 = vpop.f32.mrb[0].mxu0
        %2588 = vmatprep.mubr.f32.mxu0 0.0
        %2589 = vmatmul.mubr.f32.gmra.mrb[0].mxu0 %v2075
        %v2590 = vpop.f32.mrb[0].mxu0
        %v2591 = vadd.f32 %v1227, %v2590
        %v2592 = vpop.f32.mrb[0].mxu0
        %2593 = vmatprep.mubr.f32.mxu0 0.0
        %2594 = vmatmul.mubr.f32.gmra.mrb[0].mxu0 %v2078
        %v2595 = vpop.f32.mrb[0].mxu0
        %v2596 = vadd.f32 %v1232, %v2595
        %v2597 = vpop.f32.mrb[0].mxu0
        %2598 = vmatprep.mubr.f32.mxu0 0.0
        %2599 = vmatmul.mubr.f32.gmra.mrb[0].mxu0 %v2081
        %v2600 = vpop.f32.mrb[0].mxu0
        %v2601 = vadd.f32 %v1237, %v2600
        %v2602 = vpop.f32.mrb[0].mxu0
        %2603 = vmatprep.mubr.f32.mxu0 0.0
        %2604 = vmatmul.mubr.f32.gmra.mrb[0].mxu0 %v2084
        %v2605 = vpop.f32.mrb[0].mxu0
        %v2606 = vadd.f32 %v1242, %v2605
        %v2607 = vpop.f32.mrb[0].mxu0
        %2608 = vmatprep.mubr.f32.mxu0 0.0
        %2609 = vmatmul.mubr.f32.gmra.mrb[0].mxu0 %v2087
        %v2610 = vpop.f32.mrb[0].mxu0
        %v2611 = vadd.f32 %v1247, %v2610
        %v2612 = vpop.f32.mrb[0].mxu0
        %2613 = vmatprep.mubr.f32.mxu0 0.0
        %2614 = vmatmul.mubr.f32.gmra.mrb[0].mxu0 %v2090
        %v2615 = vpop.f32.mrb[0].mxu0
        %v2616 = vadd.f32 %v1252, %v2615
        %v2617 = vpop.f32.mrb[0].mxu0
        %2618 = vmatprep.mubr.f32.mxu0 0.0
        %2619 = vmatmul.mubr.f32.gmra.mrb[0].mxu0 %v2093
        %v2620 = vpop.f32.mrb[0].mxu0
        %v2621 = vadd.f32 %v1257, %v2620
        %v2622 = vpop.f32.mrb[0].mxu0
        %2623 = vmatprep.mubr.f32.mxu0 0.0
        %2624 = vmatmul.mubr.f32.gmra.mrb[0].mxu0 %v2096
        %v2625 = vpop.f32.mrb[0].mxu0
        %v2626 = vadd.f32 %v1262, %v2625
        %v2627 = vpop.f32.mrb[0].mxu0
        %2628 = vmatprep.mubr.f32.mxu0 0.0
        %2629 = vmatmul.mubr.f32.gmra.mrb[0].mxu0 %v2099
        %v2630 = vpop.f32.mrb[0].mxu0
        %v2631 = vadd.f32 %v1267, %v2630
        %v2632 = vpop.f32.mrb[0].mxu0
        %2633 = vmatprep.mubr.f32.mxu0 0.0
        %2634 = vmatmul.mubr.f32.gmra.mrb[0].mxu0 %v2102
        %v2635 = vpop.f32.mrb[0].mxu0
        %v2636 = vadd.f32 %v1272, %v2635
        %v2637 = vpop.f32.mrb[0].mxu0
        %2638 = vmatprep.mubr.f32.mxu0 0.0
        %2639 = vmatmul.mubr.f32.gmra.mrb[0].mxu0 %v2105
        %v2640 = vpop.f32.mrb[0].mxu0
        %v2641 = vadd.f32 %v1277, %v2640
        %v2642 = vpop.f32.mrb[0].mxu0
        %2643 = vmatprep.mubr.f32.mxu0 0.0
        %2644 = vmatmul.mubr.f32.gmra.mrb[0].mxu0 %v2108
        %v2645 = vpop.f32.mrb[0].mxu0
        %v2646 = vadd.f32 %v1282, %v2645
        %v2647 = vpop.f32.mrb[0].mxu0
        %2648 = vmatprep.mubr.f32.mxu0 0.0
        %2649 = vmatmul.mubr.f32.gmra.mrb[0].mxu0 %v2111
        %v2650 = vpop.f32.mrb[0].mxu0
        %v2651 = vadd.f32 %v1287, %v2650
        %v2652 = vpop.f32.mrb[0].mxu0
        %2653 = vmatprep.mubr.f32.mxu0 0.0
        %2654 = vmatmul.mubr.f32.gmra.mrb[0].mxu0 %v2114
        %v2655 = vpop.f32.mrb[0].mxu0
        %v2656 = vadd.f32 %v1292, %v2655
        %v2657 = vpop.f32.mrb[0].mxu0
        %2658 = vmatprep.mubr.f32.mxu0 0.0
        %2659 = vmatmul.mubr.f32.gmra.mrb[0].mxu0 %v2117
        %v2660 = vpop.f32.mrb[0].mxu0
        %v2661 = vadd.f32 %v1297, %v2660
        %v2662 = vpop.f32.mrb[0].mxu0
        %2663 = vmatprep.mubr.f32.mxu0 0.0
        %2664 = vmatmul.mubr.f32.gmra.mrb[0].mxu0 %v2120
        %v2665 = vpop.f32.mrb[0].mxu0
        %v2666 = vadd.f32 %v1302, %v2665
        %v2667 = vpop.f32.mrb[0].mxu0
        %2668 = vmatprep.mubr.f32.mxu0 0.0
        %2669 = vmatmul.mubr.f32.gmra.mrb[0].mxu0 %v2123
        %v2670 = vpop.f32.mrb[0].mxu0
        %v2671 = vadd.f32 %v1307, %v2670
        %v2672 = vpop.f32.mrb[0].mxu0
        %2673 = vmatprep.mubr.f32.mxu0 0.0
        %2674 = vmatmul.mubr.f32.gmra.mrb[0].mxu0 %v2126
        %v2675 = vpop.f32.mrb[0].mxu0
        %v2676 = vadd.f32 %v1312, %v2675
        %v2677 = vpop.f32.mrb[0].mxu0
        %2678 = vmatprep.mubr.f32.mxu0 0.0
        %2679 = vmatmul.mubr.f32.gmra.mrb[0].mxu0 %v2129
        %v2680 = vpop.f32.mrb[0].mxu0
        %v2681 = vadd.f32 %v1317, %v2680
        %v2682 = vpop.f32.mrb[0].mxu0
        %2683 = vmatprep.mubr.f32.mxu0 0.0
        %2684 = vmatmul.mubr.f32.gmra.mrb[0].mxu0 %v2132
        %v2685 = vpop.f32.mrb[0].mxu0
        %v2686 = vadd.f32 %v1322, %v2685
        %v2687 = vpop.f32.mrb[0].mxu0
        %2688 = vmatprep.mubr.f32.mxu0 0.0
        %2689 = vmatmul.mubr.f32.gmra.mrb[0].mxu0 %v2135
        %v2690 = vpop.f32.mrb[0].mxu0
        %v2691 = vadd.f32 %v1327, %v2690
        %v2692 = vpop.f32.mrb[0].mxu0
        %2693 = vmatprep.mubr.f32.mxu0 0.0
        %2694 = vmatmul.mubr.f32.gmra.mrb[0].mxu0 %v2138
        %v2695 = vpop.f32.mrb[0].mxu0
        %v2696 = vadd.f32 %v1332, %v2695
        %v2697 = vpop.f32.mrb[0].mxu0
        %2698 = vmatprep.mubr.f32.mxu0 0.0
        %2699 = vmatmul.mubr.f32.gmra.mrb[0].mxu0 %v2141
        %v2700 = vpop.f32.mrb[0].mxu0
        %v2701 = vadd.f32 %v1337, %v2700
        %v2702 = vpop.f32.mrb[0].mxu0
        %2703 = vmatprep.mubr.f32.mxu0 0.0
        %2704 = vmatmul.mubr.f32.gmra.mrb[0].mxu0 %v2144
        %v2705 = vpop.f32.mrb[0].mxu0
        %v2706 = vadd.f32 %v1342, %v2705
        %v2707 = vpop.f32.mrb[0].mxu0
        %2708 = vmatprep.mubr.f32.mxu0 0.0
        %2709 = vmatmul.mubr.f32.gmra.mrb[0].mxu0 %v2147
        %v2710 = vpop.f32.mrb[0].mxu0
        %v2711 = vadd.f32 %v1347, %v2710
        %v2712 = vpop.f32.mrb[0].mxu0
        %2713 = vmatprep.mubr.f32.mxu0 0.0
        %2714 = vmatmul.mubr.f32.gmra.mrb[0].mxu0 %v2150
        %v2715 = vpop.f32.mrb[0].mxu0
        %v2716 = vadd.f32 %v1352, %v2715
        %v2717 = vpop.f32.mrb[0].mxu0
        %2718 = vmatprep.mubr.f32.mxu0 0.0
        %2719 = vmatmul.mubr.f32.gmra.mrb[0].mxu0 %v2153
        %v2720 = vpop.f32.mrb[0].mxu0
        %v2721 = vadd.f32 %v1357, %v2720
        %v2722 = vpop.f32.mrb[0].mxu0
        %2723 = vmatprep.mubr.f32.mxu0 0.0
        %2724 = vmatmul.mubr.f32.gmra.mrb[0].mxu0 %v2156
        %v2725 = vpop.f32.mrb[0].mxu0
        %v2726 = vadd.f32 %v1362, %v2725
        %v2727 = vpop.f32.mrb[0].mxu0
        %2728 = vmatprep.mubr.f32.mxu0 0.0
        %2729 = vmatmul.mubr.f32.gmra.mrb[0].mxu0 %v2159
        %v2730 = vpop.f32.mrb[0].mxu0
        %v2731 = vadd.f32 %v1367, %v2730
        %v2732 = vpop.f32.mrb[0].mxu0
        %2733 = vmatprep.mubr.f32.mxu0 0.0
        %2734 = vmatmul.mubr.f32.gmra.mrb[0].mxu0 %v2162
        %v2735 = vpop.f32.mrb[0].mxu0
        %v2736 = vadd.f32 %v1372, %v2735
        %v2737 = vpop.f32.mrb[0].mxu0
        %2738 = vmatprep.mubr.f32.mxu0 0.0
        %2739 = vmatmul.mubr.f32.gmra.mrb[0].mxu0 %v2165
        %v2740 = vpop.f32.mrb[0].mxu0
        %v2741 = vadd.f32 %v1377, %v2740
        %v2742 = vpop.f32.mrb[0].mxu0
        %2743 = vmatprep.mubr.f32.mxu0 0.0
        %2744 = vmatmul.mubr.f32.gmra.mrb[0].mxu0 %v2168
        %v2745 = vpop.f32.mrb[0].mxu0
        %v2746 = vadd.f32 %v1382, %v2745
        %v2747 = vpop.f32.mrb[0].mxu0
        %2748 = vmatprep.mubr.f32.mxu0 0.0
        %2749 = vmatmul.mubr.f32.gmra.mrb[0].mxu0 %v2171
        %v2750 = vpop.f32.mrb[0].mxu0
        %v2751 = vadd.f32 %v1387, %v2750
        %v2752 = vpop.f32.mrb[0].mxu0
        %2753 = vmatprep.mubr.f32.mxu0 0.0
        %2754 = vmatmul.mubr.f32.gmra.mrb[0].mxu0 %v2174
        %v2755 = vpop.f32.mrb[0].mxu0
        %v2756 = vadd.f32 %v1392, %v2755
        %v2757 = vpop.f32.mrb[0].mxu0
        %2758 = vmatprep.mubr.f32.mxu0 0.0
        %2759 = vmatmul.mubr.f32.gmra.mrb[0].mxu0 %v2177
        %v2760 = vpop.f32.mrb[0].mxu0
        %v2761 = vadd.f32 %v1397, %v2760
        %v2762 = vpop.f32.mrb[0].mxu0
        %2763 = vmatprep.mubr.f32.mxu0 0.0
        %2764 = vmatmul.mubr.f32.gmra.mrb[0].mxu0 %v2180
        %v2765 = vpop.f32.mrb[0].mxu0
        %v2766 = vadd.f32 %v1402, %v2765
        %v2767 = vpop.f32.mrb[0].mxu0
        %2768 = vmatprep.mubr.f32.mxu0 0.0
        %2769 = vmatmul.mubr.f32.gmra.mrb[0].mxu0 %v2183
        %v2770 = vpop.f32.mrb[0].mxu0
        %v2771 = vadd.f32 %v1407, %v2770
        %v2772 = vpop.f32.mrb[0].mxu0
        %2773 = vmatprep.mubr.f32.mxu0 0.0
        %2774 = vmatmul.mubr.f32.gmra.mrb[0].mxu0 %v2186
        %v2775 = vpop.f32.mrb[0].mxu0
        %v2776 = vadd.f32 %v1412, %v2775
        %v2777 = vpop.f32.mrb[0].mxu0
        %2778 = vmatprep.mubr.f32.mxu0 0.0
        %2779 = vmatmul.mubr.f32.gmra.mrb[0].mxu0 %v2189
        %v2780 = vpop.f32.mrb[0].mxu0
        %v2781 = vadd.f32 %v1417, %v2780
        %v2782 = vpop.f32.mrb[0].mxu0
        %2783 = vmatprep.mubr.f32.mxu0 0.0
        %2784 = vmatmul.mubr.f32.gmra.mrb[0].mxu0 %v2192
        %v2785 = vpop.f32.mrb[0].mxu0
        %v2786 = vadd.f32 %v1422, %v2785
        %v2787 = vpop.f32.mrb[0].mxu0
        %2788 = vmatprep.mubr.f32.mxu0 0.0
        %2789 = vmatmul.mubr.f32.gmra.mrb[0].mxu0 %v2195
        %v2790 = vpop.f32.mrb[0].mxu0
        %v2791 = vadd.f32 %v1427, %v2790
        %v2792 = vpop.f32.mrb[0].mxu0
        %2793 = vmatprep.mubr.f32.mxu0 0.0
        %2794 = vmatmul.mubr.f32.gmra.mrb[0].mxu0 %v2198
        %v2795 = vpop.f32.mrb[0].mxu0
        %v2796 = vadd.f32 %v1432, %v2795
        %v2797 = vpop.f32.mrb[0].mxu0
        %2798 = vmatprep.mubr.f32.mxu0 0.0
        %2799 = vmatmul.mubr.f32.gmra.mrb[0].mxu0 %v2201
        %v2800 = vpop.f32.mrb[0].mxu0
        %v2801 = vadd.f32 %v1437, %v2800
        %v2802 = vpop.f32.mrb[0].mxu0
        %2803 = vmatprep.mubr.f32.mxu0 0.0
        %2804 = vmatmul.mubr.f32.gmra.mrb[0].mxu0 %v2204
        %v2805 = vpop.f32.mrb[0].mxu0
        %v2806 = vadd.f32 %v1442, %v2805
        %v2807 = vpop.f32.mrb[0].mxu0
        %2808 = vmatprep.mubr.f32.mxu0 0.0
        %2809 = vmatmul.mubr.f32.gmra.mrb[0].mxu0 %v2207
        %v2810 = vpop.f32.mrb[0].mxu0
        %v2811 = vadd.f32 %v1447, %v2810
        %v2812 = vpop.f32.mrb[0].mxu0
        %2813 = vmatprep.mubr.f32.mxu0 0.0
        %2814 = vmatmul.mubr.f32.gmra.mrb[0].mxu0 %v2210
        %v2815 = vpop.f32.mrb[0].mxu0
        %v2816 = vadd.f32 %v1452, %v2815
        %v2817 = vpop.f32.mrb[0].mxu0
        %2818 = vmatprep.mubr.f32.mxu0 0.0
        %2819 = vmatmul.mubr.f32.gmra.mrb[0].mxu0 %v2213
        %v2820 = vpop.f32.mrb[0].mxu0
        %v2821 = vadd.f32 %v1457, %v2820
        %v2822 = vpop.f32.mrb[0].mxu0
        %2823 = vmatprep.mubr.f32.mxu0 0.0
        %2824 = vmatmul.mubr.f32.gmra.mrb[0].mxu0 %v2216
        %v2825 = vpop.f32.mrb[0].mxu0
        %v2826 = vadd.f32 %v1462, %v2825
        %v2827 = vpop.f32.mrb[0].mxu0
        %2828 = vmatprep.mubr.f32.mxu0 0.0
        %2829 = vmatmul.mubr.f32.gmra.mrb[0].mxu0 %v2219
        %v2830 = vpop.f32.mrb[0].mxu0
        %v2831 = vadd.f32 %v1467, %v2830
        %v2832 = vpop.f32.mrb[0].mxu0
        %2833 = vmatprep.mubr.f32.mxu0 0.0
        %2834 = vmatmul.mubr.f32.gmra.mrb[0].mxu0 %v2222
        %v2835 = vpop.f32.mrb[0].mxu0
        %v2836 = vadd.f32 %v1472, %v2835
        %v2837 = vpop.f32.mrb[0].mxu0
        %2838 = vmatprep.mubr.f32.mxu0 0.0
        %2839 = vmatmul.mubr.f32.gmra.mrb[0].mxu0 %v2225
        %v2840 = vpop.f32.mrb[0].mxu0
        %v2841 = vadd.f32 %v1477, %v2840
        %v2842 = vpop.f32.mrb[0].mxu0
        %2843 = vmatprep.mubr.f32.mxu0 0.0
        %2844 = vmatmul.mubr.f32.gmra.mrb[0].mxu0 %v2228
        %v2845 = vpop.f32.mrb[0].mxu0
        %v2846 = vadd.f32 %v1482, %v2845
        %v2847 = vpop.f32.mrb[0].mxu0
        %2848 = vmatprep.mubr.f32.mxu0 0.0
        %2849 = vmatmul.mubr.f32.gmra.mrb[0].mxu0 %v2231
        %v2850 = vpop.f32.mrb[0].mxu0
        %v2851 = vadd.f32 %v1487, %v2850
        %v2852 = vpop.f32.mrb[0].mxu0
        %2853 = vmatprep.mubr.f32.mxu0 0.0
        %2854 = vmatmul.mubr.f32.gmra.mrb[0].mxu0 %v2234
        %v2855 = vpop.f32.mrb[0].mxu0
        %v2856 = vadd.f32 %v1492, %v2855
        %v2857 = vpop.f32.mrb[0].mxu0
        %2858 = vmatprep.mubr.f32.mxu0 0.0
        %2859 = vmatmul.mubr.f32.gmra.mrb[0].mxu0 %v2237
        %v2860 = vpop.f32.mrb[0].mxu0
        %v2861 = vadd.f32 %v1497, %v2860
        %v2862 = vpop.f32.mrb[0].mxu0
        %2863 = vmatprep.mubr.f32.mxu0 0.0
        %2864 = vmatmul.mubr.f32.gmra.mrb[0].mxu0 %v2240
        %v2865 = vpop.f32.mrb[0].mxu0
        %v2866 = vadd.f32 %v1502, %v2865
        %v2867 = vpop.f32.mrb[0].mxu0
        %2868 = vmatprep.mubr.f32.mxu0 0.0
        %2869 = vmatmul.mubr.f32.gmra.mrb[0].mxu0 %v2243
        %v2870 = vpop.f32.mrb[0].mxu0
        %v2871 = vadd.f32 %v1507, %v2870
        %v2872 = vpop.f32.mrb[0].mxu0
        %2873 = vmatprep.mubr.f32.mxu0 0.0
        %2874 = vmatmul.mubr.f32.gmra.mrb[0].mxu0 %v2246
        %v2875 = vpop.f32.mrb[0].mxu0
        %v2876 = vadd.f32 %v1512, %v2875
        %v2877 = vpop.f32.mrb[0].mxu0
        %2878 = vmatprep.mubr.f32.mxu0 0.0
        %2879 = vmatmul.mubr.f32.gmra.mrb[0].mxu0 %v2249
        %v2880 = vpop.f32.mrb[0].mxu0
        %v2881 = vadd.f32 %v1517, %v2880
        %v2882 = vpop.f32.mrb[0].mxu0
        %2883 = vmatprep.mubr.f32.mxu0 0.0
        %2884 = vmatmul.mubr.f32.gmra.mrb[0].mxu0 %v2252
        %v2885 = vpop.f32.mrb[0].mxu0
        %v2886 = vadd.f32 %v1522, %v2885
        %v2887 = vpop.f32.mrb[0].mxu0
        %2888 = vmatprep.mubr.f32.mxu0 0.0
        %2889 = vmatmul.mubr.f32.gmra.mrb[0].mxu0 %v2255
        %v2890 = vpop.f32.mrb[0].mxu0
        %v2891 = vadd.f32 %v1527, %v2890
        %v2892 = vpop.f32.mrb[0].mxu0
        %2893 = vmatprep.mubr.f32.mxu0 0.0
        %2894 = vmatmul.mubr.f32.gmra.mrb[0].mxu0 %v2258
        %v2895 = vpop.f32.mrb[0].mxu0
        %v2896 = vadd.f32 %v1532, %v2895
        %v2897 = vpop.f32.mrb[0].mxu0
        %2898 = vmatprep.mubr.f32.mxu0 0.0
        %2899 = vmatmul.mubr.f32.gmra.mrb[0].mxu0 %v2261
        %v2900 = vpop.f32.mrb[0].mxu0
        %v2901 = vadd.f32 %v1537, %v2900
        %v2902 = vpop.f32.mrb[0].mxu0
        %2903 = vmatprep.mubr.f32.mxu0 0.0
        %2904 = vmatmul.mubr.f32.gmra.mrb[0].mxu0 %v2264
        %v2905 = vpop.f32.mrb[0].mxu0
        %v2906 = vadd.f32 %v1542, %v2905
        %v2907 = vpop.f32.mrb[0].mxu0
        %2908 = vmatprep.mubr.f32.mxu0 0.0
        %2909 = vmatmul.mubr.f32.gmra.mrb[0].mxu0 %v2267
        %v2910 = vpop.f32.mrb[0].mxu0
        %v2911 = vadd.f32 %v1547, %v2910
        %v2912 = vpop.f32.mrb[0].mxu0
        %2913 = vmatprep.mubr.f32.mxu0 0.0
        %2914 = vmatmul.mubr.f32.gmra.mrb[0].mxu0 %v2270
        %v2915 = vpop.f32.mrb[0].mxu0
        %v2916 = vadd.f32 %v1552, %v2915
        %v2917 = vpop.f32.mrb[0].mxu0
        %2918 = vmatprep.mubr.f32.mxu0 0.0
        %2919 = vmatmul.mubr.f32.gmra.mrb[0].mxu0 %v2273
        %v2920 = vpop.f32.mrb[0].mxu0
        %v2921 = vadd.f32 %v1557, %v2920
        %v2922 = vpop.f32.mrb[0].mxu0
        %2923 = vmatprep.mubr.f32.mxu0 0.0
        %2924 = vmatmul.mubr.f32.gmra.mrb[0].mxu0 %v2276
        %v2925 = vpop.f32.mrb[0].mxu0
        %v2926 = vadd.f32 %v1562, %v2925
        %v2927 = vpop.f32.mrb[0].mxu0
        %2928 = vmatprep.mubr.f32.mxu0 0.0
        %2929 = vmatmul.mubr.f32.gmra.mrb[0].mxu0 %v2279
        %v2930 = vpop.f32.mrb[0].mxu0
        %v2931 = vadd.f32 %v1567, %v2930
        %v2932 = vpop.f32.mrb[0].mxu0
        %2933 = vmatprep.mubr.f32.mxu0 0.0
        %2934 = vmatmul.mubr.f32.gmra.mrb[0].mxu0 %v2282
        %v2935 = vpop.f32.mrb[0].mxu0
        %v2936 = vadd.f32 %v1572, %v2935
        %v2937 = vpop.f32.mrb[0].mxu0
        %2938 = vmatprep.mubr.f32.mxu0 0.0
        %2939 = vmatmul.mubr.f32.gmra.mrb[0].mxu0 %v2285
        %v2940 = vpop.f32.mrb[0].mxu0
        %v2941 = vadd.f32 %v1577, %v2940
        %v2942 = vpop.f32.mrb[0].mxu0
        %2943 = vmatprep.mubr.f32.mxu0 0.0
        %2944 = vmatmul.mubr.f32.gmra.mrb[0].mxu0 %v2288
        %v2945 = vpop.f32.mrb[0].mxu0
        %v2946 = vadd.f32 %v1582, %v2945
        %v2947 = vpop.f32.mrb[0].mxu0
        %2948 = vmatprep.mubr.f32.mxu0 0.0
        %2949 = vmatmul.mubr.f32.gmra.mrb[0].mxu0 %v2291
        %v2950 = vpop.f32.mrb[0].mxu0
        %v2951 = vadd.f32 %v1587, %v2950
        %v2952 = vpop.f32.mrb[0].mxu0
        %2953 = vmatprep.mubr.f32.mxu0 0.0
        %2954 = vmatmul.mubr.f32.gmra.mrb[0].mxu0 %v2294
        %v2955 = vpop.f32.mrb[0].mxu0
        %v2956 = vadd.f32 %v1592, %v2955
        %v2957 = vpop.f32.mrb[0].mxu0
        %2958 = vmatprep.mubr.f32.mxu0 0.0
        %2959 = vmatmul.mubr.f32.gmra.mrb[0].mxu0 %v2297
        %v2960 = vpop.f32.mrb[0].mxu0
        %v2961 = vadd.f32 %v1597, %v2960
        %v2962 = vpop.f32.mrb[0].mxu0
        %2963 = vmatprep.mubr.f32.mxu0 0.0
        %2964 = vmatmul.mubr.f32.gmra.mrb[0].mxu0 %v2300
        %v2965 = vpop.f32.mrb[0].mxu0
        %v2966 = vadd.f32 %v1602, %v2965
        %v2967 = vpop.f32.mrb[0].mxu0
        %2968 = vmatprep.mubr.f32.mxu0 0.0
        %2969 = vmatmul.mubr.f32.gmra.mrb[0].mxu0 %v2303
        %v2970 = vpop.f32.mrb[0].mxu0
        %v2971 = vadd.f32 %v1607, %v2970
        %v2972 = vpop.f32.mrb[0].mxu0
        %2973 = vmatprep.mubr.f32.mxu0 0.0
        %2974 = vmatmul.mubr.f32.gmra.mrb[0].mxu0 %v2306
        %v2975 = vpop.f32.mrb[0].mxu0
        %v2976 = vadd.f32 %v1612, %v2975
        %v2977 = vpop.f32.mrb[0].mxu0
        %2978 = vmatprep.mubr.f32.mxu0 0.0
        %2979 = vmatmul.mubr.f32.gmra.mrb[0].mxu0 %v2309
        %v2980 = vpop.f32.mrb[0].mxu0
        %v2981 = vadd.f32 %v1617, %v2980
        %v2982 = vpop.f32.mrb[0].mxu0
        %2983 = vmatprep.mubr.f32.mxu0 0.0
        %2984 = vmatmul.mubr.f32.gmra.mrb[0].mxu0 %v2312
        %v2985 = vpop.f32.mrb[0].mxu0
        %v2986 = vadd.f32 %v1622, %v2985
        %v2987 = vpop.f32.mrb[0].mxu0
        %2988 = vmatprep.mubr.f32.mxu0 0.0
        %2989 = vmatmul.mubr.f32.gmra.mrb[0].mxu0 %v2315
        %v2990 = vpop.f32.mrb[0].mxu0
        %v2991 = vadd.f32 %v1627, %v2990
        %v2992 = vpop.f32.mrb[0].mxu0
        %2993 = vmatprep.mubr.f32.mxu0 0.0
        %2994 = vmatmul.mubr.f32.gmra.mrb[0].mxu0 %v2318
        %v2995 = vpop.f32.mrb[0].mxu0
        %v2996 = vadd.f32 %v1632, %v2995
        %v2997 = vpop.f32.mrb[0].mxu0
        %2998 = vmatprep.mubr.f32.mxu0 0.0
        %2999 = vmatmul.mubr.f32.gmra.mrb[0].mxu0 %v2321
        %v3000 = vpop.f32.mrb[0].mxu0
        %v3001 = vadd.f32 %v1637, %v3000
        %v3002 = vpop.f32.mrb[0].mxu0
        %3003 = vmatprep.mubr.f32.mxu0 0.0
        %3004 = vmatmul.mubr.f32.gmra.mrb[0].mxu0 %v2324
        %v3005 = vpop.f32.mrb[0].mxu0
        %v3006 = vadd.f32 %v1642, %v3005
        %v3007 = vpop.f32.mrb[0].mxu0
        %3008 = vmatprep.mubr.f32.mxu0 0.0
        %3009 = vmatmul.mubr.f32.gmra.mrb[0].mxu0 %v2327
        %v3010 = vpop.f32.mrb[0].mxu0
        %v3011 = vadd.f32 %v1647, %v3010
        %v3012 = vpop.f32.mrb[0].mxu0
        %3013 = vmatprep.mubr.f32.mxu0 0.0
        %3014 = vmatmul.mubr.f32.gmra.mrb[0].mxu0 %v2330
        %v3015 = vpop.f32.mrb[0].mxu0
        %v3016 = vadd.f32 %v1652, %v3015
        %v3017 = vpop.f32.mrb[0].mxu0
        %3018 = vmatprep.mubr.f32.mxu0 0.0
        %3019 = vmatmul.mubr.f32.gmra.mrb[0].mxu0 %v2333
        %v3020 = vpop.f32.mrb[0].mxu0
        %v3021 = vadd.f32 %v1657, %v3020
        %v3022 = vpop.f32.mrb[0].mxu0
        %3023 = vmatprep.mubr.f32.mxu0 0.0
        %3024 = vmatmul.mubr.f32.gmra.mrb[0].mxu0 %v2336
        %v3025 = vpop.f32.mrb[0].mxu0
        %v3026 = vadd.f32 %v1662, %v3025
        %v3027 = vpop.f32.mrb[0].mxu0
        %3028 = vmatprep.mubr.f32.mxu0 0.0
        %3029 = vmatmul.mubr.f32.gmra.mrb[0].mxu0 %v2339
        %v3030 = vpop.f32.mrb[0].mxu0
        %v3031 = vadd.f32 %v1667, %v3030
        %v3032 = vpop.f32.mrb[0].mxu0
        %3033 = vmatprep.mubr.f32.mxu0 0.0
        %3034 = vmatmul.mubr.f32.gmra.mrb[0].mxu0 %v2342
        %v3035 = vpop.f32.mrb[0].mxu0
        %v3036 = vadd.f32 %v1672, %v3035
        %v3037 = vpop.f32.mrb[0].mxu0
        %3038 = vmatprep.mubr.f32.mxu0 0.0
        %3039 = vmatmul.mubr.f32.gmra.mrb[0].mxu0 %v2345
        %v3040 = vpop.f32.mrb[0].mxu0
        %v3041 = vadd.f32 %v1677, %v3040
        %v3042 = vpop.f32.mrb[0].mxu0
        %3043 = vmatprep.mubr.f32.mxu0 0.0
        %3044 = vmatmul.mubr.f32.gmra.mrb[0].mxu0 %v2348
        %v3045 = vpop.f32.mrb[0].mxu0
        %v3046 = vadd.f32 %v1682, %v3045
        %v3047 = vpop.f32.mrb[0].mxu0
        %3048 = vmatprep.mubr.f32.mxu0 0.0
        %3049 = vmatmul.mubr.f32.gmra.mrb[0].mxu0 %v2351
        %v3050 = vpop.f32.mrb[0].mxu0
        %v3051 = vadd.f32 %v1687, %v3050
        %v3052 = vpop.f32.mrb[0].mxu0
        %3053 = vmatprep.mubr.f32.mxu0 0.0
        %3054 = vmatmul.mubr.f32.gmra.mrb[0].mxu0 %v2354
        %v3055 = vpop.f32.mrb[0].mxu0
        %v3056 = vadd.f32 %v1692, %v3055
        %v3057 = vpop.f32.mrb[0].mxu0
        %3058 = vmatprep.mubr.f32.mxu0 0.0
        %3059 = vmatmul.mubr.f32.gmra.mrb[0].mxu0 %v2357
        %v3060 = vpop.f32.mrb[0].mxu0
        %v3061 = vadd.f32 %v1697, %v3060
        %v3062 = vpop.f32.mrb[0].mxu0
        %3063 = vdwg.mxu0
        %v3064 = vld [vmem:[%s4] sm:$0x1]
        %v3066 = vlaneseq
        %v3067 = vshrl.u32 %v3066, 7
        %v3068 = vsub.s32 0, %v3067
        %v3069 = vrot.slane %v3064, %v3068
        %v3071 = vadd.f32 %v2426, %v3069
        %v3072 = vadd.f32 %v2431, %v3069
        %v3073 = vadd.f32 %v2436, %v3069
        %v3074 = vadd.f32 %v2441, %v3069
        %v3075 = vadd.f32 %v2446, %v3069
        %v3076 = vadd.f32 %v2451, %v3069
        %v3077 = vadd.f32 %v2456, %v3069
        %v3078 = vadd.f32 %v2461, %v3069
        %v3079 = vadd.f32 %v2466, %v3069
        %v3080 = vadd.f32 %v2471, %v3069
        %v3081 = vadd.f32 %v2476, %v3069
        %v3082 = vadd.f32 %v2481, %v3069
        %v3083 = vadd.f32 %v2486, %v3069
        %v3084 = vadd.f32 %v2491, %v3069
        %v3085 = vadd.f32 %v2496, %v3069
        %v3086 = vadd.f32 %v2501, %v3069
        %v3087 = vadd.f32 %v2506, %v3069
        %v3088 = vadd.f32 %v2511, %v3069
        %v3089 = vadd.f32 %v2516, %v3069
        %v3090 = vadd.f32 %v2521, %v3069
        %v3091 = vadd.f32 %v2526, %v3069
        %v3092 = vadd.f32 %v2531, %v3069
        %v3093 = vadd.f32 %v2536, %v3069
        %v3094 = vadd.f32 %v2541, %v3069
        %v3095 = vadd.f32 %v2546, %v3069
        %v3096 = vadd.f32 %v2551, %v3069
        %v3097 = vadd.f32 %v2556, %v3069
        %v3098 = vadd.f32 %v2561, %v3069
        %v3099 = vadd.f32 %v2566, %v3069
        %v3100 = vadd.f32 %v2571, %v3069
        %v3101 = vadd.f32 %v2576, %v3069
        %v3102 = vadd.f32 %v2581, %v3069
        %v3103 = vadd.f32 %v2586, %v3069
        %v3104 = vadd.f32 %v2591, %v3069
        %v3105 = vadd.f32 %v2596, %v3069
        %v3106 = vadd.f32 %v2601, %v3069
        %v3107 = vadd.f32 %v2606, %v3069
        %v3108 = vadd.f32 %v2611, %v3069
        %v3109 = vadd.f32 %v2616, %v3069
        %v3110 = vadd.f32 %v2621, %v3069
        %v3111 = vadd.f32 %v2626, %v3069
        %v3112 = vadd.f32 %v2631, %v3069
        %v3113 = vadd.f32 %v2636, %v3069
        %v3114 = vadd.f32 %v2641, %v3069
        %v3115 = vadd.f32 %v2646, %v3069
        %v3116 = vadd.f32 %v2651, %v3069
        %v3117 = vadd.f32 %v2656, %v3069
        %v3118 = vadd.f32 %v2661, %v3069
        %v3119 = vadd.f32 %v2666, %v3069
        %v3120 = vadd.f32 %v2671, %v3069
        %v3121 = vadd.f32 %v2676, %v3069
        %v3122 = vadd.f32 %v2681, %v3069
        %v3123 = vadd.f32 %v2686, %v3069
        %v3124 = vadd.f32 %v2691, %v3069
        %v3125 = vadd.f32 %v2696, %v3069
        %v3126 = vadd.f32 %v2701, %v3069
        %v3127 = vadd.f32 %v2706, %v3069
        %v3128 = vadd.f32 %v2711, %v3069
        %v3129 = vadd.f32 %v2716, %v3069
        %v3130 = vadd.f32 %v2721, %v3069
        %v3131 = vadd.f32 %v2726, %v3069
        %v3132 = vadd.f32 %v2731, %v3069
        %v3133 = vadd.f32 %v2736, %v3069
        %v3134 = vadd.f32 %v2741, %v3069
        %v3135 = vadd.f32 %v2746, %v3069
        %v3136 = vadd.f32 %v2751, %v3069
        %v3137 = vadd.f32 %v2756, %v3069
        %v3138 = vadd.f32 %v2761, %v3069
        %v3139 = vadd.f32 %v2766, %v3069
        %v3140 = vadd.f32 %v2771, %v3069
        %v3141 = vadd.f32 %v2776, %v3069
        %v3142 = vadd.f32 %v2781, %v3069
        %v3143 = vadd.f32 %v2786, %v3069
        %v3144 = vadd.f32 %v2791, %v3069
        %v3145 = vadd.f32 %v2796, %v3069
        %v3146 = vadd.f32 %v2801, %v3069
        %v3147 = vadd.f32 %v2806, %v3069
        %v3148 = vadd.f32 %v2811, %v3069
        %v3149 = vadd.f32 %v2816, %v3069
        %v3150 = vadd.f32 %v2821, %v3069
        %v3151 = vadd.f32 %v2826, %v3069
        %v3152 = vadd.f32 %v2831, %v3069
        %v3153 = vadd.f32 %v2836, %v3069
        %v3154 = vadd.f32 %v2841, %v3069
        %v3155 = vadd.f32 %v2846, %v3069
        %v3156 = vadd.f32 %v2851, %v3069
        %v3157 = vadd.f32 %v2856, %v3069
        %v3158 = vadd.f32 %v2861, %v3069
        %v3159 = vadd.f32 %v2866, %v3069
        %v3160 = vadd.f32 %v2871, %v3069
        %v3161 = vadd.f32 %v2876, %v3069
        %v3162 = vadd.f32 %v2881, %v3069
        %v3163 = vadd.f32 %v2886, %v3069
        %v3164 = vadd.f32 %v2891, %v3069
        %v3165 = vadd.f32 %v2896, %v3069
        %v3166 = vadd.f32 %v2901, %v3069
        %v3167 = vadd.f32 %v2906, %v3069
        %v3168 = vadd.f32 %v2911, %v3069
        %v3169 = vadd.f32 %v2916, %v3069
        %v3170 = vadd.f32 %v2921, %v3069
        %v3171 = vadd.f32 %v2926, %v3069
        %v3172 = vadd.f32 %v2931, %v3069
        %v3173 = vadd.f32 %v2936, %v3069
        %v3174 = vadd.f32 %v2941, %v3069
        %v3175 = vadd.f32 %v2946, %v3069
        %v3176 = vadd.f32 %v2951, %v3069
        %v3177 = vadd.f32 %v2956, %v3069
        %v3178 = vadd.f32 %v2961, %v3069
        %v3179 = vadd.f32 %v2966, %v3069
        %v3180 = vadd.f32 %v2971, %v3069
        %v3181 = vadd.f32 %v2976, %v3069
        %v3182 = vadd.f32 %v2981, %v3069
        %v3183 = vadd.f32 %v2986, %v3069
        %v3184 = vadd.f32 %v2991, %v3069
        %v3185 = vadd.f32 %v2996, %v3069
        %v3186 = vadd.f32 %v3001, %v3069
        %v3187 = vadd.f32 %v3006, %v3069
        %v3188 = vadd.f32 %v3011, %v3069
        %v3189 = vadd.f32 %v3016, %v3069
        %v3190 = vadd.f32 %v3021, %v3069
        %v3191 = vadd.f32 %v3026, %v3069
        %v3192 = vadd.f32 %v3031, %v3069
        %v3193 = vadd.f32 %v3036, %v3069
        %v3194 = vadd.f32 %v3041, %v3069
        %v3195 = vadd.f32 %v3046, %v3069
        %v3196 = vadd.f32 %v3051, %v3069
        %v3197 = vadd.f32 %v3056, %v3069
        %v3198 = vadd.f32 %v3061, %v3069
        %3199 = vst.msk [vmem:[%s316] sm:$0xff] %vm1974, %v3071
        %3200 = vst.msk [vmem:[%s316 + $0x8] sm:$0xff] %vm1974, %v3072
        %3201 = vst.msk [vmem:[%s316 + $0x10] sm:$0xff] %vm1974, %v3073
        %3202 = vst.msk [vmem:[%s316 + $0x18] sm:$0xff] %vm1974, %v3074
        %3203 = vst.msk [vmem:[%s316 + $0x20] sm:$0xff] %vm1974, %v3075
        %3204 = vst.msk [vmem:[%s316 + $0x28] sm:$0xff] %vm1974, %v3076
        %3205 = vst.msk [vmem:[%s316 + $0x30] sm:$0xff] %vm1974, %v3077
        %3206 = vst.msk [vmem:[%s316 + $0x38] sm:$0xff] %vm1974, %v3078
        %3207 = vst.msk [vmem:[%s316 + $0x40] sm:$0xff] %vm1974, %v3079
        %3208 = vst.msk [vmem:[%s316 + $0x48] sm:$0xff] %vm1974, %v3080
        %3209 = vst.msk [vmem:[%s316 + $0x50] sm:$0xff] %vm1974, %v3081
        %3210 = vst.msk [vmem:[%s316 + $0x58] sm:$0xff] %vm1974, %v3082
        %3211 = vst.msk [vmem:[%s316 + $0x60] sm:$0xff] %vm1974, %v3083
        %3212 = vst.msk [vmem:[%s316 + $0x68] sm:$0xff] %vm1974, %v3084
        %3213 = vst.msk [vmem:[%s316 + $0x70] sm:$0xff] %vm1974, %v3085
        %3214 = vst.msk [vmem:[%s316 + $0x78] sm:$0xff] %vm1974, %v3086
        %3215 = vst.msk [vmem:[%s316 + $0x80] sm:$0xff] %vm1974, %v3087
        %3216 = vst.msk [vmem:[%s316 + $0x88] sm:$0xff] %vm1974, %v3088
        %3217 = vst.msk [vmem:[%s316 + $0x90] sm:$0xff] %vm1974, %v3089
        %3218 = vst.msk [vmem:[%s316 + $0x98] sm:$0xff] %vm1974, %v3090
        %3219 = vst.msk [vmem:[%s316 + $0xa0] sm:$0xff] %vm1974, %v3091
        %3220 = vst.msk [vmem:[%s316 + $0xa8] sm:$0xff] %vm1974, %v3092
        %3221 = vst.msk [vmem:[%s316 + $0xb0] sm:$0xff] %vm1974, %v3093
        %3222 = vst.msk [vmem:[%s316 + $0xb8] sm:$0xff] %vm1974, %v3094
        %3223 = vst.msk [vmem:[%s316 + $0xc0] sm:$0xff] %vm1974, %v3095
        %3224 = vst.msk [vmem:[%s316 + $0xc8] sm:$0xff] %vm1974, %v3096
        %3225 = vst.msk [vmem:[%s316 + $0xd0] sm:$0xff] %vm1974, %v3097
        %3226 = vst.msk [vmem:[%s316 + $0xd8] sm:$0xff] %vm1974, %v3098
        %3227 = vst.msk [vmem:[%s316 + $0xe0] sm:$0xff] %vm1974, %v3099
        %3228 = vst.msk [vmem:[%s316 + $0xe8] sm:$0xff] %vm1974, %v3100
        %3229 = vst.msk [vmem:[%s316 + $0xf0] sm:$0xff] %vm1974, %v3101
        %3230 = vst.msk [vmem:[%s316 + $0xf8] sm:$0xff] %vm1974, %v3102
        %3231 = vst.msk [vmem:[%s316 + $0x100] sm:$0xff] %vm1974, %v3103
        %3232 = vst.msk [vmem:[%s316 + $0x108] sm:$0xff] %vm1974, %v3104
        %3233 = vst.msk [vmem:[%s316 + $0x110] sm:$0xff] %vm1974, %v3105
        %3234 = vst.msk [vmem:[%s316 + $0x118] sm:$0xff] %vm1974, %v3106
        %3235 = vst.msk [vmem:[%s316 + $0x120] sm:$0xff] %vm1974, %v3107
        %3236 = vst.msk [vmem:[%s316 + $0x128] sm:$0xff] %vm1974, %v3108
        %3237 = vst.msk [vmem:[%s316 + $0x130] sm:$0xff] %vm1974, %v3109
        %3238 = vst.msk [vmem:[%s316 + $0x138] sm:$0xff] %vm1974, %v3110
        %3239 = vst.msk [vmem:[%s316 + $0x140] sm:$0xff] %vm1974, %v3111
        %3240 = vst.msk [vmem:[%s316 + $0x148] sm:$0xff] %vm1974, %v3112
        %3241 = vst.msk [vmem:[%s316 + $0x150] sm:$0xff] %vm1974, %v3113
        %3242 = vst.msk [vmem:[%s316 + $0x158] sm:$0xff] %vm1974, %v3114
        %3243 = vst.msk [vmem:[%s316 + $0x160] sm:$0xff] %vm1974, %v3115
        %3244 = vst.msk [vmem:[%s316 + $0x168] sm:$0xff] %vm1974, %v3116
        %3245 = vst.msk [vmem:[%s316 + $0x170] sm:$0xff] %vm1974, %v3117
        %3246 = vst.msk [vmem:[%s316 + $0x178] sm:$0xff] %vm1974, %v3118
        %3247 = vst.msk [vmem:[%s316 + $0x180] sm:$0xff] %vm1974, %v3119
        %3248 = vst.msk [vmem:[%s316 + $0x188] sm:$0xff] %vm1974, %v3120
        %3249 = vst.msk [vmem:[%s316 + $0x190] sm:$0xff] %vm1974, %v3121
        %3250 = vst.msk [vmem:[%s316 + $0x198] sm:$0xff] %vm1974, %v3122
        %3251 = vst.msk [vmem:[%s316 + $0x1a0] sm:$0xff] %vm1974, %v3123
        %3252 = vst.msk [vmem:[%s316 + $0x1a8] sm:$0xff] %vm1974, %v3124
        %3253 = vst.msk [vmem:[%s316 + $0x1b0] sm:$0xff] %vm1974, %v3125
        %3254 = vst.msk [vmem:[%s316 + $0x1b8] sm:$0xff] %vm1974, %v3126
        %3255 = vst.msk [vmem:[%s316 + $0x1c0] sm:$0xff] %vm1974, %v3127
        %3256 = vst.msk [vmem:[%s316 + $0x1c8] sm:$0xff] %vm1974, %v3128
        %3257 = vst.msk [vmem:[%s316 + $0x1d0] sm:$0xff] %vm1974, %v3129
        %3258 = vst.msk [vmem:[%s316 + $0x1d8] sm:$0xff] %vm1974, %v3130
        %3259 = vst.msk [vmem:[%s316 + $0x1e0] sm:$0xff] %vm1974, %v3131
        %3260 = vst.msk [vmem:[%s316 + $0x1e8] sm:$0xff] %vm1974, %v3132
        %3261 = vst.msk [vmem:[%s316 + $0x1f0] sm:$0xff] %vm1974, %v3133
        %3262 = vst.msk [vmem:[%s316 + $0x1f8] sm:$0xff] %vm1974, %v3134
        %3263 = vst.msk [vmem:[%s316 + $0x200] sm:$0xff] %vm1974, %v3135
        %3264 = vst.msk [vmem:[%s316 + $0x208] sm:$0xff] %vm1974, %v3136
        %3265 = vst.msk [vmem:[%s316 + $0x210] sm:$0xff] %vm1974, %v3137
        %3266 = vst.msk [vmem:[%s316 + $0x218] sm:$0xff] %vm1974, %v3138
        %3267 = vst.msk [vmem:[%s316 + $0x220] sm:$0xff] %vm1974, %v3139
        %3268 = vst.msk [vmem:[%s316 + $0x228] sm:$0xff] %vm1974, %v3140
        %3269 = vst.msk [vmem:[%s316 + $0x230] sm:$0xff] %vm1974, %v3141
        %3270 = vst.msk [vmem:[%s316 + $0x238] sm:$0xff] %vm1974, %v3142
        %3271 = vst.msk [vmem:[%s316 + $0x240] sm:$0xff] %vm1974, %v3143
        %3272 = vst.msk [vmem:[%s316 + $0x248] sm:$0xff] %vm1974, %v3144
        %3273 = vst.msk [vmem:[%s316 + $0x250] sm:$0xff] %vm1974, %v3145
        %3274 = vst.msk [vmem:[%s316 + $0x258] sm:$0xff] %vm1974, %v3146
        %3275 = vst.msk [vmem:[%s316 + $0x260] sm:$0xff] %vm1974, %v3147
        %3276 = vst.msk [vmem:[%s316 + $0x268] sm:$0xff] %vm1974, %v3148
        %3277 = vst.msk [vmem:[%s316 + $0x270] sm:$0xff] %vm1974, %v3149
        %3278 = vst.msk [vmem:[%s316 + $0x278] sm:$0xff] %vm1974, %v3150
        %3279 = vst.msk [vmem:[%s316 + $0x280] sm:$0xff] %vm1974, %v3151
        %3280 = vst.msk [vmem:[%s316 + $0x288] sm:$0xff] %vm1974, %v3152
        %3281 = vst.msk [vmem:[%s316 + $0x290] sm:$0xff] %vm1974, %v3153
        %3282 = vst.msk [vmem:[%s316 + $0x298] sm:$0xff] %vm1974, %v3154
        %3283 = vst.msk [vmem:[%s316 + $0x2a0] sm:$0xff] %vm1974, %v3155
        %3284 = vst.msk [vmem:[%s316 + $0x2a8] sm:$0xff] %vm1974, %v3156
        %3285 = vst.msk [vmem:[%s316 + $0x2b0] sm:$0xff] %vm1974, %v3157
        %3286 = vst.msk [vmem:[%s316 + $0x2b8] sm:$0xff] %vm1974, %v3158
        %3287 = vst.msk [vmem:[%s316 + $0x2c0] sm:$0xff] %vm1974, %v3159
        %3288 = vst.msk [vmem:[%s316 + $0x2c8] sm:$0xff] %vm1974, %v3160
        %3289 = vst.msk [vmem:[%s316 + $0x2d0] sm:$0xff] %vm1974, %v3161
        %3290 = vst.msk [vmem:[%s316 + $0x2d8] sm:$0xff] %vm1974, %v3162
        %3291 = vst.msk [vmem:[%s316 + $0x2e0] sm:$0xff] %vm1974, %v3163
        %3292 = vst.msk [vmem:[%s316 + $0x2e8] sm:$0xff] %vm1974, %v3164
        %3293 = vst.msk [vmem:[%s316 + $0x2f0] sm:$0xff] %vm1974, %v3165
        %3294 = vst.msk [vmem:[%s316 + $0x2f8] sm:$0xff] %vm1974, %v3166
        %3295 = vst.msk [vmem:[%s316 + $0x300] sm:$0xff] %vm1974, %v3167
        %3296 = vst.msk [vmem:[%s316 + $0x308] sm:$0xff] %vm1974, %v3168
        %3297 = vst.msk [vmem:[%s316 + $0x310] sm:$0xff] %vm1974, %v3169
        %3298 = vst.msk [vmem:[%s316 + $0x318] sm:$0xff] %vm1974, %v3170
        %3299 = vst.msk [vmem:[%s316 + $0x320] sm:$0xff] %vm1974, %v3171
        %3300 = vst.msk [vmem:[%s316 + $0x328] sm:$0xff] %vm1974, %v3172
        %3301 = vst.msk [vmem:[%s316 + $0x330] sm:$0xff] %vm1974, %v3173
        %3302 = vst.msk [vmem:[%s316 + $0x338] sm:$0xff] %vm1974, %v3174
        %3303 = vst.msk [vmem:[%s316 + $0x340] sm:$0xff] %vm1974, %v3175
        %3304 = vst.msk [vmem:[%s316 + $0x348] sm:$0xff] %vm1974, %v3176
        %3305 = vst.msk [vmem:[%s316 + $0x350] sm:$0xff] %vm1974, %v3177
        %3306 = vst.msk [vmem:[%s316 + $0x358] sm:$0xff] %vm1974, %v3178
        %3307 = vst.msk [vmem:[%s316 + $0x360] sm:$0xff] %vm1974, %v3179
        %3308 = vst.msk [vmem:[%s316 + $0x368] sm:$0xff] %vm1974, %v3180
        %3309 = vst.msk [vmem:[%s316 + $0x370] sm:$0xff] %vm1974, %v3181
        %3310 = vst.msk [vmem:[%s316 + $0x378] sm:$0xff] %vm1974, %v3182
        %3311 = vst.msk [vmem:[%s316 + $0x380] sm:$0xff] %vm1974, %v3183
        %3312 = vst.msk [vmem:[%s316 + $0x388] sm:$0xff] %vm1974, %v3184
        %3313 = vst.msk [vmem:[%s316 + $0x390] sm:$0xff] %vm1974, %v3185
        %3314 = vst.msk [vmem:[%s316 + $0x398] sm:$0xff] %vm1974, %v3186
        %3315 = vst.msk [vmem:[%s316 + $0x3a0] sm:$0xff] %vm1974, %v3187
        %3316 = vst.msk [vmem:[%s316 + $0x3a8] sm:$0xff] %vm1974, %v3188
        %3317 = vst.msk [vmem:[%s316 + $0x3b0] sm:$0xff] %vm1974, %v3189
        %3318 = vst.msk [vmem:[%s316 + $0x3b8] sm:$0xff] %vm1974, %v3190
        %3319 = vst.msk [vmem:[%s316 + $0x3c0] sm:$0xff] %vm1974, %v3191
        %3320 = vst.msk [vmem:[%s316 + $0x3c8] sm:$0xff] %vm1974, %v3192
        %3321 = vst.msk [vmem:[%s316 + $0x3d0] sm:$0xff] %vm1974, %v3193
        %3322 = vst.msk [vmem:[%s316 + $0x3d8] sm:$0xff] %vm1974, %v3194
        %3323 = vst.msk [vmem:[%s316 + $0x3e0] sm:$0xff] %vm1974, %v3195
        %3324 = vst.msk [vmem:[%s316 + $0x3e8] sm:$0xff] %vm1974, %v3196
        %3325 = vst.msk [vmem:[%s316 + $0x3f0] sm:$0xff] %vm1974, %v3197
        %3326 = vst.msk [vmem:[%s316 + $0x3f8] sm:$0xff] %vm1974, %v3198
        %s3327 = smul.u32 128, %s27
        %p3328 = scmp.lt.s32.totalorder %s26, 1
        %s3329 = scalar_select %p3328, %s26, 1
        %p3330 = scmp.lt.s32.totalorder %s3327, 127
        %s3331 = scalar_select %p3330, %s3327, 127
        %s3332 = smul.addr %s3329, 128
        %s3333 = sadd.s32 %s3331, %s3332
        %s3334 = smul.addr %s3333, 8
        %s3335 = scalar_lea.vmem %s5, %s3334
        // Predicated region
        $region49: #{tpu_custom_call.1} parent=39 // pred_check
          %p3336 = pneg %p173
        $region50: #{tpu_custom_call.1} parent=39 // pred_check_branch
          %3338 = sbr.rel (%p3336) target = $region52
        $region51: #{tpu_custom_call.1} parent=39 // pred_region
          %s3339 = smul.u32 128, %s27
        $region52: #{tpu_custom_call.1} parent=39 // pred_fallthru
          _
      $region40: #{tpu_custom_call.1} parent=5 // pred_fallthru
        _
      %p3340 = scmp.le.s32.totalorder 2, %s17
      // Predicated region
      $region53: #{tpu_custom_call.1} parent=5 // pred_check
        %p3341 = pneg %p3340
      $region54: #{tpu_custom_call.1} parent=5 // pred_check_branch
        %3343 = sbr.rel (%p3341) target = $region56
      $region55: #{tpu_custom_call.1} parent=5 // pred_region
        %s3344 = ssub.s32 %s17, 2
        // Predicated region
        $region57: #{tpu_custom_call.1} parent=55 // pred_check
          %p3345 = pneg %p179
        $region58: #{tpu_custom_call.1} parent=55 // pred_check_branch
          %3347 = sbr.rel (%p3345) target = $region60
        $region59: #{tpu_custom_call.1} parent=55 // pred_region
          %s3348 = smul.u32 128, %s29
          %p3349 = scmp.lt.s32.totalorder %s28, 1
          %s3350 = scalar_select %p3349, %s28, 1
          %p3351 = scmp.lt.s32.totalorder %s3348, 127
          %s3352 = scalar_select %p3351, %s3348, 127
          %s3353 = smul.addr %s3350, 128
          %s3354 = sadd.s32 %s3352, %s3353
          %s3355 = smul.addr %s3354, 8
          %s3356 = scalar_lea.vmem %s5, %s3355
        $region60: #{tpu_custom_call.1} parent=55 // pred_fallthru
          _
      $region56: #{tpu_custom_call.1} parent=5 // pred_fallthru
        _
    $region6: #{tpu_custom_call.1} parent=1 // loop_footer
      %s21 = sadd.s32 1, %s17
    $region7: #{tpu_custom_call.1} parent=1 // loop_footer_branch
      %16 = sbr.rel target = $region3
    $region8: #{tpu_custom_call.1} parent=1 // loop_exit
      _
    %3357 = vsyncpa [#allocation3], 1
    %s3358 = scalar_lea.sflag [#allocation3], 1
    %3359 = vsyncpa %s3358, 1
    %3360 = vsyncpa [#allocation5], 1
    %s3361 = scalar_lea.sflag [#allocation5], 1
    %3362 = vsyncpa %s3361, 1

</llo_original>
